<compile_context>
chip_gen: v7x
topology: tpu7x:2x2x1
jax: 0.10.0
libtpu: 0.0.40
codegen_flags: <defaults>
</compile_context>

<pallas_src>
import math
import functools

import jax
import jax.numpy as jnp
from jax.experimental import pallas as pl
from jax.experimental.pallas import tpu as pltpu

_LN_EPS = 1e-5


# ----------------------------- fused kernel -----------------------------

def _layer_norm(z, g, b, eps):
    mu = jnp.mean(z, axis=-1, keepdims=True)
    var = jnp.mean((z - mu) ** 2, axis=-1, keepdims=True)
    return (z - mu) * jax.lax.rsqrt(var + eps) * g + b


def _fused_transformer_kernel(
        src_ref, enc_w_ref, enc_b_ref, pe_ref, pool_ref,
        wqkv_ref, bqkv_ref, wout_ref, bout_ref, ln1g_ref, ln1b_ref,
        w1_ref, b1_ref, w2_ref, b2_ref, ln2g_ref, ln2b_ref,
        dec_w_ref, dec_b_ref, out_ref,
        *, batch, seq, n_heads, n_layers, eps):
    D = enc_w_ref.shape[1]
    hd = D // n_heads
    scale = 1.0 / math.sqrt(hd)

    # --- encoder linear (sqrt(d_model) already folded into weights/bias) + positional enc ---
    # src_ref: (B*S, F); enc_w: (F, D); pe: (B*S, D)
    x = (jnp.dot(src_ref[...], enc_w_ref[...], preferred_element_type=jnp.float32)
         + enc_b_ref[...] + pe_ref[...])                                   # (B*S, D)

    # --- n_layers post-norm encoder layers; activation stays in vregs/VMEM throughout ---
    for li in range(n_layers):                                             # static unroll
        # ---- multi-head self-attention ----
        wqkv = wqkv_ref[li]                                                # (D, 3D)
        wout = wout_ref[li]                                                # (D, D)
        qkv = jnp.dot(x, wqkv, preferred_element_type=jnp.float32) + bqkv_ref[li]   # (B*S, 3D)

        batch_outs = []
        for b in range(batch):                                             # static unroll (B small)
            q_b = qkv[b * seq:(b + 1) * seq, 0 * D:1 * D]                  # (S, D)
            k_b = qkv[b * seq:(b + 1) * seq, 1 * D:2 * D]
            v_b = qkv[b * seq:(b + 1) * seq, 2 * D:3 * D]
            sa_b = jnp.zeros((seq, D), jnp.float32)                        # explicit accumulator
            # TODO(synk): for large n_heads / seq, replace this static head loop with a batched
            #             (B*H, S, hd) einsum + flash-style KV tiling; at S=8, hd=8 it is moot.
            for h in range(n_heads):                                       # static unroll
                qs = q_b[:, h * hd:(h + 1) * hd]                           # (S, hd)
                ks = k_b[:, h * hd:(h + 1) * hd]
                vs = v_b[:, h * hd:(h + 1) * hd]
                # q @ k^T via dot_general dimension numbers (no materialized transpose)
                s = jax.lax.dot_general(qs, ks, (((1,), (1,)), ((), ())),
                                        preferred_element_type=jnp.float32) * scale   # (S, S)
                m = jnp.max(s, axis=-1, keepdims=True)
                p = jnp.exp(s - m)
                p = p / jnp.sum(p, axis=-1, keepdims=True)                  # exact softmax
                o_h = jnp.dot(p, vs, preferred_element_type=jnp.float32)    # (S, hd)
                # concat(o_h) @ W_out == sum_h o_h @ W_out[h*hd:(h+1)*hd]
                sa_b = sa_b + jnp.dot(o_h, wout[h * hd:(h + 1) * hd, :],
                                      preferred_element_type=jnp.float32)
            batch_outs.append(sa_b)
        sa = jnp.concatenate(batch_outs, axis=0) + bout_ref[li]             # (B*S, D)

        x = _layer_norm(x + sa, ln1g_ref[li], ln1b_ref[li], eps)            # residual + LN1

        # ---- feed-forward ----
        h1 = jnp.dot(x, w1_ref[li], preferred_element_type=jnp.float32) + b1_ref[li]
        h1 = jnp.maximum(h1, 0.0)
        ff = jnp.dot(h1, w2_ref[li], preferred_element_type=jnp.float32) + b2_ref[li]
        x = _layer_norm(x + ff, ln2g_ref[li], ln2b_ref[li], eps)            # residual + LN2

    # --- mean over seq as an MXU matmul (pool[b, b*S+s] = 1/S) + decoder linear ---
    pooled = jnp.dot(pool_ref[...], x, preferred_element_type=jnp.float32)  # (B, D)
    out_ref[...] = (jnp.dot(pooled, dec_w_ref[...], preferred_element_type=jnp.float32)
                    + dec_b_ref[...])                                       # (B, C)


# ----------------------------- wrapper -----------------------------

def transformer_forward(src, params, *, n_heads):
    B, S, F = src.shape
    D = params["enc_w"].shape[1]
    C = params["dec_w"].shape[1]
    L = params["wqkv"].shape[0]

    src2 = src.reshape(B * S, F)                                  # flatten tokens onto sublanes
    pe = jnp.tile(params["pe"][:S], (B, 1))                       # (B*S, D) positional encoding
    pool = jnp.repeat(jnp.eye(B, dtype=jnp.float32), S, axis=1) / S   # (B, B*S) mean-pool matrix

    inputs = (src2, params["enc_w"], params["enc_b"], pe, pool,
              params["wqkv"], params["bqkv"], params["wout"], params["bout"],
              params["ln1_g"], params["ln1_b"],
              params["w1"], params["b1"], params["w2"], params["b2"],
              params["ln2_g"], params["ln2_b"],
              params["dec_w"], params["dec_b"])

    vmem_spec = pl.BlockSpec(memory_space=pltpu.MemorySpace.VMEM)
    kernel = functools.partial(_fused_transformer_kernel, batch=B, seq=S,
                               n_heads=n_heads, n_layers=L, eps=_LN_EPS)

    # TODO(synk): on v7x (2 TCs/chip) a 2-way "parallel" batch grid axis would use both cores;
    #             kept as a single fused invocation since v5e/v6e have one TensorCore and the
    #             launch/HBM-round-trip overhead dominates at these sizes.
    return pl.pallas_call(
        kernel,
        out_shape=jax.ShapeDtypeStruct((B, C), jnp.float32),
        in_specs=[vmem_spec] * len(inputs),
        out_specs=vmem_spec,
    )(*inputs)


# ----------------------------- parameter setup -----------------------------

def make_positional_encoding(max_len, d_model):
    position = jnp.arange(max_len, dtype=jnp.float32)[:, None]
    div_term = jnp.exp(jnp.arange(0, d_model, 2, dtype=jnp.float32)
                       * (-math.log(10000.0) / d_model))
    pe = jnp.zeros((max_len, d_model), jnp.float32)
    pe = pe.at[:, 0::2].set(jnp.sin(position * div_term))
    pe = pe.at[:, 1::2].set(jnp.cos(position * div_term))
    return pe


def init_params(key, n_features, n_classes, d_model, n_heads, n_layers, ff_dim, max_len=64):
    def dense(k, fan_in, fan_out):
        kw, kb = jax.random.split(k)
        lim = 1.0 / math.sqrt(fan_in)
        w = jax.random.uniform(kw, (fan_in, fan_out), jnp.float32, -lim, lim)
        b = jax.random.uniform(kb, (1, fan_out), jnp.float32, -lim, lim)
        return w, b

    keys = jax.random.split(key, 2 + n_layers)
    enc_w, enc_b = dense(keys[0], n_features, d_model)
    # Fold the * sqrt(d_model) scale (applied after the encoder Linear in the PyTorch module)
    # into the encoder weights/bias so it costs nothing at runtime.
    scale = math.sqrt(d_model)
    enc_w, enc_b = enc_w * scale, enc_b * scale
    dec_w, dec_b = dense(keys[1], d_model, n_classes)

    names = ("wqkv", "bqkv", "wout", "bout", "w1", "b1", "w2", "b2",
             "ln1_g", "ln1_b", "ln2_g", "ln2_b")
    per = {k: [] for k in names}
    for li in range(n_layers):
        lk = jax.random.split(keys[2 + li], 4)
        wqkv, bqkv = dense(lk[0], d_model, 3 * d_model)      # packed [q|k|v] projections
        wout, bout = dense(lk[1], d_model, d_model)
        w1, b1 = dense(lk[2], d_model, ff_dim)
        w2, b2 = dense(lk[3], ff_dim, d_model)
        vals = dict(wqkv=wqkv, bqkv=bqkv, wout=wout, bout=bout, w1=w1, b1=b1, w2=w2, b2=b2,
                    ln1_g=jnp.ones((1, d_model), jnp.float32),
                    ln1_b=jnp.zeros((1, d_model), jnp.float32),
                    ln2_g=jnp.ones((1, d_model), jnp.float32),
                    ln2_b=jnp.zeros((1, d_model), jnp.float32))
        for k in names:
            per[k].append(vals[k])
    stacked = {k: jnp.stack(v) for k, v in per.items()}       # leading (n_layers, ...) axis

    return dict(enc_w=enc_w, enc_b=enc_b, dec_w=dec_w, dec_b=dec_b,
                pe=make_positional_encoding(max_len, d_model), **stacked)


# ----------------------------- main -----------------------------

if __name__ == "__main__":
    # small, module-consistent shapes
    B, S = 2, 8
    n_features, n_classes = 16, 4
    d_model, n_heads, n_layers, ff_dim = 32, 4, 2, 64

    key = jax.random.PRNGKey(0)
    k_in, k_par = jax.random.split(key)
    src = jax.random.normal(k_in, (B, S, n_features), jnp.float32)
    params = init_params(k_par, n_features, n_classes, d_model, n_heads, n_layers, ff_dim)

    # TODO(synk): src_mask / key_padding_mask are not modeled (the PyTorch forward never passes
    #             them); dropout is identity (eval mode).
    fwd = jax.jit(functools.partial(transformer_forward, n_heads=n_heads))
    out = fwd(src, params)
    jax.block_until_ready(out)
    assert out.shape == (B, n_classes)
    print("KERNEL_OK")
</pallas_src>

<mosaic_0001>
module attributes {stable_mosaic.version = 11 : i64} {
  func.func @_fused_transformer_kernel(%arg0: memref<16x16xf32, #tpu.memory_space<vmem>>, %arg1: memref<16x32xf32, #tpu.memory_space<vmem>>, %arg2: memref<1x32xf32, #tpu.memory_space<vmem>>, %arg3: memref<16x32xf32, #tpu.memory_space<vmem>>, %arg4: memref<2x16xf32, #tpu.memory_space<vmem>>, %arg5: memref<2x32x96xf32, #tpu.memory_space<vmem>>, %arg6: memref<2x1x96xf32, #tpu.memory_space<vmem>>, %arg7: memref<2x32x32xf32, #tpu.memory_space<vmem>>, %arg8: memref<2x1x32xf32, #tpu.memory_space<vmem>>, %arg9: memref<2x1x32xf32, #tpu.memory_space<vmem>>, %arg10: memref<2x1x32xf32, #tpu.memory_space<vmem>>, %arg11: memref<2x32x64xf32, #tpu.memory_space<vmem>>, %arg12: memref<2x1x64xf32, #tpu.memory_space<vmem>>, %arg13: memref<2x64x32xf32, #tpu.memory_space<vmem>>, %arg14: memref<2x1x32xf32, #tpu.memory_space<vmem>>, %arg15: memref<2x1x32xf32, #tpu.memory_space<vmem>>, %arg16: memref<2x1x32xf32, #tpu.memory_space<vmem>>, %arg17: memref<32x4xf32, #tpu.memory_space<vmem>>, %arg18: memref<1x4xf32, #tpu.memory_space<vmem>>, %arg19: memref<2x4xf32, #tpu.memory_space<vmem>>) attributes {dimension_semantics = [], scalar_prefetch = 0 : i64, scratch_operands = 0 : i64, tpu.core_type = #tpu.core_type<tc>} {
    %c0 = arith.constant 0 : index
    %c0_0 = arith.constant 0 : index
    %0 = vector.load %arg0[%c0, %c0_0] : memref<16x16xf32, #tpu.memory_space<vmem>>, vector<16x16xf32>
    %c0_1 = arith.constant 0 : index
    %c0_2 = arith.constant 0 : index
    %1 = vector.load %arg1[%c0_1, %c0_2] : memref<16x32xf32, #tpu.memory_space<vmem>>, vector<16x32xf32>
    %cst = arith.constant dense<0.000000e+00> : vector<16x32xf32>
    %2 = tpu.matmul %0, %1, %cst {dimension_numbers = #tpu.dot_dimension_numbers<[1], [0], [0], [1], [0, 0, 1, 1], [], []>} : vector<16x16xf32>, vector<16x32xf32>, vector<16x32xf32> -> vector<16x32xf32>
    %c0_3 = arith.constant 0 : index
    %c0_4 = arith.constant 0 : index
    %3 = vector.load %arg2[%c0_3, %c0_4] : memref<1x32xf32, #tpu.memory_space<vmem>>, vector<1x32xf32>
    %4 = vector.broadcast %3 : vector<1x32xf32> to vector<16x32xf32>
    %5 = arith.addf %2, %4 : vector<16x32xf32>
    %c0_5 = arith.constant 0 : index
    %c0_6 = arith.constant 0 : index
    %6 = vector.load %arg3[%c0_5, %c0_6] : memref<16x32xf32, #tpu.memory_space<vmem>>, vector<16x32xf32>
    %7 = arith.addf %5, %6 : vector<16x32xf32>
    %c0_7 = arith.constant 0 : index
    %c0_8 = arith.constant 0 : index
    %c0_9 = arith.constant 0 : index
    %8 = vector.load %arg5[%c0_7, %c0_8, %c0_9] : memref<2x32x96xf32, #tpu.memory_space<vmem>>, vector<1x32x96xf32>
    %9 = vector.shape_cast %8 : vector<1x32x96xf32> to vector<32x96xf32>
    %c0_10 = arith.constant 0 : index
    %c0_11 = arith.constant 0 : index
    %c0_12 = arith.constant 0 : index
    %10 = vector.load %arg7[%c0_10, %c0_11, %c0_12] : memref<2x32x32xf32, #tpu.memory_space<vmem>>, vector<1x32x32xf32>
    %11 = vector.shape_cast %10 : vector<1x32x32xf32> to vector<32x32xf32>
    %cst_13 = arith.constant dense<0.000000e+00> : vector<16x96xf32>
    %12 = tpu.matmul %7, %9, %cst_13 {dimension_numbers = #tpu.dot_dimension_numbers<[1], [0], [0], [1], [0, 0, 1, 1], [], []>} : vector<16x32xf32>, vector<32x96xf32>, vector<16x96xf32> -> vector<16x96xf32>
    %c0_14 = arith.constant 0 : index
    %c0_15 = arith.constant 0 : index
    %c0_16 = arith.constant 0 : index
    %13 = vector.load %arg6[%c0_14, %c0_15, %c0_16] : memref<2x1x96xf32, #tpu.memory_space<vmem>>, vector<1x1x96xf32>
    %14 = vector.shape_cast %13 : vector<1x1x96xf32> to vector<1x96xf32>
    %15 = vector.broadcast %14 : vector<1x96xf32> to vector<16x96xf32>
    %16 = arith.addf %12, %15 : vector<16x96xf32>
    %17 = vector.extract_strided_slice %16 {offsets = [0, 0], sizes = [8, 32], strides = [1, 1]} : vector<16x96xf32> to vector<8x32xf32>
    %18 = vector.extract_strided_slice %16 {offsets = [0, 32], sizes = [8, 32], strides = [1, 1]} : vector<16x96xf32> to vector<8x32xf32>
    %19 = vector.extract_strided_slice %16 {offsets = [0, 64], sizes = [8, 32], strides = [1, 1]} : vector<16x96xf32> to vector<8x32xf32>
    %cst_17 = arith.constant 0.000000e+00 : f32
    %20 = vector.broadcast %cst_17 : f32 to vector<8x32xf32>
    %21 = vector.extract_strided_slice %17 {offsets = [0, 0], sizes = [8, 8], strides = [1, 1]} : vector<8x32xf32> to vector<8x8xf32>
    %22 = vector.extract_strided_slice %18 {offsets = [0, 0], sizes = [8, 8], strides = [1, 1]} : vector<8x32xf32> to vector<8x8xf32>
    %23 = vector.extract_strided_slice %19 {offsets = [0, 0], sizes = [8, 8], strides = [1, 1]} : vector<8x32xf32> to vector<8x8xf32>
    %cst_18 = arith.constant dense<0.000000e+00> : vector<8x8xf32>
    %24 = tpu.matmul %21, %22, %cst_18 {dimension_numbers = #tpu.dot_dimension_numbers<[1], [1], [0], [0], [0, 0, 1, 0], [], []>} : vector<8x8xf32>, vector<8x8xf32>, vector<8x8xf32> -> vector<8x8xf32>
    %cst_19 = arith.constant 0.353553385 : f32
    %25 = vector.broadcast %cst_19 : f32 to vector<8x8xf32>
    %26 = arith.mulf %24, %25 : vector<8x8xf32>
    %cst_20 = arith.constant dense<0xFF800000> : vector<8xf32>
    %27 = vector.multi_reduction <maximumf>, %26, %cst_20 [1] : vector<8x8xf32> to vector<8xf32>
    %28 = vector.shape_cast %27 : vector<8xf32> to vector<8x1xf32>
    %29 = vector.broadcast %28 : vector<8x1xf32> to vector<8x8xf32>
    %30 = arith.subf %26, %29 : vector<8x8xf32>
    %31 = math.exp %30 : vector<8x8xf32>
    %cst_21 = arith.constant dense<0.000000e+00> : vector<8xf32>
    %32 = vector.multi_reduction <add>, %31, %cst_21 [1] : vector<8x8xf32> to vector<8xf32>
    %33 = vector.shape_cast %32 : vector<8xf32> to vector<8x1xf32>
    %34 = vector.broadcast %33 : vector<8x1xf32> to vector<8x8xf32>
    %35 = arith.divf %31, %34 : vector<8x8xf32>
    %cst_22 = arith.constant dense<0.000000e+00> : vector<8x8xf32>
    %36 = tpu.matmul %35, %23, %cst_22 {dimension_numbers = #tpu.dot_dimension_numbers<[1], [0], [0], [1], [0, 0, 1, 1], [], []>} : vector<8x8xf32>, vector<8x8xf32>, vector<8x8xf32> -> vector<8x8xf32>
    %37 = vector.extract_strided_slice %11 {offsets = [0, 0], sizes = [8, 32], strides = [1, 1]} : vector<32x32xf32> to vector<8x32xf32>
    %cst_23 = arith.constant dense<0.000000e+00> : vector<8x32xf32>
    %38 = tpu.matmul %36, %37, %cst_23 {dimension_numbers = #tpu.dot_dimension_numbers<[1], [0], [0], [1], [0, 0, 1, 1], [], []>} : vector<8x8xf32>, vector<8x32xf32>, vector<8x32xf32> -> vector<8x32xf32>
    %39 = arith.addf %20, %38 : vector<8x32xf32>
    %40 = vector.extract_strided_slice %17 {offsets = [0, 8], sizes = [8, 8], strides = [1, 1]} : vector<8x32xf32> to vector<8x8xf32>
    %41 = vector.extract_strided_slice %18 {offsets = [0, 8], sizes = [8, 8], strides = [1, 1]} : vector<8x32xf32> to vector<8x8xf32>
    %42 = vector.extract_strided_slice %19 {offsets = [0, 8], sizes = [8, 8], strides = [1, 1]} : vector<8x32xf32> to vector<8x8xf32>
    %cst_24 = arith.constant dense<0.000000e+00> : vector<8x8xf32>
    %43 = tpu.matmul %40, %41, %cst_24 {dimension_numbers = #tpu.dot_dimension_numbers<[1], [1], [0], [0], [0, 0, 1, 0], [], []>} : vector<8x8xf32>, vector<8x8xf32>, vector<8x8xf32> -> vector<8x8xf32>
    %cst_25 = arith.constant 0.353553385 : f32
    %44 = vector.broadcast %cst_25 : f32 to vector<8x8xf32>
    %45 = arith.mulf %43, %44 : vector<8x8xf32>
    %cst_26 = arith.constant dense<0xFF800000> : vector<8xf32>
    %46 = vector.multi_reduction <maximumf>, %45, %cst_26 [1] : vector<8x8xf32> to vector<8xf32>
    %47 = vector.shape_cast %46 : vector<8xf32> to vector<8x1xf32>
    %48 = vector.broadcast %47 : vector<8x1xf32> to vector<8x8xf32>
    %49 = arith.subf %45, %48 : vector<8x8xf32>
    %50 = math.exp %49 : vector<8x8xf32>
    %cst_27 = arith.constant dense<0.000000e+00> : vector<8xf32>
    %51 = vector.multi_reduction <add>, %50, %cst_27 [1] : vector<8x8xf32> to vector<8xf32>
    %52 = vector.shape_cast %51 : vector<8xf32> to vector<8x1xf32>
    %53 = vector.broadcast %52 : vector<8x1xf32> to vector<8x8xf32>
    %54 = arith.divf %50, %53 : vector<8x8xf32>
    %cst_28 = arith.constant dense<0.000000e+00> : vector<8x8xf32>
    %55 = tpu.matmul %54, %42, %cst_28 {dimension_numbers = #tpu.dot_dimension_numbers<[1], [0], [0], [1], [0, 0, 1, 1], [], []>} : vector<8x8xf32>, vector<8x8xf32>, vector<8x8xf32> -> vector<8x8xf32>
    %56 = vector.extract_strided_slice %11 {offsets = [8, 0], sizes = [8, 32], strides = [1, 1]} : vector<32x32xf32> to vector<8x32xf32>
    %cst_29 = arith.constant dense<0.000000e+00> : vector<8x32xf32>
    %57 = tpu.matmul %55, %56, %cst_29 {dimension_numbers = #tpu.dot_dimension_numbers<[1], [0], [0], [1], [0, 0, 1, 1], [], []>} : vector<8x8xf32>, vector<8x32xf32>, vector<8x32xf32> -> vector<8x32xf32>
    %58 = arith.addf %39, %57 : vector<8x32xf32>
    %59 = vector.extract_strided_slice %17 {offsets = [0, 16], sizes = [8, 8], strides = [1, 1]} : vector<8x32xf32> to vector<8x8xf32>
    %60 = vector.extract_strided_slice %18 {offsets = [0, 16], sizes = [8, 8], strides = [1, 1]} : vector<8x32xf32> to vector<8x8xf32>
    %61 = vector.extract_strided_slice %19 {offsets = [0, 16], sizes = [8, 8], strides = [1, 1]} : vector<8x32xf32> to vector<8x8xf32>
    %cst_30 = arith.constant dense<0.000000e+00> : vector<8x8xf32>
    %62 = tpu.matmul %59, %60, %cst_30 {dimension_numbers = #tpu.dot_dimension_numbers<[1], [1], [0], [0], [0, 0, 1, 0], [], []>} : vector<8x8xf32>, vector<8x8xf32>, vector<8x8xf32> -> vector<8x8xf32>
    %cst_31 = arith.constant 0.353553385 : f32
    %63 = vector.broadcast %cst_31 : f32 to vector<8x8xf32>
    %64 = arith.mulf %62, %63 : vector<8x8xf32>
    %cst_32 = arith.constant dense<0xFF800000> : vector<8xf32>
    %65 = vector.multi_reduction <maximumf>, %64, %cst_32 [1] : vector<8x8xf32> to vector<8xf32>
    %66 = vector.shape_cast %65 : vector<8xf32> to vector<8x1xf32>
    %67 = vector.broadcast %66 : vector<8x1xf32> to vector<8x8xf32>
    %68 = arith.subf %64, %67 : vector<8x8xf32>
    %69 = math.exp %68 : vector<8x8xf32>
    %cst_33 = arith.constant dense<0.000000e+00> : vector<8xf32>
    %70 = vector.multi_reduction <add>, %69, %cst_33 [1] : vector<8x8xf32> to vector<8xf32>
    %71 = vector.shape_cast %70 : vector<8xf32> to vector<8x1xf32>
    %72 = vector.broadcast %71 : vector<8x1xf32> to vector<8x8xf32>
    %73 = arith.divf %69, %72 : vector<8x8xf32>
    %cst_34 = arith.constant dense<0.000000e+00> : vector<8x8xf32>
    %74 = tpu.matmul %73, %61, %cst_34 {dimension_numbers = #tpu.dot_dimension_numbers<[1], [0], [0], [1], [0, 0, 1, 1], [], []>} : vector<8x8xf32>, vector<8x8xf32>, vector<8x8xf32> -> vector<8x8xf32>
    %75 = vector.extract_strided_slice %11 {offsets = [16, 0], sizes = [8, 32], strides = [1, 1]} : vector<32x32xf32> to vector<8x32xf32>
    %cst_35 = arith.constant dense<0.000000e+00> : vector<8x32xf32>
    %76 = tpu.matmul %74, %75, %cst_35 {dimension_numbers = #tpu.dot_dimension_numbers<[1], [0], [0], [1], [0, 0, 1, 1], [], []>} : vector<8x8xf32>, vector<8x32xf32>, vector<8x32xf32> -> vector<8x32xf32>
    %77 = arith.addf %58, %76 : vector<8x32xf32>
    %78 = vector.extract_strided_slice %17 {offsets = [0, 24], sizes = [8, 8], strides = [1, 1]} : vector<8x32xf32> to vector<8x8xf32>
    %79 = vector.extract_strided_slice %18 {offsets = [0, 24], sizes = [8, 8], strides = [1, 1]} : vector<8x32xf32> to vector<8x8xf32>
    %80 = vector.extract_strided_slice %19 {offsets = [0, 24], sizes = [8, 8], strides = [1, 1]} : vector<8x32xf32> to vector<8x8xf32>
    %cst_36 = arith.constant dense<0.000000e+00> : vector<8x8xf32>
    %81 = tpu.matmul %78, %79, %cst_36 {dimension_numbers = #tpu.dot_dimension_numbers<[1], [1], [0], [0], [0, 0, 1, 0], [], []>} : vector<8x8xf32>, vector<8x8xf32>, vector<8x8xf32> -> vector<8x8xf32>
    %cst_37 = arith.constant 0.353553385 : f32
    %82 = vector.broadcast %cst_37 : f32 to vector<8x8xf32>
    %83 = arith.mulf %81, %82 : vector<8x8xf32>
    %cst_38 = arith.constant dense<0xFF800000> : vector<8xf32>
    %84 = vector.multi_reduction <maximumf>, %83, %cst_38 [1] : vector<8x8xf32> to vector<8xf32>
    %85 = vector.shape_cast %84 : vector<8xf32> to vector<8x1xf32>
    %86 = vector.broadcast %85 : vector<8x1xf32> to vector<8x8xf32>
    %87 = arith.subf %83, %86 : vector<8x8xf32>
    %88 = math.exp %87 : vector<8x8xf32>
    %cst_39 = arith.constant dense<0.000000e+00> : vector<8xf32>
    %89 = vector.multi_reduction <add>, %88, %cst_39 [1] : vector<8x8xf32> to vector<8xf32>
    %90 = vector.shape_cast %89 : vector<8xf32> to vector<8x1xf32>
    %91 = vector.broadcast %90 : vector<8x1xf32> to vector<8x8xf32>
    %92 = arith.divf %88, %91 : vector<8x8xf32>
    %cst_40 = arith.constant dense<0.000000e+00> : vector<8x8xf32>
    %93 = tpu.matmul %92, %80, %cst_40 {dimension_numbers = #tpu.dot_dimension_numbers<[1], [0], [0], [1], [0, 0, 1, 1], [], []>} : vector<8x8xf32>, vector<8x8xf32>, vector<8x8xf32> -> vector<8x8xf32>
    %94 = vector.extract_strided_slice %11 {offsets = [24, 0], sizes = [8, 32], strides = [1, 1]} : vector<32x32xf32> to vector<8x32xf32>
    %cst_41 = arith.constant dense<0.000000e+00> : vector<8x32xf32>
    %95 = tpu.matmul %93, %94, %cst_41 {dimension_numbers = #tpu.dot_dimension_numbers<[1], [0], [0], [1], [0, 0, 1, 1], [], []>} : vector<8x8xf32>, vector<8x32xf32>, vector<8x32xf32> -> vector<8x32xf32>
    %96 = arith.addf %77, %95 : vector<8x32xf32>
    %97 = vector.extract_strided_slice %16 {offsets = [8, 0], sizes = [8, 32], strides = [1, 1]} : vector<16x96xf32> to vector<8x32xf32>
    %98 = vector.extract_strided_slice %16 {offsets = [8, 32], sizes = [8, 32], strides = [1, 1]} : vector<16x96xf32> to vector<8x32xf32>
    %99 = vector.extract_strided_slice %16 {offsets = [8, 64], sizes = [8, 32], strides = [1, 1]} : vector<16x96xf32> to vector<8x32xf32>
    %cst_42 = arith.constant 0.000000e+00 : f32
    %100 = vector.broadcast %cst_42 : f32 to vector<8x32xf32>
    %101 = vector.extract_strided_slice %97 {offsets = [0, 0], sizes = [8, 8], strides = [1, 1]} : vector<8x32xf32> to vector<8x8xf32>
    %102 = vector.extract_strided_slice %98 {offsets = [0, 0], sizes = [8, 8], strides = [1, 1]} : vector<8x32xf32> to vector<8x8xf32>
    %103 = vector.extract_strided_slice %99 {offsets = [0, 0], sizes = [8, 8], strides = [1, 1]} : vector<8x32xf32> to vector<8x8xf32>
    %cst_43 = arith.constant dense<0.000000e+00> : vector<8x8xf32>
    %104 = tpu.matmul %101, %102, %cst_43 {dimension_numbers = #tpu.dot_dimension_numbers<[1], [1], [0], [0], [0, 0, 1, 0], [], []>} : vector<8x8xf32>, vector<8x8xf32>, vector<8x8xf32> -> vector<8x8xf32>
    %cst_44 = arith.constant 0.353553385 : f32
    %105 = vector.broadcast %cst_44 : f32 to vector<8x8xf32>
    %106 = arith.mulf %104, %105 : vector<8x8xf32>
    %cst_45 = arith.constant dense<0xFF800000> : vector<8xf32>
    %107 = vector.multi_reduction <maximumf>, %106, %cst_45 [1] : vector<8x8xf32> to vector<8xf32>
    %108 = vector.shape_cast %107 : vector<8xf32> to vector<8x1xf32>
    %109 = vector.broadcast %108 : vector<8x1xf32> to vector<8x8xf32>
    %110 = arith.subf %106, %109 : vector<8x8xf32>
    %111 = math.exp %110 : vector<8x8xf32>
    %cst_46 = arith.constant dense<0.000000e+00> : vector<8xf32>
    %112 = vector.multi_reduction <add>, %111, %cst_46 [1] : vector<8x8xf32> to vector<8xf32>
    %113 = vector.shape_cast %112 : vector<8xf32> to vector<8x1xf32>
    %114 = vector.broadcast %113 : vector<8x1xf32> to vector<8x8xf32>
    %115 = arith.divf %111, %114 : vector<8x8xf32>
    %cst_47 = arith.constant dense<0.000000e+00> : vector<8x8xf32>
    %116 = tpu.matmul %115, %103, %cst_47 {dimension_numbers = #tpu.dot_dimension_numbers<[1], [0], [0], [1], [0, 0, 1, 1], [], []>} : vector<8x8xf32>, vector<8x8xf32>, vector<8x8xf32> -> vector<8x8xf32>
    %117 = vector.extract_strided_slice %11 {offsets = [0, 0], sizes = [8, 32], strides = [1, 1]} : vector<32x32xf32> to vector<8x32xf32>
    %cst_48 = arith.constant dense<0.000000e+00> : vector<8x32xf32>
    %118 = tpu.matmul %116, %117, %cst_48 {dimension_numbers = #tpu.dot_dimension_numbers<[1], [0], [0], [1], [0, 0, 1, 1], [], []>} : vector<8x8xf32>, vector<8x32xf32>, vector<8x32xf32> -> vector<8x32xf32>
    %119 = arith.addf %100, %118 : vector<8x32xf32>
    %120 = vector.extract_strided_slice %97 {offsets = [0, 8], sizes = [8, 8], strides = [1, 1]} : vector<8x32xf32> to vector<8x8xf32>
    %121 = vector.extract_strided_slice %98 {offsets = [0, 8], sizes = [8, 8], strides = [1, 1]} : vector<8x32xf32> to vector<8x8xf32>
    %122 = vector.extract_strided_slice %99 {offsets = [0, 8], sizes = [8, 8], strides = [1, 1]} : vector<8x32xf32> to vector<8x8xf32>
    %cst_49 = arith.constant dense<0.000000e+00> : vector<8x8xf32>
    %123 = tpu.matmul %120, %121, %cst_49 {dimension_numbers = #tpu.dot_dimension_numbers<[1], [1], [0], [0], [0, 0, 1, 0], [], []>} : vector<8x8xf32>, vector<8x8xf32>, vector<8x8xf32> -> vector<8x8xf32>
    %cst_50 = arith.constant 0.353553385 : f32
    %124 = vector.broadcast %cst_50 : f32 to vector<8x8xf32>
    %125 = arith.mulf %123, %124 : vector<8x8xf32>
    %cst_51 = arith.constant dense<0xFF800000> : vector<8xf32>
    %126 = vector.multi_reduction <maximumf>, %125, %cst_51 [1] : vector<8x8xf32> to vector<8xf32>
    %127 = vector.shape_cast %126 : vector<8xf32> to vector<8x1xf32>
    %128 = vector.broadcast %127 : vector<8x1xf32> to vector<8x8xf32>
    %129 = arith.subf %125, %128 : vector<8x8xf32>
    %130 = math.exp %129 : vector<8x8xf32>
    %cst_52 = arith.constant dense<0.000000e+00> : vector<8xf32>
    %131 = vector.multi_reduction <add>, %130, %cst_52 [1] : vector<8x8xf32> to vector<8xf32>
    %132 = vector.shape_cast %131 : vector<8xf32> to vector<8x1xf32>
    %133 = vector.broadcast %132 : vector<8x1xf32> to vector<8x8xf32>
    %134 = arith.divf %130, %133 : vector<8x8xf32>
    %cst_53 = arith.constant dense<0.000000e+00> : vector<8x8xf32>
    %135 = tpu.matmul %134, %122, %cst_53 {dimension_numbers = #tpu.dot_dimension_numbers<[1], [0], [0], [1], [0, 0, 1, 1], [], []>} : vector<8x8xf32>, vector<8x8xf32>, vector<8x8xf32> -> vector<8x8xf32>
    %136 = vector.extract_strided_slice %11 {offsets = [8, 0], sizes = [8, 32], strides = [1, 1]} : vector<32x32xf32> to vector<8x32xf32>
    %cst_54 = arith.constant dense<0.000000e+00> : vector<8x32xf32>
    %137 = tpu.matmul %135, %136, %cst_54 {dimension_numbers = #tpu.dot_dimension_numbers<[1], [0], [0], [1], [0, 0, 1, 1], [], []>} : vector<8x8xf32>, vector<8x32xf32>, vector<8x32xf32> -> vector<8x32xf32>
    %138 = arith.addf %119, %137 : vector<8x32xf32>
    %139 = vector.extract_strided_slice %97 {offsets = [0, 16], sizes = [8, 8], strides = [1, 1]} : vector<8x32xf32> to vector<8x8xf32>
    %140 = vector.extract_strided_slice %98 {offsets = [0, 16], sizes = [8, 8], strides = [1, 1]} : vector<8x32xf32> to vector<8x8xf32>
    %141 = vector.extract_strided_slice %99 {offsets = [0, 16], sizes = [8, 8], strides = [1, 1]} : vector<8x32xf32> to vector<8x8xf32>
    %cst_55 = arith.constant dense<0.000000e+00> : vector<8x8xf32>
    %142 = tpu.matmul %139, %140, %cst_55 {dimension_numbers = #tpu.dot_dimension_numbers<[1], [1], [0], [0], [0, 0, 1, 0], [], []>} : vector<8x8xf32>, vector<8x8xf32>, vector<8x8xf32> -> vector<8x8xf32>
    %cst_56 = arith.constant 0.353553385 : f32
    %143 = vector.broadcast %cst_56 : f32 to vector<8x8xf32>
    %144 = arith.mulf %142, %143 : vector<8x8xf32>
    %cst_57 = arith.constant dense<0xFF800000> : vector<8xf32>
    %145 = vector.multi_reduction <maximumf>, %144, %cst_57 [1] : vector<8x8xf32> to vector<8xf32>
    %146 = vector.shape_cast %145 : vector<8xf32> to vector<8x1xf32>
    %147 = vector.broadcast %146 : vector<8x1xf32> to vector<8x8xf32>
    %148 = arith.subf %144, %147 : vector<8x8xf32>
    %149 = math.exp %148 : vector<8x8xf32>
    %cst_58 = arith.constant dense<0.000000e+00> : vector<8xf32>
    %150 = vector.multi_reduction <add>, %149, %cst_58 [1] : vector<8x8xf32> to vector<8xf32>
    %151 = vector.shape_cast %150 : vector<8xf32> to vector<8x1xf32>
    %152 = vector.broadcast %151 : vector<8x1xf32> to vector<8x8xf32>
    %153 = arith.divf %149, %152 : vector<8x8xf32>
    %cst_59 = arith.constant dense<0.000000e+00> : vector<8x8xf32>
    %154 = tpu.matmul %153, %141, %cst_59 {dimension_numbers = #tpu.dot_dimension_numbers<[1], [0], [0], [1], [0, 0, 1, 1], [], []>} : vector<8x8xf32>, vector<8x8xf32>, vector<8x8xf32> -> vector<8x8xf32>
    %155 = vector.extract_strided_slice %11 {offsets = [16, 0], sizes = [8, 32], strides = [1, 1]} : vector<32x32xf32> to vector<8x32xf32>
    %cst_60 = arith.constant dense<0.000000e+00> : vector<8x32xf32>
    %156 = tpu.matmul %154, %155, %cst_60 {dimension_numbers = #tpu.dot_dimension_numbers<[1], [0], [0], [1], [0, 0, 1, 1], [], []>} : vector<8x8xf32>, vector<8x32xf32>, vector<8x32xf32> -> vector<8x32xf32>
    %157 = arith.addf %138, %156 : vector<8x32xf32>
    %158 = vector.extract_strided_slice %97 {offsets = [0, 24], sizes = [8, 8], strides = [1, 1]} : vector<8x32xf32> to vector<8x8xf32>
    %159 = vector.extract_strided_slice %98 {offsets = [0, 24], sizes = [8, 8], strides = [1, 1]} : vector<8x32xf32> to vector<8x8xf32>
    %160 = vector.extract_strided_slice %99 {offsets = [0, 24], sizes = [8, 8], strides = [1, 1]} : vector<8x32xf32> to vector<8x8xf32>
    %cst_61 = arith.constant dense<0.000000e+00> : vector<8x8xf32>
    %161 = tpu.matmul %158, %159, %cst_61 {dimension_numbers = #tpu.dot_dimension_numbers<[1], [1], [0], [0], [0, 0, 1, 0], [], []>} : vector<8x8xf32>, vector<8x8xf32>, vector<8x8xf32> -> vector<8x8xf32>
    %cst_62 = arith.constant 0.353553385 : f32
    %162 = vector.broadcast %cst_62 : f32 to vector<8x8xf32>
    %163 = arith.mulf %161, %162 : vector<8x8xf32>
    %cst_63 = arith.constant dense<0xFF800000> : vector<8xf32>
    %164 = vector.multi_reduction <maximumf>, %163, %cst_63 [1] : vector<8x8xf32> to vector<8xf32>
    %165 = vector.shape_cast %164 : vector<8xf32> to vector<8x1xf32>
    %166 = vector.broadcast %165 : vector<8x1xf32> to vector<8x8xf32>
    %167 = arith.subf %163, %166 : vector<8x8xf32>
    %168 = math.exp %167 : vector<8x8xf32>
    %cst_64 = arith.constant dense<0.000000e+00> : vector<8xf32>
    %169 = vector.multi_reduction <add>, %168, %cst_64 [1] : vector<8x8xf32> to vector<8xf32>
    %170 = vector.shape_cast %169 : vector<8xf32> to vector<8x1xf32>
    %171 = vector.broadcast %170 : vector<8x1xf32> to vector<8x8xf32>
    %172 = arith.divf %168, %171 : vector<8x8xf32>
    %cst_65 = arith.constant dense<0.000000e+00> : vector<8x8xf32>
    %173 = tpu.matmul %172, %160, %cst_65 {dimension_numbers = #tpu.dot_dimension_numbers<[1], [0], [0], [1], [0, 0, 1, 1], [], []>} : vector<8x8xf32>, vector<8x8xf32>, vector<8x8xf32> -> vector<8x8xf32>
    %174 = vector.extract_strided_slice %11 {offsets = [24, 0], sizes = [8, 32], strides = [1, 1]} : vector<32x32xf32> to vector<8x32xf32>
    %cst_66 = arith.constant dense<0.000000e+00> : vector<8x32xf32>
    %175 = tpu.matmul %173, %174, %cst_66 {dimension_numbers = #tpu.dot_dimension_numbers<[1], [0], [0], [1], [0, 0, 1, 1], [], []>} : vector<8x8xf32>, vector<8x32xf32>, vector<8x32xf32> -> vector<8x32xf32>
    %176 = arith.addf %157, %175 : vector<8x32xf32>
    %177 = tpu.concatenate %96, %176 in 0 : vector<8x32xf32>, vector<8x32xf32> -> vector<16x32xf32>
    %c0_67 = arith.constant 0 : index
    %c0_68 = arith.constant 0 : index
    %c0_69 = arith.constant 0 : index
    %178 = vector.load %arg8[%c0_67, %c0_68, %c0_69] : memref<2x1x32xf32, #tpu.memory_space<vmem>>, vector<1x1x32xf32>
    %179 = vector.shape_cast %178 : vector<1x1x32xf32> to vector<1x32xf32>
    %180 = vector.broadcast %179 : vector<1x32xf32> to vector<16x32xf32>
    %181 = arith.addf %177, %180 : vector<16x32xf32>
    %182 = arith.addf %7, %181 : vector<16x32xf32>
    %c0_70 = arith.constant 0 : index
    %c0_71 = arith.constant 0 : index
    %c0_72 = arith.constant 0 : index
    %183 = vector.load %arg9[%c0_70, %c0_71, %c0_72] : memref<2x1x32xf32, #tpu.memory_space<vmem>>, vector<1x1x32xf32>
    %184 = vector.shape_cast %183 : vector<1x1x32xf32> to vector<1x32xf32>
    %c0_73 = arith.constant 0 : index
    %c0_74 = arith.constant 0 : index
    %c0_75 = arith.constant 0 : index
    %185 = vector.load %arg10[%c0_73, %c0_74, %c0_75] : memref<2x1x32xf32, #tpu.memory_space<vmem>>, vector<1x1x32xf32>
    %186 = vector.shape_cast %185 : vector<1x1x32xf32> to vector<1x32xf32>
    %cst_76 = arith.constant dense<0.000000e+00> : vector<16xf32>
    %187 = vector.multi_reduction <add>, %182, %cst_76 [1] : vector<16x32xf32> to vector<16xf32>
    %188 = vector.shape_cast %187 : vector<16xf32> to vector<16x1xf32>
    %cst_77 = arith.constant 3.200000e+01 : f32
    %189 = vector.broadcast %cst_77 : f32 to vector<16x1xf32>
    %190 = arith.divf %188, %189 : vector<16x1xf32>
    %191 = vector.broadcast %190 : vector<16x1xf32> to vector<16x32xf32>
    %192 = arith.subf %182, %191 : vector<16x32xf32>
    %193 = arith.mulf %192, %192 : vector<16x32xf32>
    %cst_78 = arith.constant dense<0.000000e+00> : vector<16xf32>
    %194 = vector.multi_reduction <add>, %193, %cst_78 [1] : vector<16x32xf32> to vector<16xf32>
    %195 = vector.shape_cast %194 : vector<16xf32> to vector<16x1xf32>
    %cst_79 = arith.constant 3.200000e+01 : f32
    %196 = vector.broadcast %cst_79 : f32 to vector<16x1xf32>
    %197 = arith.divf %195, %196 : vector<16x1xf32>
    %198 = vector.broadcast %190 : vector<16x1xf32> to vector<16x32xf32>
    %199 = arith.subf %182, %198 : vector<16x32xf32>
    %cst_80 = arith.constant 9.99999974E-6 : f32
    %200 = vector.broadcast %cst_80 : f32 to vector<16x1xf32>
    %201 = arith.addf %197, %200 : vector<16x1xf32>
    %202 = math.rsqrt %201 : vector<16x1xf32>
    %203 = vector.broadcast %202 : vector<16x1xf32> to vector<16x32xf32>
    %204 = arith.mulf %199, %203 : vector<16x32xf32>
    %205 = vector.broadcast %184 : vector<1x32xf32> to vector<16x32xf32>
    %206 = arith.mulf %204, %205 : vector<16x32xf32>
    %207 = vector.broadcast %186 : vector<1x32xf32> to vector<16x32xf32>
    %208 = arith.addf %206, %207 : vector<16x32xf32>
    %c0_81 = arith.constant 0 : index
    %c0_82 = arith.constant 0 : index
    %c0_83 = arith.constant 0 : index
    %209 = vector.load %arg11[%c0_81, %c0_82, %c0_83] : memref<2x32x64xf32, #tpu.memory_space<vmem>>, vector<1x32x64xf32>
    %210 = vector.shape_cast %209 : vector<1x32x64xf32> to vector<32x64xf32>
    %cst_84 = arith.constant dense<0.000000e+00> : vector<16x64xf32>
    %211 = tpu.matmul %208, %210, %cst_84 {dimension_numbers = #tpu.dot_dimension_numbers<[1], [0], [0], [1], [0, 0, 1, 1], [], []>} : vector<16x32xf32>, vector<32x64xf32>, vector<16x64xf32> -> vector<16x64xf32>
    %c0_85 = arith.constant 0 : index
    %c0_86 = arith.constant 0 : index
    %c0_87 = arith.constant 0 : index
    %212 = vector.load %arg12[%c0_85, %c0_86, %c0_87] : memref<2x1x64xf32, #tpu.memory_space<vmem>>, vector<1x1x64xf32>
    %213 = vector.shape_cast %212 : vector<1x1x64xf32> to vector<1x64xf32>
    %214 = vector.broadcast %213 : vector<1x64xf32> to vector<16x64xf32>
    %215 = arith.addf %211, %214 : vector<16x64xf32>
    %cst_88 = arith.constant 0.000000e+00 : f32
    %216 = vector.broadcast %cst_88 : f32 to vector<16x64xf32>
    %217 = arith.maximumf %215, %216 : vector<16x64xf32>
    %c0_89 = arith.constant 0 : index
    %c0_90 = arith.constant 0 : index
    %c0_91 = arith.constant 0 : index
    %218 = vector.load %arg13[%c0_89, %c0_90, %c0_91] : memref<2x64x32xf32, #tpu.memory_space<vmem>>, vector<1x64x32xf32>
    %219 = vector.shape_cast %218 : vector<1x64x32xf32> to vector<64x32xf32>
    %cst_92 = arith.constant dense<0.000000e+00> : vector<16x32xf32>
    %220 = tpu.matmul %217, %219, %cst_92 {dimension_numbers = #tpu.dot_dimension_numbers<[1], [0], [0], [1], [0, 0, 1, 1], [], []>} : vector<16x64xf32>, vector<64x32xf32>, vector<16x32xf32> -> vector<16x32xf32>
    %c0_93 = arith.constant 0 : index
    %c0_94 = arith.constant 0 : index
    %c0_95 = arith.constant 0 : index
    %221 = vector.load %arg14[%c0_93, %c0_94, %c0_95] : memref<2x1x32xf32, #tpu.memory_space<vmem>>, vector<1x1x32xf32>
    %222 = vector.shape_cast %221 : vector<1x1x32xf32> to vector<1x32xf32>
    %223 = vector.broadcast %222 : vector<1x32xf32> to vector<16x32xf32>
    %224 = arith.addf %220, %223 : vector<16x32xf32>
    %225 = arith.addf %208, %224 : vector<16x32xf32>
    %c0_96 = arith.constant 0 : index
    %c0_97 = arith.constant 0 : index
    %c0_98 = arith.constant 0 : index
    %226 = vector.load %arg15[%c0_96, %c0_97, %c0_98] : memref<2x1x32xf32, #tpu.memory_space<vmem>>, vector<1x1x32xf32>
    %227 = vector.shape_cast %226 : vector<1x1x32xf32> to vector<1x32xf32>
    %c0_99 = arith.constant 0 : index
    %c0_100 = arith.constant 0 : index
    %c0_101 = arith.constant 0 : index
    %228 = vector.load %arg16[%c0_99, %c0_100, %c0_101] : memref<2x1x32xf32, #tpu.memory_space<vmem>>, vector<1x1x32xf32>
    %229 = vector.shape_cast %228 : vector<1x1x32xf32> to vector<1x32xf32>
    %cst_102 = arith.constant dense<0.000000e+00> : vector<16xf32>
    %230 = vector.multi_reduction <add>, %225, %cst_102 [1] : vector<16x32xf32> to vector<16xf32>
    %231 = vector.shape_cast %230 : vector<16xf32> to vector<16x1xf32>
    %cst_103 = arith.constant 3.200000e+01 : f32
    %232 = vector.broadcast %cst_103 : f32 to vector<16x1xf32>
    %233 = arith.divf %231, %232 : vector<16x1xf32>
    %234 = vector.broadcast %233 : vector<16x1xf32> to vector<16x32xf32>
    %235 = arith.subf %225, %234 : vector<16x32xf32>
    %236 = arith.mulf %235, %235 : vector<16x32xf32>
    %cst_104 = arith.constant dense<0.000000e+00> : vector<16xf32>
    %237 = vector.multi_reduction <add>, %236, %cst_104 [1] : vector<16x32xf32> to vector<16xf32>
    %238 = vector.shape_cast %237 : vector<16xf32> to vector<16x1xf32>
    %cst_105 = arith.constant 3.200000e+01 : f32
    %239 = vector.broadcast %cst_105 : f32 to vector<16x1xf32>
    %240 = arith.divf %238, %239 : vector<16x1xf32>
    %241 = vector.broadcast %233 : vector<16x1xf32> to vector<16x32xf32>
    %242 = arith.subf %225, %241 : vector<16x32xf32>
    %cst_106 = arith.constant 9.99999974E-6 : f32
    %243 = vector.broadcast %cst_106 : f32 to vector<16x1xf32>
    %244 = arith.addf %240, %243 : vector<16x1xf32>
    %245 = math.rsqrt %244 : vector<16x1xf32>
    %246 = vector.broadcast %245 : vector<16x1xf32> to vector<16x32xf32>
    %247 = arith.mulf %242, %246 : vector<16x32xf32>
    %248 = vector.broadcast %227 : vector<1x32xf32> to vector<16x32xf32>
    %249 = arith.mulf %247, %248 : vector<16x32xf32>
    %250 = vector.broadcast %229 : vector<1x32xf32> to vector<16x32xf32>
    %251 = arith.addf %249, %250 : vector<16x32xf32>
    %c1 = arith.constant 1 : index
    %c0_107 = arith.constant 0 : index
    %c0_108 = arith.constant 0 : index
    %252 = vector.load %arg5[%c1, %c0_107, %c0_108] : memref<2x32x96xf32, #tpu.memory_space<vmem>>, vector<1x32x96xf32>
    %253 = vector.shape_cast %252 : vector<1x32x96xf32> to vector<32x96xf32>
    %c1_109 = arith.constant 1 : index
    %c0_110 = arith.constant 0 : index
    %c0_111 = arith.constant 0 : index
    %254 = vector.load %arg7[%c1_109, %c0_110, %c0_111] : memref<2x32x32xf32, #tpu.memory_space<vmem>>, vector<1x32x32xf32>
    %255 = vector.shape_cast %254 : vector<1x32x32xf32> to vector<32x32xf32>
    %cst_112 = arith.constant dense<0.000000e+00> : vector<16x96xf32>
    %256 = tpu.matmul %251, %253, %cst_112 {dimension_numbers = #tpu.dot_dimension_numbers<[1], [0], [0], [1], [0, 0, 1, 1], [], []>} : vector<16x32xf32>, vector<32x96xf32>, vector<16x96xf32> -> vector<16x96xf32>
    %c1_113 = arith.constant 1 : index
    %c0_114 = arith.constant 0 : index
    %c0_115 = arith.constant 0 : index
    %257 = vector.load %arg6[%c1_113, %c0_114, %c0_115] : memref<2x1x96xf32, #tpu.memory_space<vmem>>, vector<1x1x96xf32>
    %258 = vector.shape_cast %257 : vector<1x1x96xf32> to vector<1x96xf32>
    %259 = vector.broadcast %258 : vector<1x96xf32> to vector<16x96xf32>
    %260 = arith.addf %256, %259 : vector<16x96xf32>
    %261 = vector.extract_strided_slice %260 {offsets = [0, 0], sizes = [8, 32], strides = [1, 1]} : vector<16x96xf32> to vector<8x32xf32>
    %262 = vector.extract_strided_slice %260 {offsets = [0, 32], sizes = [8, 32], strides = [1, 1]} : vector<16x96xf32> to vector<8x32xf32>
    %263 = vector.extract_strided_slice %260 {offsets = [0, 64], sizes = [8, 32], strides = [1, 1]} : vector<16x96xf32> to vector<8x32xf32>
    %cst_116 = arith.constant 0.000000e+00 : f32
    %264 = vector.broadcast %cst_116 : f32 to vector<8x32xf32>
    %265 = vector.extract_strided_slice %261 {offsets = [0, 0], sizes = [8, 8], strides = [1, 1]} : vector<8x32xf32> to vector<8x8xf32>
    %266 = vector.extract_strided_slice %262 {offsets = [0, 0], sizes = [8, 8], strides = [1, 1]} : vector<8x32xf32> to vector<8x8xf32>
    %267 = vector.extract_strided_slice %263 {offsets = [0, 0], sizes = [8, 8], strides = [1, 1]} : vector<8x32xf32> to vector<8x8xf32>
    %cst_117 = arith.constant dense<0.000000e+00> : vector<8x8xf32>
    %268 = tpu.matmul %265, %266, %cst_117 {dimension_numbers = #tpu.dot_dimension_numbers<[1], [1], [0], [0], [0, 0, 1, 0], [], []>} : vector<8x8xf32>, vector<8x8xf32>, vector<8x8xf32> -> vector<8x8xf32>
    %cst_118 = arith.constant 0.353553385 : f32
    %269 = vector.broadcast %cst_118 : f32 to vector<8x8xf32>
    %270 = arith.mulf %268, %269 : vector<8x8xf32>
    %cst_119 = arith.constant dense<0xFF800000> : vector<8xf32>
    %271 = vector.multi_reduction <maximumf>, %270, %cst_119 [1] : vector<8x8xf32> to vector<8xf32>
    %272 = vector.shape_cast %271 : vector<8xf32> to vector<8x1xf32>
    %273 = vector.broadcast %272 : vector<8x1xf32> to vector<8x8xf32>
    %274 = arith.subf %270, %273 : vector<8x8xf32>
    %275 = math.exp %274 : vector<8x8xf32>
    %cst_120 = arith.constant dense<0.000000e+00> : vector<8xf32>
    %276 = vector.multi_reduction <add>, %275, %cst_120 [1] : vector<8x8xf32> to vector<8xf32>
    %277 = vector.shape_cast %276 : vector<8xf32> to vector<8x1xf32>
    %278 = vector.broadcast %277 : vector<8x1xf32> to vector<8x8xf32>
    %279 = arith.divf %275, %278 : vector<8x8xf32>
    %cst_121 = arith.constant dense<0.000000e+00> : vector<8x8xf32>
    %280 = tpu.matmul %279, %267, %cst_121 {dimension_numbers = #tpu.dot_dimension_numbers<[1], [0], [0], [1], [0, 0, 1, 1], [], []>} : vector<8x8xf32>, vector<8x8xf32>, vector<8x8xf32> -> vector<8x8xf32>
    %281 = vector.extract_strided_slice %255 {offsets = [0, 0], sizes = [8, 32], strides = [1, 1]} : vector<32x32xf32> to vector<8x32xf32>
    %cst_122 = arith.constant dense<0.000000e+00> : vector<8x32xf32>
    %282 = tpu.matmul %280, %281, %cst_122 {dimension_numbers = #tpu.dot_dimension_numbers<[1], [0], [0], [1], [0, 0, 1, 1], [], []>} : vector<8x8xf32>, vector<8x32xf32>, vector<8x32xf32> -> vector<8x32xf32>
    %283 = arith.addf %264, %282 : vector<8x32xf32>
    %284 = vector.extract_strided_slice %261 {offsets = [0, 8], sizes = [8, 8], strides = [1, 1]} : vector<8x32xf32> to vector<8x8xf32>
    %285 = vector.extract_strided_slice %262 {offsets = [0, 8], sizes = [8, 8], strides = [1, 1]} : vector<8x32xf32> to vector<8x8xf32>
    %286 = vector.extract_strided_slice %263 {offsets = [0, 8], sizes = [8, 8], strides = [1, 1]} : vector<8x32xf32> to vector<8x8xf32>
    %cst_123 = arith.constant dense<0.000000e+00> : vector<8x8xf32>
    %287 = tpu.matmul %284, %285, %cst_123 {dimension_numbers = #tpu.dot_dimension_numbers<[1], [1], [0], [0], [0, 0, 1, 0], [], []>} : vector<8x8xf32>, vector<8x8xf32>, vector<8x8xf32> -> vector<8x8xf32>
    %cst_124 = arith.constant 0.353553385 : f32
    %288 = vector.broadcast %cst_124 : f32 to vector<8x8xf32>
    %289 = arith.mulf %287, %288 : vector<8x8xf32>
    %cst_125 = arith.constant dense<0xFF800000> : vector<8xf32>
    %290 = vector.multi_reduction <maximumf>, %289, %cst_125 [1] : vector<8x8xf32> to vector<8xf32>
    %291 = vector.shape_cast %290 : vector<8xf32> to vector<8x1xf32>
    %292 = vector.broadcast %291 : vector<8x1xf32> to vector<8x8xf32>
    %293 = arith.subf %289, %292 : vector<8x8xf32>
    %294 = math.exp %293 : vector<8x8xf32>
    %cst_126 = arith.constant dense<0.000000e+00> : vector<8xf32>
    %295 = vector.multi_reduction <add>, %294, %cst_126 [1] : vector<8x8xf32> to vector<8xf32>
    %296 = vector.shape_cast %295 : vector<8xf32> to vector<8x1xf32>
    %297 = vector.broadcast %296 : vector<8x1xf32> to vector<8x8xf32>
    %298 = arith.divf %294, %297 : vector<8x8xf32>
    %cst_127 = arith.constant dense<0.000000e+00> : vector<8x8xf32>
    %299 = tpu.matmul %298, %286, %cst_127 {dimension_numbers = #tpu.dot_dimension_numbers<[1], [0], [0], [1], [0, 0, 1, 1], [], []>} : vector<8x8xf32>, vector<8x8xf32>, vector<8x8xf32> -> vector<8x8xf32>
    %300 = vector.extract_strided_slice %255 {offsets = [8, 0], sizes = [8, 32], strides = [1, 1]} : vector<32x32xf32> to vector<8x32xf32>
    %cst_128 = arith.constant dense<0.000000e+00> : vector<8x32xf32>
    %301 = tpu.matmul %299, %300, %cst_128 {dimension_numbers = #tpu.dot_dimension_numbers<[1], [0], [0], [1], [0, 0, 1, 1], [], []>} : vector<8x8xf32>, vector<8x32xf32>, vector<8x32xf32> -> vector<8x32xf32>
    %302 = arith.addf %283, %301 : vector<8x32xf32>
    %303 = vector.extract_strided_slice %261 {offsets = [0, 16], sizes = [8, 8], strides = [1, 1]} : vector<8x32xf32> to vector<8x8xf32>
    %304 = vector.extract_strided_slice %262 {offsets = [0, 16], sizes = [8, 8], strides = [1, 1]} : vector<8x32xf32> to vector<8x8xf32>
    %305 = vector.extract_strided_slice %263 {offsets = [0, 16], sizes = [8, 8], strides = [1, 1]} : vector<8x32xf32> to vector<8x8xf32>
    %cst_129 = arith.constant dense<0.000000e+00> : vector<8x8xf32>
    %306 = tpu.matmul %303, %304, %cst_129 {dimension_numbers = #tpu.dot_dimension_numbers<[1], [1], [0], [0], [0, 0, 1, 0], [], []>} : vector<8x8xf32>, vector<8x8xf32>, vector<8x8xf32> -> vector<8x8xf32>
    %cst_130 = arith.constant 0.353553385 : f32
    %307 = vector.broadcast %cst_130 : f32 to vector<8x8xf32>
    %308 = arith.mulf %306, %307 : vector<8x8xf32>
    %cst_131 = arith.constant dense<0xFF800000> : vector<8xf32>
    %309 = vector.multi_reduction <maximumf>, %308, %cst_131 [1] : vector<8x8xf32> to vector<8xf32>
    %310 = vector.shape_cast %309 : vector<8xf32> to vector<8x1xf32>
    %311 = vector.broadcast %310 : vector<8x1xf32> to vector<8x8xf32>
    %312 = arith.subf %308, %311 : vector<8x8xf32>
    %313 = math.exp %312 : vector<8x8xf32>
    %cst_132 = arith.constant dense<0.000000e+00> : vector<8xf32>
    %314 = vector.multi_reduction <add>, %313, %cst_132 [1] : vector<8x8xf32> to vector<8xf32>
    %315 = vector.shape_cast %314 : vector<8xf32> to vector<8x1xf32>
    %316 = vector.broadcast %315 : vector<8x1xf32> to vector<8x8xf32>
    %317 = arith.divf %313, %316 : vector<8x8xf32>
    %cst_133 = arith.constant dense<0.000000e+00> : vector<8x8xf32>
    %318 = tpu.matmul %317, %305, %cst_133 {dimension_numbers = #tpu.dot_dimension_numbers<[1], [0], [0], [1], [0, 0, 1, 1], [], []>} : vector<8x8xf32>, vector<8x8xf32>, vector<8x8xf32> -> vector<8x8xf32>
    %319 = vector.extract_strided_slice %255 {offsets = [16, 0], sizes = [8, 32], strides = [1, 1]} : vector<32x32xf32> to vector<8x32xf32>
    %cst_134 = arith.constant dense<0.000000e+00> : vector<8x32xf32>
    %320 = tpu.matmul %318, %319, %cst_134 {dimension_numbers = #tpu.dot_dimension_numbers<[1], [0], [0], [1], [0, 0, 1, 1], [], []>} : vector<8x8xf32>, vector<8x32xf32>, vector<8x32xf32> -> vector<8x32xf32>
    %321 = arith.addf %302, %320 : vector<8x32xf32>
    %322 = vector.extract_strided_slice %261 {offsets = [0, 24], sizes = [8, 8], strides = [1, 1]} : vector<8x32xf32> to vector<8x8xf32>
    %323 = vector.extract_strided_slice %262 {offsets = [0, 24], sizes = [8, 8], strides = [1, 1]} : vector<8x32xf32> to vector<8x8xf32>
    %324 = vector.extract_strided_slice %263 {offsets = [0, 24], sizes = [8, 8], strides = [1, 1]} : vector<8x32xf32> to vector<8x8xf32>
    %cst_135 = arith.constant dense<0.000000e+00> : vector<8x8xf32>
    %325 = tpu.matmul %322, %323, %cst_135 {dimension_numbers = #tpu.dot_dimension_numbers<[1], [1], [0], [0], [0, 0, 1, 0], [], []>} : vector<8x8xf32>, vector<8x8xf32>, vector<8x8xf32> -> vector<8x8xf32>
    %cst_136 = arith.constant 0.353553385 : f32
    %326 = vector.broadcast %cst_136 : f32 to vector<8x8xf32>
    %327 = arith.mulf %325, %326 : vector<8x8xf32>
    %cst_137 = arith.constant dense<0xFF800000> : vector<8xf32>
    %328 = vector.multi_reduction <maximumf>, %327, %cst_137 [1] : vector<8x8xf32> to vector<8xf32>
    %329 = vector.shape_cast %328 : vector<8xf32> to vector<8x1xf32>
    %330 = vector.broadcast %329 : vector<8x1xf32> to vector<8x8xf32>
    %331 = arith.subf %327, %330 : vector<8x8xf32>
    %332 = math.exp %331 : vector<8x8xf32>
    %cst_138 = arith.constant dense<0.000000e+00> : vector<8xf32>
    %333 = vector.multi_reduction <add>, %332, %cst_138 [1] : vector<8x8xf32> to vector<8xf32>
    %334 = vector.shape_cast %333 : vector<8xf32> to vector<8x1xf32>
    %335 = vector.broadcast %334 : vector<8x1xf32> to vector<8x8xf32>
    %336 = arith.divf %332, %335 : vector<8x8xf32>
    %cst_139 = arith.constant dense<0.000000e+00> : vector<8x8xf32>
    %337 = tpu.matmul %336, %324, %cst_139 {dimension_numbers = #tpu.dot_dimension_numbers<[1], [0], [0], [1], [0, 0, 1, 1], [], []>} : vector<8x8xf32>, vector<8x8xf32>, vector<8x8xf32> -> vector<8x8xf32>
    %338 = vector.extract_strided_slice %255 {offsets = [24, 0], sizes = [8, 32], strides = [1, 1]} : vector<32x32xf32> to vector<8x32xf32>
    %cst_140 = arith.constant dense<0.000000e+00> : vector<8x32xf32>
    %339 = tpu.matmul %337, %338, %cst_140 {dimension_numbers = #tpu.dot_dimension_numbers<[1], [0], [0], [1], [0, 0, 1, 1], [], []>} : vector<8x8xf32>, vector<8x32xf32>, vector<8x32xf32> -> vector<8x32xf32>
    %340 = arith.addf %321, %339 : vector<8x32xf32>
    %341 = vector.extract_strided_slice %260 {offsets = [8, 0], sizes = [8, 32], strides = [1, 1]} : vector<16x96xf32> to vector<8x32xf32>
    %342 = vector.extract_strided_slice %260 {offsets = [8, 32], sizes = [8, 32], strides = [1, 1]} : vector<16x96xf32> to vector<8x32xf32>
    %343 = vector.extract_strided_slice %260 {offsets = [8, 64], sizes = [8, 32], strides = [1, 1]} : vector<16x96xf32> to vector<8x32xf32>
    %cst_141 = arith.constant 0.000000e+00 : f32
    %344 = vector.broadcast %cst_141 : f32 to vector<8x32xf32>
    %345 = vector.extract_strided_slice %341 {offsets = [0, 0], sizes = [8, 8], strides = [1, 1]} : vector<8x32xf32> to vector<8x8xf32>
    %346 = vector.extract_strided_slice %342 {offsets = [0, 0], sizes = [8, 8], strides = [1, 1]} : vector<8x32xf32> to vector<8x8xf32>
    %347 = vector.extract_strided_slice %343 {offsets = [0, 0], sizes = [8, 8], strides = [1, 1]} : vector<8x32xf32> to vector<8x8xf32>
    %cst_142 = arith.constant dense<0.000000e+00> : vector<8x8xf32>
    %348 = tpu.matmul %345, %346, %cst_142 {dimension_numbers = #tpu.dot_dimension_numbers<[1], [1], [0], [0], [0, 0, 1, 0], [], []>} : vector<8x8xf32>, vector<8x8xf32>, vector<8x8xf32> -> vector<8x8xf32>
    %cst_143 = arith.constant 0.353553385 : f32
    %349 = vector.broadcast %cst_143 : f32 to vector<8x8xf32>
    %350 = arith.mulf %348, %349 : vector<8x8xf32>
    %cst_144 = arith.constant dense<0xFF800000> : vector<8xf32>
    %351 = vector.multi_reduction <maximumf>, %350, %cst_144 [1] : vector<8x8xf32> to vector<8xf32>
    %352 = vector.shape_cast %351 : vector<8xf32> to vector<8x1xf32>
    %353 = vector.broadcast %352 : vector<8x1xf32> to vector<8x8xf32>
    %354 = arith.subf %350, %353 : vector<8x8xf32>
    %355 = math.exp %354 : vector<8x8xf32>
    %cst_145 = arith.constant dense<0.000000e+00> : vector<8xf32>
    %356 = vector.multi_reduction <add>, %355, %cst_145 [1] : vector<8x8xf32> to vector<8xf32>
    %357 = vector.shape_cast %356 : vector<8xf32> to vector<8x1xf32>
    %358 = vector.broadcast %357 : vector<8x1xf32> to vector<8x8xf32>
    %359 = arith.divf %355, %358 : vector<8x8xf32>
    %cst_146 = arith.constant dense<0.000000e+00> : vector<8x8xf32>
    %360 = tpu.matmul %359, %347, %cst_146 {dimension_numbers = #tpu.dot_dimension_numbers<[1], [0], [0], [1], [0, 0, 1, 1], [], []>} : vector<8x8xf32>, vector<8x8xf32>, vector<8x8xf32> -> vector<8x8xf32>
    %361 = vector.extract_strided_slice %255 {offsets = [0, 0], sizes = [8, 32], strides = [1, 1]} : vector<32x32xf32> to vector<8x32xf32>
    %cst_147 = arith.constant dense<0.000000e+00> : vector<8x32xf32>
    %362 = tpu.matmul %360, %361, %cst_147 {dimension_numbers = #tpu.dot_dimension_numbers<[1], [0], [0], [1], [0, 0, 1, 1], [], []>} : vector<8x8xf32>, vector<8x32xf32>, vector<8x32xf32> -> vector<8x32xf32>
    %363 = arith.addf %344, %362 : vector<8x32xf32>
    %364 = vector.extract_strided_slice %341 {offsets = [0, 8], sizes = [8, 8], strides = [1, 1]} : vector<8x32xf32> to vector<8x8xf32>
    %365 = vector.extract_strided_slice %342 {offsets = [0, 8], sizes = [8, 8], strides = [1, 1]} : vector<8x32xf32> to vector<8x8xf32>
    %366 = vector.extract_strided_slice %343 {offsets = [0, 8], sizes = [8, 8], strides = [1, 1]} : vector<8x32xf32> to vector<8x8xf32>
    %cst_148 = arith.constant dense<0.000000e+00> : vector<8x8xf32>
    %367 = tpu.matmul %364, %365, %cst_148 {dimension_numbers = #tpu.dot_dimension_numbers<[1], [1], [0], [0], [0, 0, 1, 0], [], []>} : vector<8x8xf32>, vector<8x8xf32>, vector<8x8xf32> -> vector<8x8xf32>
    %cst_149 = arith.constant 0.353553385 : f32
    %368 = vector.broadcast %cst_149 : f32 to vector<8x8xf32>
    %369 = arith.mulf %367, %368 : vector<8x8xf32>
    %cst_150 = arith.constant dense<0xFF800000> : vector<8xf32>
    %370 = vector.multi_reduction <maximumf>, %369, %cst_150 [1] : vector<8x8xf32> to vector<8xf32>
    %371 = vector.shape_cast %370 : vector<8xf32> to vector<8x1xf32>
    %372 = vector.broadcast %371 : vector<8x1xf32> to vector<8x8xf32>
    %373 = arith.subf %369, %372 : vector<8x8xf32>
    %374 = math.exp %373 : vector<8x8xf32>
    %cst_151 = arith.constant dense<0.000000e+00> : vector<8xf32>
    %375 = vector.multi_reduction <add>, %374, %cst_151 [1] : vector<8x8xf32> to vector<8xf32>
    %376 = vector.shape_cast %375 : vector<8xf32> to vector<8x1xf32>
    %377 = vector.broadcast %376 : vector<8x1xf32> to vector<8x8xf32>
    %378 = arith.divf %374, %377 : vector<8x8xf32>
    %cst_152 = arith.constant dense<0.000000e+00> : vector<8x8xf32>
    %379 = tpu.matmul %378, %366, %cst_152 {dimension_numbers = #tpu.dot_dimension_numbers<[1], [0], [0], [1], [0, 0, 1, 1], [], []>} : vector<8x8xf32>, vector<8x8xf32>, vector<8x8xf32> -> vector<8x8xf32>
    %380 = vector.extract_strided_slice %255 {offsets = [8, 0], sizes = [8, 32], strides = [1, 1]} : vector<32x32xf32> to vector<8x32xf32>
    %cst_153 = arith.constant dense<0.000000e+00> : vector<8x32xf32>
    %381 = tpu.matmul %379, %380, %cst_153 {dimension_numbers = #tpu.dot_dimension_numbers<[1], [0], [0], [1], [0, 0, 1, 1], [], []>} : vector<8x8xf32>, vector<8x32xf32>, vector<8x32xf32> -> vector<8x32xf32>
    %382 = arith.addf %363, %381 : vector<8x32xf32>
    %383 = vector.extract_strided_slice %341 {offsets = [0, 16], sizes = [8, 8], strides = [1, 1]} : vector<8x32xf32> to vector<8x8xf32>
    %384 = vector.extract_strided_slice %342 {offsets = [0, 16], sizes = [8, 8], strides = [1, 1]} : vector<8x32xf32> to vector<8x8xf32>
    %385 = vector.extract_strided_slice %343 {offsets = [0, 16], sizes = [8, 8], strides = [1, 1]} : vector<8x32xf32> to vector<8x8xf32>
    %cst_154 = arith.constant dense<0.000000e+00> : vector<8x8xf32>
    %386 = tpu.matmul %383, %384, %cst_154 {dimension_numbers = #tpu.dot_dimension_numbers<[1], [1], [0], [0], [0, 0, 1, 0], [], []>} : vector<8x8xf32>, vector<8x8xf32>, vector<8x8xf32> -> vector<8x8xf32>
    %cst_155 = arith.constant 0.353553385 : f32
    %387 = vector.broadcast %cst_155 : f32 to vector<8x8xf32>
    %388 = arith.mulf %386, %387 : vector<8x8xf32>
    %cst_156 = arith.constant dense<0xFF800000> : vector<8xf32>
    %389 = vector.multi_reduction <maximumf>, %388, %cst_156 [1] : vector<8x8xf32> to vector<8xf32>
    %390 = vector.shape_cast %389 : vector<8xf32> to vector<8x1xf32>
    %391 = vector.broadcast %390 : vector<8x1xf32> to vector<8x8xf32>
    %392 = arith.subf %388, %391 : vector<8x8xf32>
    %393 = math.exp %392 : vector<8x8xf32>
    %cst_157 = arith.constant dense<0.000000e+00> : vector<8xf32>
    %394 = vector.multi_reduction <add>, %393, %cst_157 [1] : vector<8x8xf32> to vector<8xf32>
    %395 = vector.shape_cast %394 : vector<8xf32> to vector<8x1xf32>
    %396 = vector.broadcast %395 : vector<8x1xf32> to vector<8x8xf32>
    %397 = arith.divf %393, %396 : vector<8x8xf32>
    %cst_158 = arith.constant dense<0.000000e+00> : vector<8x8xf32>
    %398 = tpu.matmul %397, %385, %cst_158 {dimension_numbers = #tpu.dot_dimension_numbers<[1], [0], [0], [1], [0, 0, 1, 1], [], []>} : vector<8x8xf32>, vector<8x8xf32>, vector<8x8xf32> -> vector<8x8xf32>
    %399 = vector.extract_strided_slice %255 {offsets = [16, 0], sizes = [8, 32], strides = [1, 1]} : vector<32x32xf32> to vector<8x32xf32>
    %cst_159 = arith.constant dense<0.000000e+00> : vector<8x32xf32>
    %400 = tpu.matmul %398, %399, %cst_159 {dimension_numbers = #tpu.dot_dimension_numbers<[1], [0], [0], [1], [0, 0, 1, 1], [], []>} : vector<8x8xf32>, vector<8x32xf32>, vector<8x32xf32> -> vector<8x32xf32>
    %401 = arith.addf %382, %400 : vector<8x32xf32>
    %402 = vector.extract_strided_slice %341 {offsets = [0, 24], sizes = [8, 8], strides = [1, 1]} : vector<8x32xf32> to vector<8x8xf32>
    %403 = vector.extract_strided_slice %342 {offsets = [0, 24], sizes = [8, 8], strides = [1, 1]} : vector<8x32xf32> to vector<8x8xf32>
    %404 = vector.extract_strided_slice %343 {offsets = [0, 24], sizes = [8, 8], strides = [1, 1]} : vector<8x32xf32> to vector<8x8xf32>
    %cst_160 = arith.constant dense<0.000000e+00> : vector<8x8xf32>
    %405 = tpu.matmul %402, %403, %cst_160 {dimension_numbers = #tpu.dot_dimension_numbers<[1], [1], [0], [0], [0, 0, 1, 0], [], []>} : vector<8x8xf32>, vector<8x8xf32>, vector<8x8xf32> -> vector<8x8xf32>
    %cst_161 = arith.constant 0.353553385 : f32
    %406 = vector.broadcast %cst_161 : f32 to vector<8x8xf32>
    %407 = arith.mulf %405, %406 : vector<8x8xf32>
    %cst_162 = arith.constant dense<0xFF800000> : vector<8xf32>
    %408 = vector.multi_reduction <maximumf>, %407, %cst_162 [1] : vector<8x8xf32> to vector<8xf32>
    %409 = vector.shape_cast %408 : vector<8xf32> to vector<8x1xf32>
    %410 = vector.broadcast %409 : vector<8x1xf32> to vector<8x8xf32>
    %411 = arith.subf %407, %410 : vector<8x8xf32>
    %412 = math.exp %411 : vector<8x8xf32>
    %cst_163 = arith.constant dense<0.000000e+00> : vector<8xf32>
    %413 = vector.multi_reduction <add>, %412, %cst_163 [1] : vector<8x8xf32> to vector<8xf32>
    %414 = vector.shape_cast %413 : vector<8xf32> to vector<8x1xf32>
    %415 = vector.broadcast %414 : vector<8x1xf32> to vector<8x8xf32>
    %416 = arith.divf %412, %415 : vector<8x8xf32>
    %cst_164 = arith.constant dense<0.000000e+00> : vector<8x8xf32>
    %417 = tpu.matmul %416, %404, %cst_164 {dimension_numbers = #tpu.dot_dimension_numbers<[1], [0], [0], [1], [0, 0, 1, 1], [], []>} : vector<8x8xf32>, vector<8x8xf32>, vector<8x8xf32> -> vector<8x8xf32>
    %418 = vector.extract_strided_slice %255 {offsets = [24, 0], sizes = [8, 32], strides = [1, 1]} : vector<32x32xf32> to vector<8x32xf32>
    %cst_165 = arith.constant dense<0.000000e+00> : vector<8x32xf32>
    %419 = tpu.matmul %417, %418, %cst_165 {dimension_numbers = #tpu.dot_dimension_numbers<[1], [0], [0], [1], [0, 0, 1, 1], [], []>} : vector<8x8xf32>, vector<8x32xf32>, vector<8x32xf32> -> vector<8x32xf32>
    %420 = arith.addf %401, %419 : vector<8x32xf32>
    %421 = tpu.concatenate %340, %420 in 0 : vector<8x32xf32>, vector<8x32xf32> -> vector<16x32xf32>
    %c1_166 = arith.constant 1 : index
    %c0_167 = arith.constant 0 : index
    %c0_168 = arith.constant 0 : index
    %422 = vector.load %arg8[%c1_166, %c0_167, %c0_168] : memref<2x1x32xf32, #tpu.memory_space<vmem>>, vector<1x1x32xf32>
    %423 = vector.shape_cast %422 : vector<1x1x32xf32> to vector<1x32xf32>
    %424 = vector.broadcast %423 : vector<1x32xf32> to vector<16x32xf32>
    %425 = arith.addf %421, %424 : vector<16x32xf32>
    %426 = arith.addf %251, %425 : vector<16x32xf32>
    %c1_169 = arith.constant 1 : index
    %c0_170 = arith.constant 0 : index
    %c0_171 = arith.constant 0 : index
    %427 = vector.load %arg9[%c1_169, %c0_170, %c0_171] : memref<2x1x32xf32, #tpu.memory_space<vmem>>, vector<1x1x32xf32>
    %428 = vector.shape_cast %427 : vector<1x1x32xf32> to vector<1x32xf32>
    %c1_172 = arith.constant 1 : index
    %c0_173 = arith.constant 0 : index
    %c0_174 = arith.constant 0 : index
    %429 = vector.load %arg10[%c1_172, %c0_173, %c0_174] : memref<2x1x32xf32, #tpu.memory_space<vmem>>, vector<1x1x32xf32>
    %430 = vector.shape_cast %429 : vector<1x1x32xf32> to vector<1x32xf32>
    %cst_175 = arith.constant dense<0.000000e+00> : vector<16xf32>
    %431 = vector.multi_reduction <add>, %426, %cst_175 [1] : vector<16x32xf32> to vector<16xf32>
    %432 = vector.shape_cast %431 : vector<16xf32> to vector<16x1xf32>
    %cst_176 = arith.constant 3.200000e+01 : f32
    %433 = vector.broadcast %cst_176 : f32 to vector<16x1xf32>
    %434 = arith.divf %432, %433 : vector<16x1xf32>
    %435 = vector.broadcast %434 : vector<16x1xf32> to vector<16x32xf32>
    %436 = arith.subf %426, %435 : vector<16x32xf32>
    %437 = arith.mulf %436, %436 : vector<16x32xf32>
    %cst_177 = arith.constant dense<0.000000e+00> : vector<16xf32>
    %438 = vector.multi_reduction <add>, %437, %cst_177 [1] : vector<16x32xf32> to vector<16xf32>
    %439 = vector.shape_cast %438 : vector<16xf32> to vector<16x1xf32>
    %cst_178 = arith.constant 3.200000e+01 : f32
    %440 = vector.broadcast %cst_178 : f32 to vector<16x1xf32>
    %441 = arith.divf %439, %440 : vector<16x1xf32>
    %442 = vector.broadcast %434 : vector<16x1xf32> to vector<16x32xf32>
    %443 = arith.subf %426, %442 : vector<16x32xf32>
    %cst_179 = arith.constant 9.99999974E-6 : f32
    %444 = vector.broadcast %cst_179 : f32 to vector<16x1xf32>
    %445 = arith.addf %441, %444 : vector<16x1xf32>
    %446 = math.rsqrt %445 : vector<16x1xf32>
    %447 = vector.broadcast %446 : vector<16x1xf32> to vector<16x32xf32>
    %448 = arith.mulf %443, %447 : vector<16x32xf32>
    %449 = vector.broadcast %428 : vector<1x32xf32> to vector<16x32xf32>
    %450 = arith.mulf %448, %449 : vector<16x32xf32>
    %451 = vector.broadcast %430 : vector<1x32xf32> to vector<16x32xf32>
    %452 = arith.addf %450, %451 : vector<16x32xf32>
    %c1_180 = arith.constant 1 : index
    %c0_181 = arith.constant 0 : index
    %c0_182 = arith.constant 0 : index
    %453 = vector.load %arg11[%c1_180, %c0_181, %c0_182] : memref<2x32x64xf32, #tpu.memory_space<vmem>>, vector<1x32x64xf32>
    %454 = vector.shape_cast %453 : vector<1x32x64xf32> to vector<32x64xf32>
    %cst_183 = arith.constant dense<0.000000e+00> : vector<16x64xf32>
    %455 = tpu.matmul %452, %454, %cst_183 {dimension_numbers = #tpu.dot_dimension_numbers<[1], [0], [0], [1], [0, 0, 1, 1], [], []>} : vector<16x32xf32>, vector<32x64xf32>, vector<16x64xf32> -> vector<16x64xf32>
    %c1_184 = arith.constant 1 : index
    %c0_185 = arith.constant 0 : index
    %c0_186 = arith.constant 0 : index
    %456 = vector.load %arg12[%c1_184, %c0_185, %c0_186] : memref<2x1x64xf32, #tpu.memory_space<vmem>>, vector<1x1x64xf32>
    %457 = vector.shape_cast %456 : vector<1x1x64xf32> to vector<1x64xf32>
    %458 = vector.broadcast %457 : vector<1x64xf32> to vector<16x64xf32>
    %459 = arith.addf %455, %458 : vector<16x64xf32>
    %cst_187 = arith.constant 0.000000e+00 : f32
    %460 = vector.broadcast %cst_187 : f32 to vector<16x64xf32>
    %461 = arith.maximumf %459, %460 : vector<16x64xf32>
    %c1_188 = arith.constant 1 : index
    %c0_189 = arith.constant 0 : index
    %c0_190 = arith.constant 0 : index
    %462 = vector.load %arg13[%c1_188, %c0_189, %c0_190] : memref<2x64x32xf32, #tpu.memory_space<vmem>>, vector<1x64x32xf32>
    %463 = vector.shape_cast %462 : vector<1x64x32xf32> to vector<64x32xf32>
    %cst_191 = arith.constant dense<0.000000e+00> : vector<16x32xf32>
    %464 = tpu.matmul %461, %463, %cst_191 {dimension_numbers = #tpu.dot_dimension_numbers<[1], [0], [0], [1], [0, 0, 1, 1], [], []>} : vector<16x64xf32>, vector<64x32xf32>, vector<16x32xf32> -> vector<16x32xf32>
    %c1_192 = arith.constant 1 : index
    %c0_193 = arith.constant 0 : index
    %c0_194 = arith.constant 0 : index
    %465 = vector.load %arg14[%c1_192, %c0_193, %c0_194] : memref<2x1x32xf32, #tpu.memory_space<vmem>>, vector<1x1x32xf32>
    %466 = vector.shape_cast %465 : vector<1x1x32xf32> to vector<1x32xf32>
    %467 = vector.broadcast %466 : vector<1x32xf32> to vector<16x32xf32>
    %468 = arith.addf %464, %467 : vector<16x32xf32>
    %469 = arith.addf %452, %468 : vector<16x32xf32>
    %c1_195 = arith.constant 1 : index
    %c0_196 = arith.constant 0 : index
    %c0_197 = arith.constant 0 : index
    %470 = vector.load %arg15[%c1_195, %c0_196, %c0_197] : memref<2x1x32xf32, #tpu.memory_space<vmem>>, vector<1x1x32xf32>
    %471 = vector.shape_cast %470 : vector<1x1x32xf32> to vector<1x32xf32>
    %c1_198 = arith.constant 1 : index
    %c0_199 = arith.constant 0 : index
    %c0_200 = arith.constant 0 : index
    %472 = vector.load %arg16[%c1_198, %c0_199, %c0_200] : memref<2x1x32xf32, #tpu.memory_space<vmem>>, vector<1x1x32xf32>
    %473 = vector.shape_cast %472 : vector<1x1x32xf32> to vector<1x32xf32>
    %cst_201 = arith.constant dense<0.000000e+00> : vector<16xf32>
    %474 = vector.multi_reduction <add>, %469, %cst_201 [1] : vector<16x32xf32> to vector<16xf32>
    %475 = vector.shape_cast %474 : vector<16xf32> to vector<16x1xf32>
    %cst_202 = arith.constant 3.200000e+01 : f32
    %476 = vector.broadcast %cst_202 : f32 to vector<16x1xf32>
    %477 = arith.divf %475, %476 : vector<16x1xf32>
    %478 = vector.broadcast %477 : vector<16x1xf32> to vector<16x32xf32>
    %479 = arith.subf %469, %478 : vector<16x32xf32>
    %480 = arith.mulf %479, %479 : vector<16x32xf32>
    %cst_203 = arith.constant dense<0.000000e+00> : vector<16xf32>
    %481 = vector.multi_reduction <add>, %480, %cst_203 [1] : vector<16x32xf32> to vector<16xf32>
    %482 = vector.shape_cast %481 : vector<16xf32> to vector<16x1xf32>
    %cst_204 = arith.constant 3.200000e+01 : f32
    %483 = vector.broadcast %cst_204 : f32 to vector<16x1xf32>
    %484 = arith.divf %482, %483 : vector<16x1xf32>
    %485 = vector.broadcast %477 : vector<16x1xf32> to vector<16x32xf32>
    %486 = arith.subf %469, %485 : vector<16x32xf32>
    %cst_205 = arith.constant 9.99999974E-6 : f32
    %487 = vector.broadcast %cst_205 : f32 to vector<16x1xf32>
    %488 = arith.addf %484, %487 : vector<16x1xf32>
    %489 = math.rsqrt %488 : vector<16x1xf32>
    %490 = vector.broadcast %489 : vector<16x1xf32> to vector<16x32xf32>
    %491 = arith.mulf %486, %490 : vector<16x32xf32>
    %492 = vector.broadcast %471 : vector<1x32xf32> to vector<16x32xf32>
    %493 = arith.mulf %491, %492 : vector<16x32xf32>
    %494 = vector.broadcast %473 : vector<1x32xf32> to vector<16x32xf32>
    %495 = arith.addf %493, %494 : vector<16x32xf32>
    %c0_206 = arith.constant 0 : index
    %c0_207 = arith.constant 0 : index
    %496 = vector.load %arg4[%c0_206, %c0_207] : memref<2x16xf32, #tpu.memory_space<vmem>>, vector<2x16xf32>
    %cst_208 = arith.constant dense<0.000000e+00> : vector<2x32xf32>
    %497 = tpu.matmul %496, %495, %cst_208 {dimension_numbers = #tpu.dot_dimension_numbers<[1], [0], [0], [1], [0, 0, 1, 1], [], []>} : vector<2x16xf32>, vector<16x32xf32>, vector<2x32xf32> -> vector<2x32xf32>
    %c0_209 = arith.constant 0 : index
    %c0_210 = arith.constant 0 : index
    %498 = vector.load %arg17[%c0_209, %c0_210] : memref<32x4xf32, #tpu.memory_space<vmem>>, vector<32x4xf32>
    %cst_211 = arith.constant dense<0.000000e+00> : vector<2x4xf32>
    %499 = tpu.matmul %497, %498, %cst_211 {dimension_numbers = #tpu.dot_dimension_numbers<[1], [0], [0], [1], [0, 0, 1, 1], [], []>} : vector<2x32xf32>, vector<32x4xf32>, vector<2x4xf32> -> vector<2x4xf32>
    %c0_212 = arith.constant 0 : index
    %c0_213 = arith.constant 0 : index
    %500 = vector.load %arg18[%c0_212, %c0_213] : memref<1x4xf32, #tpu.memory_space<vmem>>, vector<1x4xf32>
    %501 = vector.broadcast %500 : vector<1x4xf32> to vector<2x4xf32>
    %502 = arith.addf %499, %501 : vector<2x4xf32>
    %c0_214 = arith.constant 0 : index
    %c0_215 = arith.constant 0 : index
    %503 = vector.load %arg19[%c0_214, %c0_215] : memref<2x4xf32, #tpu.memory_space<vmem>>, vector<2x4xf32>
    tpu.vector_store %arg19[%c0_214, %c0_215], %502 {strides = array<i32>} : memref<2x4xf32, #tpu.memory_space<vmem>>, vector<2x4xf32>,
    return
  }
}

</mosaic_0001>

<llo_original>
// kernel: transformer_forward.1
$region0: #{transformer_forward.1}
  #allocation0 [shape = 'u32[]', space=smem, size = 0x4, offset = 0x4, fixed_abs, tag = 'smem constant byte address 0x4 - core index']
  #allocation1 [shape = 'u32[144,128]{1,0:T(1,128)}', space=vmem, size = 0x12000, scoped, tag = 'internal scratch']
  %s0 = inlined_call_operand.vmem [shape: f32[16,16], index: 0, kind: input, shape index: {}]
  %s1 = inlined_call_operand.vmem [shape: f32[16,32], index: 1, kind: input, shape index: {}]
  %s2 = inlined_call_operand.vmem [shape: f32[1,32], index: 2, kind: input, shape index: {}]
  %s3 = inlined_call_operand.vmem [shape: f32[16,32], index: 3, kind: input, shape index: {}]
  %s4 = inlined_call_operand.vmem [shape: f32[2,16], index: 4, kind: input, shape index: {}]
  %s5 = inlined_call_operand.vmem [shape: f32[2,32,96], index: 5, kind: input, shape index: {}]
  %s6 = inlined_call_operand.vmem [shape: f32[2,1,96], index: 6, kind: input, shape index: {}]
  %s7 = inlined_call_operand.vmem [shape: f32[2,32,32], index: 7, kind: input, shape index: {}]
  %s8 = inlined_call_operand.vmem [shape: f32[2,1,32], index: 8, kind: input, shape index: {}]
  %s9 = inlined_call_operand.vmem [shape: f32[2,1,32], index: 9, kind: input, shape index: {}]
  %s10 = inlined_call_operand.vmem [shape: f32[2,1,32], index: 10, kind: input, shape index: {}]
  %s11 = inlined_call_operand.vmem [shape: f32[2,32,64], index: 11, kind: input, shape index: {}]
  %s12 = inlined_call_operand.vmem [shape: f32[2,1,64], index: 12, kind: input, shape index: {}]
  %s13 = inlined_call_operand.vmem [shape: f32[2,64,32], index: 13, kind: input, shape index: {}]
  %s14 = inlined_call_operand.vmem [shape: f32[2,1,32], index: 14, kind: input, shape index: {}]
  %s15 = inlined_call_operand.vmem [shape: f32[2,1,32], index: 15, kind: input, shape index: {}]
  %s16 = inlined_call_operand.vmem [shape: f32[2,1,32], index: 16, kind: input, shape index: {}]
  %s17 = inlined_call_operand.vmem [shape: f32[32,4], index: 17, kind: input, shape index: {}]
  %s18 = inlined_call_operand.vmem [shape: f32[1,4], index: 18, kind: input, shape index: {}]
  %s19 = inlined_call_operand.hbm [shape: f32[2,4], index: 19, kind: output, shape index: {}]
  %s20 = sld [smem:[#allocation0]]
  $region86: #{transformer_forward.1} parent=0
    _
  %s22 = ssub.s32 1, %s20
  %s23 = scalar_select 0, %s22, %s20
  $region1: #{transformer_forward.1} parent=0
    #allocation2 [shape = 'u8[1024]{0}', space=vmem, size = 0x400, scoped, tag = 'output window, operand 0, single buffered']
    #allocation3 [shape = 's32[1]{0}', space=sflag, size = 0x4, scoped, tag = 'scoped memory for transformer_forward.1']
    %24 = vsyncpa [#allocation3], 0
    // Predicated region
    $region2: #{transformer_forward.1} parent=1 // pred_check
      _
    $region3: #{transformer_forward.1} parent=1 // pred_check_branch
      %26 = sbr.rel (0) target = $region5
    $region4: #{transformer_forward.1} parent=1 // pred_region
      _
    $region5: #{transformer_forward.1} parent=1 // pred_fallthru
      _
    // Predicated region
    $region6: #{transformer_forward.1} parent=1 // pred_check
      _
    $region7: #{transformer_forward.1} parent=1 // pred_check_branch
      %28 = sbr.rel (0) target = $region9
    $region8: #{transformer_forward.1} parent=1 // pred_region
      _
    $region9: #{transformer_forward.1} parent=1 // pred_fallthru
      _
    // Predicated region
    $region10: #{transformer_forward.1} parent=1 // pred_check
      _
    $region11: #{transformer_forward.1} parent=1 // pred_check_branch
      %30 = sbr.rel (0) target = $region13
    $region12: #{transformer_forward.1} parent=1 // pred_region
      _
    $region13: #{transformer_forward.1} parent=1 // pred_fallthru
      _
    // Predicated region
    $region14: #{transformer_forward.1} parent=1 // pred_check
      _
    $region15: #{transformer_forward.1} parent=1 // pred_check_branch
      %32 = sbr.rel (0) target = $region17
    $region16: #{transformer_forward.1} parent=1 // pred_region
      _
    $region17: #{transformer_forward.1} parent=1 // pred_fallthru
      _
    // Predicated region
    $region18: #{transformer_forward.1} parent=1 // pred_check
      _
    $region19: #{transformer_forward.1} parent=1 // pred_check_branch
      %34 = sbr.rel (0) target = $region21
    $region20: #{transformer_forward.1} parent=1 // pred_region
      _
    $region21: #{transformer_forward.1} parent=1 // pred_fallthru
      _
    // Predicated region
    $region22: #{transformer_forward.1} parent=1 // pred_check
      _
    $region23: #{transformer_forward.1} parent=1 // pred_check_branch
      %36 = sbr.rel (0) target = $region25
    $region24: #{transformer_forward.1} parent=1 // pred_region
      _
    $region25: #{transformer_forward.1} parent=1 // pred_fallthru
      _
    // Predicated region
    $region26: #{transformer_forward.1} parent=1 // pred_check
      _
    $region27: #{transformer_forward.1} parent=1 // pred_check_branch
      %38 = sbr.rel (0) target = $region29
    $region28: #{transformer_forward.1} parent=1 // pred_region
      _
    $region29: #{transformer_forward.1} parent=1 // pred_fallthru
      _
    // Predicated region
    $region30: #{transformer_forward.1} parent=1 // pred_check
      _
    $region31: #{transformer_forward.1} parent=1 // pred_check_branch
      %40 = sbr.rel (0) target = $region33
    $region32: #{transformer_forward.1} parent=1 // pred_region
      _
    $region33: #{transformer_forward.1} parent=1 // pred_fallthru
      _
    // Predicated region
    $region34: #{transformer_forward.1} parent=1 // pred_check
      _
    $region35: #{transformer_forward.1} parent=1 // pred_check_branch
      %42 = sbr.rel (0) target = $region37
    $region36: #{transformer_forward.1} parent=1 // pred_region
      _
    $region37: #{transformer_forward.1} parent=1 // pred_fallthru
      _
    // Predicated region
    $region38: #{transformer_forward.1} parent=1 // pred_check
      _
    $region39: #{transformer_forward.1} parent=1 // pred_check_branch
      %44 = sbr.rel (0) target = $region41
    $region40: #{transformer_forward.1} parent=1 // pred_region
      _
    $region41: #{transformer_forward.1} parent=1 // pred_fallthru
      _
    // Predicated region
    $region42: #{transformer_forward.1} parent=1 // pred_check
      _
    $region43: #{transformer_forward.1} parent=1 // pred_check_branch
      %46 = sbr.rel (0) target = $region45
    $region44: #{transformer_forward.1} parent=1 // pred_region
      _
    $region45: #{transformer_forward.1} parent=1 // pred_fallthru
      _
    // Predicated region
    $region46: #{transformer_forward.1} parent=1 // pred_check
      _
    $region47: #{transformer_forward.1} parent=1 // pred_check_branch
      %48 = sbr.rel (0) target = $region49
    $region48: #{transformer_forward.1} parent=1 // pred_region
      _
    $region49: #{transformer_forward.1} parent=1 // pred_fallthru
      _
    // Predicated region
    $region50: #{transformer_forward.1} parent=1 // pred_check
      _
    $region51: #{transformer_forward.1} parent=1 // pred_check_branch
      %50 = sbr.rel (0) target = $region53
    $region52: #{transformer_forward.1} parent=1 // pred_region
      _
    $region53: #{transformer_forward.1} parent=1 // pred_fallthru
      _
    // Predicated region
    $region54: #{transformer_forward.1} parent=1 // pred_check
      _
    $region55: #{transformer_forward.1} parent=1 // pred_check_branch
      %52 = sbr.rel (0) target = $region57
    $region56: #{transformer_forward.1} parent=1 // pred_region
      _
    $region57: #{transformer_forward.1} parent=1 // pred_fallthru
      _
    // Predicated region
    $region58: #{transformer_forward.1} parent=1 // pred_check
      _
    $region59: #{transformer_forward.1} parent=1 // pred_check_branch
      %54 = sbr.rel (0) target = $region61
    $region60: #{transformer_forward.1} parent=1 // pred_region
      _
    $region61: #{transformer_forward.1} parent=1 // pred_fallthru
      _
    // Predicated region
    $region62: #{transformer_forward.1} parent=1 // pred_check
      _
    $region63: #{transformer_forward.1} parent=1 // pred_check_branch
      %56 = sbr.rel (0) target = $region65
    $region64: #{transformer_forward.1} parent=1 // pred_region
      _
    $region65: #{transformer_forward.1} parent=1 // pred_fallthru
      _
    // Predicated region
    $region66: #{transformer_forward.1} parent=1 // pred_check
      _
    $region67: #{transformer_forward.1} parent=1 // pred_check_branch
      %58 = sbr.rel (0) target = $region69
    $region68: #{transformer_forward.1} parent=1 // pred_region
      _
    $region69: #{transformer_forward.1} parent=1 // pred_fallthru
      _
    // Predicated region
    $region70: #{transformer_forward.1} parent=1 // pred_check
      _
    $region71: #{transformer_forward.1} parent=1 // pred_check_branch
      %60 = sbr.rel (0) target = $region73
    $region72: #{transformer_forward.1} parent=1 // pred_region
      _
    $region73: #{transformer_forward.1} parent=1 // pred_fallthru
      _
    // Predicated region
    $region74: #{transformer_forward.1} parent=1 // pred_check
      _
    $region75: #{transformer_forward.1} parent=1 // pred_check_branch
      %62 = sbr.rel (0) target = $region77
    $region76: #{transformer_forward.1} parent=1 // pred_region
      _
    $region77: #{transformer_forward.1} parent=1 // pred_fallthru
      _
    %v63 = vld [vmem:[%s0] sm:$0xff]
    %v64 = vld [vmem:[%s0 + $0x8] sm:$0xff]
    %v65 = vld [vmem:[%s1] sm:$0xff]
    %v66 = vld [vmem:[%s1 + $0x8] sm:$0xff]
    %v67 = vld [vmem:[%s2] sm:$0x1]
    %v69 = vlaneseq
    %v70 = vshrl.u32 %v69, 7
    %v71 = vsub.s32 0, %v70
    %v72 = vrot.slane %v67, %v71
    %vm74 = vcmask 130048
    %v76 = vsel %vm74, %v63, 0
    %v79 = vsel %vm74, %v64, 0
    %81 = vmatprep.subr.mxu0 0.0
    %82 = vmatpush1.msra.mxu0 %v65
    %83 = vmatprep.subr.mxu0 0.0
    %84 = vmatpush1.msra.mxu0 %v66
    %85 = vmatprep.subr.mxu0 0.0
    %86 = vmatpush1.msra.mxu0 0.0
    %87 = vmatprep.subr.mxu0 0.0
    %88 = vmatpush1.msra.mxu0 0.0
    %89 = vmatprep.subr.mxu0 0.0
    %90 = vmatpush1.msra.mxu0 0.0
    %91 = vmatprep.subr.mxu0 0.0
    %92 = vmatpush1.msra.mxu0 0.0
    %93 = vmatprep.subr.mxu0 0.0
    %94 = vmatpush1.msra.mxu0 0.0
    %95 = vmatprep.subr.mxu0 0.0
    %96 = vmatpush1.msra.mxu0 0.0
    %97 = vmatprep.subr.mxu0 0.0
    %98 = vmatpush1.msra.mxu0 0.0
    %99 = vmatprep.subr.mxu0 0.0
    %100 = vmatpush1.msra.mxu0 0.0
    %101 = vmatprep.subr.mxu0 0.0
    %102 = vmatpush1.msra.mxu0 0.0
    %103 = vmatprep.subr.mxu0 0.0
    %104 = vmatpush1.msra.mxu0 0.0
    %105 = vmatprep.subr.mxu0 0.0
    %106 = vmatpush1.msra.mxu0 0.0
    %107 = vmatprep.subr.mxu0 0.0
    %108 = vmatpush1.msra.mxu0 0.0
    %109 = vmatprep.subr.mxu0 0.0
    %110 = vmatpush1.msra.mxu0 0.0
    %111 = vmatprep.subr.mxu0 0.0
    %112 = vmatpush1.msra.mxu0 0.0
    %113 = vmatprep.subr.mxu0 0.0
    %114 = vmatpush1.msra.mxu0 0.0
    %115 = vmatprep.subr.mxu0 0.0
    %116 = vmatpush1.msra.mxu0 0.0
    %117 = vmatprep.subr.mxu0 0.0
    %118 = vmatpush1.msra.mxu0 0.0
    %119 = vmatprep.subr.mxu0 0.0
    %120 = vmatpush1.msra.mxu0 0.0
    %121 = vmatprep.subr.mxu0 0.0
    %122 = vmatpush1.msra.mxu0 0.0
    %123 = vmatprep.subr.mxu0 0.0
    %124 = vmatpush1.msra.mxu0 0.0
    %125 = vmatprep.subr.mxu0 0.0
    %126 = vmatpush1.msra.mxu0 0.0
    %127 = vmatprep.subr.mxu0 0.0
    %128 = vmatpush1.msra.mxu0 0.0
    %129 = vmatprep.subr.mxu0 0.0
    %130 = vmatpush1.msra.mxu0 0.0
    %131 = vmatprep.subr.mxu0 0.0
    %132 = vmatpush1.msra.mxu0 0.0
    %133 = vmatprep.subr.mxu0 0.0
    %134 = vmatpush1.msra.mxu0 0.0
    %135 = vmatprep.subr.mxu0 0.0
    %136 = vmatpush1.msra.mxu0 0.0
    %137 = vmatprep.subr.mxu0 0.0
    %138 = vmatpush1.msra.mxu0 0.0
    %139 = vmatprep.subr.mxu0 0.0
    %140 = vmatpush1.msra.mxu0 0.0
    %141 = vmatprep.subr.mxu0 0.0
    %142 = vmatpush1.msra.mxu0 0.0
    %143 = vmatprep.subr.mxu0 0.0
    %144 = vmatpush1.msra.mxu0 0.0
    %145 = vmatprep.mubr.f32.mxu0 0.0
    %146 = vmatmul.mubr.f32.gmra.mrb[0].mxu0 %v76
    %v147 = vpop.f32.mrb[0].mxu0
    %v148 = vadd.f32 %v72, %v147
    %v149 = vpop.f32.mrb[0].mxu0
    %150 = vmatprep.mubr.f32.mxu0 0.0
    %151 = vmatmul.mubr.f32.gmra.mrb[0].mxu0 %v79
    %v152 = vpop.f32.mrb[0].mxu0
    %v153 = vadd.f32 %v72, %v152
    %v154 = vpop.f32.mrb[0].mxu0
    %155 = vdwg.mxu0
    %v156 = vld [vmem:[%s3] sm:$0xff]
    %v157 = vld [vmem:[%s3 + $0x8] sm:$0xff]
    %v158 = vadd.f32 %v148, %v156
    %v159 = vadd.f32 %v153, %v157
    %v160 = vld [vmem:[%s5] sm:$0xff]
    %v161 = vld [vmem:[%s5 + $0x8] sm:$0xff]
    %v162 = vld [vmem:[%s5 + $0x10] sm:$0xff]
    %v163 = vld [vmem:[%s5 + $0x18] sm:$0xff]
    %v164 = vld [vmem:[%s7] sm:$0xff]
    %v165 = vld [vmem:[%s7 + $0x8] sm:$0xff]
    %v166 = vld [vmem:[%s7 + $0x10] sm:$0xff]
    %v167 = vld [vmem:[%s7 + $0x18] sm:$0xff]
    %v168 = vld [vmem:[%s6] sm:$0x1]
    %v170 = vlaneseq
    %v171 = vshrl.u32 %v170, 7
    %v172 = vsub.s32 0, %v171
    %v173 = vrot.slane %v168, %v172
    %vm175 = vcmask 261120
    %v177 = vsel %vm175, %v158, 0
    %v180 = vsel %vm175, %v159, 0
    %182 = vmatprep.subr.mxu0 0.0
    %183 = vmatpush1.msra.mxu0 %v160
    %184 = vmatprep.subr.mxu0 0.0
    %185 = vmatpush1.msra.mxu0 %v161
    %186 = vmatprep.subr.mxu0 0.0
    %187 = vmatpush1.msra.mxu0 %v162
    %188 = vmatprep.subr.mxu0 0.0
    %189 = vmatpush1.msra.mxu0 %v163
    %190 = vmatprep.subr.mxu0 0.0
    %191 = vmatpush1.msra.mxu0 0.0
    %192 = vmatprep.subr.mxu0 0.0
    %193 = vmatpush1.msra.mxu0 0.0
    %194 = vmatprep.subr.mxu0 0.0
    %195 = vmatpush1.msra.mxu0 0.0
    %196 = vmatprep.subr.mxu0 0.0
    %197 = vmatpush1.msra.mxu0 0.0
    %198 = vmatprep.subr.mxu0 0.0
    %199 = vmatpush1.msra.mxu0 0.0
    %200 = vmatprep.subr.mxu0 0.0
    %201 = vmatpush1.msra.mxu0 0.0
    %202 = vmatprep.subr.mxu0 0.0
    %203 = vmatpush1.msra.mxu0 0.0
    %204 = vmatprep.subr.mxu0 0.0
    %205 = vmatpush1.msra.mxu0 0.0
    %206 = vmatprep.subr.mxu0 0.0
    %207 = vmatpush1.msra.mxu0 0.0
    %208 = vmatprep.subr.mxu0 0.0
    %209 = vmatpush1.msra.mxu0 0.0
    %210 = vmatprep.subr.mxu0 0.0
    %211 = vmatpush1.msra.mxu0 0.0
    %212 = vmatprep.subr.mxu0 0.0
    %213 = vmatpush1.msra.mxu0 0.0
    %214 = vmatprep.subr.mxu0 0.0
    %215 = vmatpush1.msra.mxu0 0.0
    %216 = vmatprep.subr.mxu0 0.0
    %217 = vmatpush1.msra.mxu0 0.0
    %218 = vmatprep.subr.mxu0 0.0
    %219 = vmatpush1.msra.mxu0 0.0
    %220 = vmatprep.subr.mxu0 0.0
    %221 = vmatpush1.msra.mxu0 0.0
    %222 = vmatprep.subr.mxu0 0.0
    %223 = vmatpush1.msra.mxu0 0.0
    %224 = vmatprep.subr.mxu0 0.0
    %225 = vmatpush1.msra.mxu0 0.0
    %226 = vmatprep.subr.mxu0 0.0
    %227 = vmatpush1.msra.mxu0 0.0
    %228 = vmatprep.subr.mxu0 0.0
    %229 = vmatpush1.msra.mxu0 0.0
    %230 = vmatprep.subr.mxu0 0.0
    %231 = vmatpush1.msra.mxu0 0.0
    %232 = vmatprep.subr.mxu0 0.0
    %233 = vmatpush1.msra.mxu0 0.0
    %234 = vmatprep.subr.mxu0 0.0
    %235 = vmatpush1.msra.mxu0 0.0
    %236 = vmatprep.subr.mxu0 0.0
    %237 = vmatpush1.msra.mxu0 0.0
    %238 = vmatprep.subr.mxu0 0.0
    %239 = vmatpush1.msra.mxu0 0.0
    %240 = vmatprep.subr.mxu0 0.0
    %241 = vmatpush1.msra.mxu0 0.0
    %242 = vmatprep.subr.mxu0 0.0
    %243 = vmatpush1.msra.mxu0 0.0
    %244 = vmatprep.subr.mxu0 0.0
    %245 = vmatpush1.msra.mxu0 0.0
    %246 = vmatprep.mubr.f32.mxu0 0.0
    %247 = vmatmul.mubr.f32.gmra.mrb[0].mxu0 %v177
    %v248 = vpop.f32.mrb[0].mxu0
    %v249 = vadd.f32 %v173, %v248
    %v250 = vpop.f32.mrb[0].mxu0
    %251 = vmatprep.mubr.f32.mxu0 0.0
    %252 = vmatmul.mubr.f32.gmra.mrb[0].mxu0 %v180
    %v253 = vpop.f32.mrb[0].mxu0
    %v254 = vadd.f32 %v173, %v253
    %v255 = vpop.f32.mrb[0].mxu0
    %256 = vdwg.mxu0
    %258 = vrot.lane.b32.xlu0 %v249, 96
    %v259 = vpop.permute.xlu0 %258
    %vm260 = vcmask 64512
    %v261 = vsel %vm260, %v249, 0
    %v263 = vsel %vm260, %v259, 0
    %265 = vmatprep.subr.mxu0 0.0
    %266 = vmatpush1.xpose.msra.mxu0 %v263
    %267 = vmatprep.subr.mxu0 0.0
    %268 = vmatpush1.xpose.msra.mxu0 0.0
    %269 = vmatprep.subr.mxu0 0.0
    %270 = vmatpush1.xpose.msra.mxu0 0.0
    %271 = vmatprep.subr.mxu0 0.0
    %272 = vmatpush1.xpose.msra.mxu0 0.0
    %273 = vmatprep.subr.mxu0 0.0
    %274 = vmatpush1.xpose.msra.mxu0 0.0
    %275 = vmatprep.subr.mxu0 0.0
    %276 = vmatpush1.xpose.msra.mxu0 0.0
    %277 = vmatprep.subr.mxu0 0.0
    %278 = vmatpush1.xpose.msra.mxu0 0.0
    %279 = vmatprep.subr.mxu0 0.0
    %280 = vmatpush1.xpose.msra.mxu0 0.0
    %281 = vmatprep.subr.mxu0 0.0
    %282 = vmatpush1.xpose.msra.mxu0 0.0
    %283 = vmatprep.subr.mxu0 0.0
    %284 = vmatpush1.xpose.msra.mxu0 0.0
    %285 = vmatprep.subr.mxu0 0.0
    %286 = vmatpush1.xpose.msra.mxu0 0.0
    %287 = vmatprep.subr.mxu0 0.0
    %288 = vmatpush1.xpose.msra.mxu0 0.0
    %289 = vmatprep.subr.mxu0 0.0
    %290 = vmatpush1.xpose.msra.mxu0 0.0
    %291 = vmatprep.subr.mxu0 0.0
    %292 = vmatpush1.xpose.msra.mxu0 0.0
    %293 = vmatprep.subr.mxu0 0.0
    %294 = vmatpush1.xpose.msra.mxu0 0.0
    %295 = vmatprep.subr.mxu0 0.0
    %296 = vmatpush1.xpose.msra.mxu0 0.0
    %297 = vmatprep.subr.mxu0 0.0
    %298 = vmatpush1.xpose.msra.mxu0 0.0
    %299 = vmatprep.subr.mxu0 0.0
    %300 = vmatpush1.xpose.msra.mxu0 0.0
    %301 = vmatprep.subr.mxu0 0.0
    %302 = vmatpush1.xpose.msra.mxu0 0.0
    %303 = vmatprep.subr.mxu0 0.0
    %304 = vmatpush1.xpose.msra.mxu0 0.0
    %305 = vmatprep.subr.mxu0 0.0
    %306 = vmatpush1.xpose.msra.mxu0 0.0
    %307 = vmatprep.subr.mxu0 0.0
    %308 = vmatpush1.xpose.msra.mxu0 0.0
    %309 = vmatprep.subr.mxu0 0.0
    %310 = vmatpush1.xpose.msra.mxu0 0.0
    %311 = vmatprep.subr.mxu0 0.0
    %312 = vmatpush1.xpose.msra.mxu0 0.0
    %313 = vmatprep.subr.mxu0 0.0
    %314 = vmatpush1.xpose.msra.mxu0 0.0
    %315 = vmatprep.subr.mxu0 0.0
    %316 = vmatpush1.xpose.msra.mxu0 0.0
    %317 = vmatprep.subr.mxu0 0.0
    %318 = vmatpush1.xpose.msra.mxu0 0.0
    %319 = vmatprep.subr.mxu0 0.0
    %320 = vmatpush1.xpose.msra.mxu0 0.0
    %321 = vmatprep.subr.mxu0 0.0
    %322 = vmatpush1.xpose.msra.mxu0 0.0
    %323 = vmatprep.subr.mxu0 0.0
    %324 = vmatpush1.xpose.msra.mxu0 0.0
    %325 = vmatprep.subr.mxu0 0.0
    %326 = vmatpush1.xpose.msra.mxu0 0.0
    %327 = vmatprep.subr.mxu0 0.0
    %328 = vmatpush1.xpose.msra.mxu0 0.0
    %329 = vmatprep.mubr.f32.mxu0 0.0
    %330 = vmatmul.mubr.f32.gmra.mrb[0].mxu0 %v261
    %v331 = vpop.f32.mrb[0].mxu0
    %v332 = vadd.f32 0.0, %v331
    %v333 = vpop.f32.mrb[0].mxu0
    %334 = vdwg.mxu0
    %v335 = vmul.f32 %v332, 0.35355338
    %v336 = vsel %vm260, %v335, -inf
    %337 = vmax.xlane.f32.xlu0 %v336
    %v338 = vpop.xlane.xlu0 %337
    %v339 = vsub.f32 %v335, %v338
    %v340 = vmul.f32 %v339, 1.442695
    %v341 = vpow.pop %v340
    %v342 = vsel %vm260, %v341, 0.0
    %343 = vadd.xlane.f32.xlu0 %v342
    %v344 = vpop.xlane.xlu0 %343
    %v345 = vrcp.pop %v344
    %v346 = vmul.f32 %v341, %v345
    %347 = vrot.lane.b32.xlu0 %v249, 64
    %v348 = vpop.permute.xlu0 %347
    %v351 = vsel %vm260, %v346, 0
    %353 = vmatprep.subr.mxu0 0.0
    %354 = vmatpush1.msra.mxu0 %v348
    %355 = vmatprep.subr.mxu0 0.0
    %356 = vmatpush1.msra.mxu0 0.0
    %357 = vmatprep.subr.mxu0 0.0
    %358 = vmatpush1.msra.mxu0 0.0
    %359 = vmatprep.subr.mxu0 0.0
    %360 = vmatpush1.msra.mxu0 0.0
    %361 = vmatprep.subr.mxu0 0.0
    %362 = vmatpush1.msra.mxu0 0.0
    %363 = vmatprep.subr.mxu0 0.0
    %364 = vmatpush1.msra.mxu0 0.0
    %365 = vmatprep.subr.mxu0 0.0
    %366 = vmatpush1.msra.mxu0 0.0
    %367 = vmatprep.subr.mxu0 0.0
    %368 = vmatpush1.msra.mxu0 0.0
    %369 = vmatprep.subr.mxu0 0.0
    %370 = vmatpush1.msra.mxu0 0.0
    %371 = vmatprep.subr.mxu0 0.0
    %372 = vmatpush1.msra.mxu0 0.0
    %373 = vmatprep.subr.mxu0 0.0
    %374 = vmatpush1.msra.mxu0 0.0
    %375 = vmatprep.subr.mxu0 0.0
    %376 = vmatpush1.msra.mxu0 0.0
    %377 = vmatprep.subr.mxu0 0.0
    %378 = vmatpush1.msra.mxu0 0.0
    %379 = vmatprep.subr.mxu0 0.0
    %380 = vmatpush1.msra.mxu0 0.0
    %381 = vmatprep.subr.mxu0 0.0
    %382 = vmatpush1.msra.mxu0 0.0
    %383 = vmatprep.subr.mxu0 0.0
    %384 = vmatpush1.msra.mxu0 0.0
    %385 = vmatprep.subr.mxu0 0.0
    %386 = vmatpush1.msra.mxu0 0.0
    %387 = vmatprep.subr.mxu0 0.0
    %388 = vmatpush1.msra.mxu0 0.0
    %389 = vmatprep.subr.mxu0 0.0
    %390 = vmatpush1.msra.mxu0 0.0
    %391 = vmatprep.subr.mxu0 0.0
    %392 = vmatpush1.msra.mxu0 0.0
    %393 = vmatprep.subr.mxu0 0.0
    %394 = vmatpush1.msra.mxu0 0.0
    %395 = vmatprep.subr.mxu0 0.0
    %396 = vmatpush1.msra.mxu0 0.0
    %397 = vmatprep.subr.mxu0 0.0
    %398 = vmatpush1.msra.mxu0 0.0
    %399 = vmatprep.subr.mxu0 0.0
    %400 = vmatpush1.msra.mxu0 0.0
    %401 = vmatprep.subr.mxu0 0.0
    %402 = vmatpush1.msra.mxu0 0.0
    %403 = vmatprep.subr.mxu0 0.0
    %404 = vmatpush1.msra.mxu0 0.0
    %405 = vmatprep.subr.mxu0 0.0
    %406 = vmatpush1.msra.mxu0 0.0
    %407 = vmatprep.subr.mxu0 0.0
    %408 = vmatpush1.msra.mxu0 0.0
    %409 = vmatprep.subr.mxu0 0.0
    %410 = vmatpush1.msra.mxu0 0.0
    %411 = vmatprep.subr.mxu0 0.0
    %412 = vmatpush1.msra.mxu0 0.0
    %413 = vmatprep.subr.mxu0 0.0
    %414 = vmatpush1.msra.mxu0 0.0
    %415 = vmatprep.subr.mxu0 0.0
    %416 = vmatpush1.msra.mxu0 0.0
    %417 = vmatprep.mubr.f32.mxu0 0.0
    %418 = vmatmul.mubr.f32.gmra.mrb[0].mxu0 %v351
    %v419 = vpop.f32.mrb[0].mxu0
    %v420 = vadd.f32 0.0, %v419
    %v421 = vpop.f32.mrb[0].mxu0
    %422 = vdwg.mxu0
    %423 = vrot.lane.b32.xlu0 %v249, 120
    %v424 = vpop.permute.xlu0 %423
    %425 = vrot.lane.b32.xlu0 %v249, 88
    %v426 = vpop.permute.xlu0 %425
    %v427 = vsel %vm260, %v424, 0
    %v429 = vsel %vm260, %v426, 0
    %431 = vmatprep.subr.mxu0 0.0
    %432 = vmatpush1.xpose.msra.mxu0 %v429
    %433 = vmatprep.subr.mxu0 0.0
    %434 = vmatpush1.xpose.msra.mxu0 0.0
    %435 = vmatprep.subr.mxu0 0.0
    %436 = vmatpush1.xpose.msra.mxu0 0.0
    %437 = vmatprep.subr.mxu0 0.0
    %438 = vmatpush1.xpose.msra.mxu0 0.0
    %439 = vmatprep.subr.mxu0 0.0
    %440 = vmatpush1.xpose.msra.mxu0 0.0
    %441 = vmatprep.subr.mxu0 0.0
    %442 = vmatpush1.xpose.msra.mxu0 0.0
    %443 = vmatprep.subr.mxu0 0.0
    %444 = vmatpush1.xpose.msra.mxu0 0.0
    %445 = vmatprep.subr.mxu0 0.0
    %446 = vmatpush1.xpose.msra.mxu0 0.0
    %447 = vmatprep.subr.mxu0 0.0
    %448 = vmatpush1.xpose.msra.mxu0 0.0
    %449 = vmatprep.subr.mxu0 0.0
    %450 = vmatpush1.xpose.msra.mxu0 0.0
    %451 = vmatprep.subr.mxu0 0.0
    %452 = vmatpush1.xpose.msra.mxu0 0.0
    %453 = vmatprep.subr.mxu0 0.0
    %454 = vmatpush1.xpose.msra.mxu0 0.0
    %455 = vmatprep.subr.mxu0 0.0
    %456 = vmatpush1.xpose.msra.mxu0 0.0
    %457 = vmatprep.subr.mxu0 0.0
    %458 = vmatpush1.xpose.msra.mxu0 0.0
    %459 = vmatprep.subr.mxu0 0.0
    %460 = vmatpush1.xpose.msra.mxu0 0.0
    %461 = vmatprep.subr.mxu0 0.0
    %462 = vmatpush1.xpose.msra.mxu0 0.0
    %463 = vmatprep.subr.mxu0 0.0
    %464 = vmatpush1.xpose.msra.mxu0 0.0
    %465 = vmatprep.subr.mxu0 0.0
    %466 = vmatpush1.xpose.msra.mxu0 0.0
    %467 = vmatprep.subr.mxu0 0.0
    %468 = vmatpush1.xpose.msra.mxu0 0.0
    %469 = vmatprep.subr.mxu0 0.0
    %470 = vmatpush1.xpose.msra.mxu0 0.0
    %471 = vmatprep.subr.mxu0 0.0
    %472 = vmatpush1.xpose.msra.mxu0 0.0
    %473 = vmatprep.subr.mxu0 0.0
    %474 = vmatpush1.xpose.msra.mxu0 0.0
    %475 = vmatprep.subr.mxu0 0.0
    %476 = vmatpush1.xpose.msra.mxu0 0.0
    %477 = vmatprep.subr.mxu0 0.0
    %478 = vmatpush1.xpose.msra.mxu0 0.0
    %479 = vmatprep.subr.mxu0 0.0
    %480 = vmatpush1.xpose.msra.mxu0 0.0
    %481 = vmatprep.subr.mxu0 0.0
    %482 = vmatpush1.xpose.msra.mxu0 0.0
    %483 = vmatprep.subr.mxu0 0.0
    %484 = vmatpush1.xpose.msra.mxu0 0.0
    %485 = vmatprep.subr.mxu0 0.0
    %486 = vmatpush1.xpose.msra.mxu0 0.0
    %487 = vmatprep.subr.mxu0 0.0
    %488 = vmatpush1.xpose.msra.mxu0 0.0
    %489 = vmatprep.subr.mxu0 0.0
    %490 = vmatpush1.xpose.msra.mxu0 0.0
    %491 = vmatprep.subr.mxu0 0.0
    %492 = vmatpush1.xpose.msra.mxu0 0.0
    %493 = vmatprep.subr.mxu0 0.0
    %494 = vmatpush1.xpose.msra.mxu0 0.0
    %495 = vmatprep.mubr.f32.mxu0 0.0
    %496 = vmatmul.mubr.f32.gmra.mrb[0].mxu0 %v427
    %v497 = vpop.f32.mrb[0].mxu0
    %v498 = vadd.f32 0.0, %v497
    %v499 = vpop.f32.mrb[0].mxu0
    %500 = vdwg.mxu0
    %v501 = vmul.f32 %v498, 0.35355338
    %v502 = vsel %vm260, %v501, -inf
    %503 = vmax.xlane.f32.xlu0 %v502
    %v504 = vpop.xlane.xlu0 %503
    %v505 = vsub.f32 %v501, %v504
    %v506 = vmul.f32 %v505, 1.442695
    %v507 = vpow.pop %v506
    %v508 = vsel %vm260, %v507, 0.0
    %509 = vadd.xlane.f32.xlu0 %v508
    %v510 = vpop.xlane.xlu0 %509
    %v511 = vrcp.pop %v510
    %v512 = vmul.f32 %v507, %v511
    %513 = vrot.lane.b32.xlu0 %v249, 56
    %v514 = vpop.permute.xlu0 %513
    %v517 = vsel %vm260, %v512, 0
    %519 = vmatprep.subr.mxu0 0.0
    %520 = vmatpush1.msra.mxu0 %v514
    %521 = vmatprep.subr.mxu0 0.0
    %522 = vmatpush1.msra.mxu0 0.0
    %523 = vmatprep.subr.mxu0 0.0
    %524 = vmatpush1.msra.mxu0 0.0
    %525 = vmatprep.subr.mxu0 0.0
    %526 = vmatpush1.msra.mxu0 0.0
    %527 = vmatprep.subr.mxu0 0.0
    %528 = vmatpush1.msra.mxu0 0.0
    %529 = vmatprep.subr.mxu0 0.0
    %530 = vmatpush1.msra.mxu0 0.0
    %531 = vmatprep.subr.mxu0 0.0
    %532 = vmatpush1.msra.mxu0 0.0
    %533 = vmatprep.subr.mxu0 0.0
    %534 = vmatpush1.msra.mxu0 0.0
    %535 = vmatprep.subr.mxu0 0.0
    %536 = vmatpush1.msra.mxu0 0.0
    %537 = vmatprep.subr.mxu0 0.0
    %538 = vmatpush1.msra.mxu0 0.0
    %539 = vmatprep.subr.mxu0 0.0
    %540 = vmatpush1.msra.mxu0 0.0
    %541 = vmatprep.subr.mxu0 0.0
    %542 = vmatpush1.msra.mxu0 0.0
    %543 = vmatprep.subr.mxu0 0.0
    %544 = vmatpush1.msra.mxu0 0.0
    %545 = vmatprep.subr.mxu0 0.0
    %546 = vmatpush1.msra.mxu0 0.0
    %547 = vmatprep.subr.mxu0 0.0
    %548 = vmatpush1.msra.mxu0 0.0
    %549 = vmatprep.subr.mxu0 0.0
    %550 = vmatpush1.msra.mxu0 0.0
    %551 = vmatprep.subr.mxu0 0.0
    %552 = vmatpush1.msra.mxu0 0.0
    %553 = vmatprep.subr.mxu0 0.0
    %554 = vmatpush1.msra.mxu0 0.0
    %555 = vmatprep.subr.mxu0 0.0
    %556 = vmatpush1.msra.mxu0 0.0
    %557 = vmatprep.subr.mxu0 0.0
    %558 = vmatpush1.msra.mxu0 0.0
    %559 = vmatprep.subr.mxu0 0.0
    %560 = vmatpush1.msra.mxu0 0.0
    %561 = vmatprep.subr.mxu0 0.0
    %562 = vmatpush1.msra.mxu0 0.0
    %563 = vmatprep.subr.mxu0 0.0
    %564 = vmatpush1.msra.mxu0 0.0
    %565 = vmatprep.subr.mxu0 0.0
    %566 = vmatpush1.msra.mxu0 0.0
    %567 = vmatprep.subr.mxu0 0.0
    %568 = vmatpush1.msra.mxu0 0.0
    %569 = vmatprep.subr.mxu0 0.0
    %570 = vmatpush1.msra.mxu0 0.0
    %571 = vmatprep.subr.mxu0 0.0
    %572 = vmatpush1.msra.mxu0 0.0
    %573 = vmatprep.subr.mxu0 0.0
    %574 = vmatpush1.msra.mxu0 0.0
    %575 = vmatprep.subr.mxu0 0.0
    %576 = vmatpush1.msra.mxu0 0.0
    %577 = vmatprep.subr.mxu0 0.0
    %578 = vmatpush1.msra.mxu0 0.0
    %579 = vmatprep.subr.mxu0 0.0
    %580 = vmatpush1.msra.mxu0 0.0
    %581 = vmatprep.subr.mxu0 0.0
    %582 = vmatpush1.msra.mxu0 0.0
    %583 = vmatprep.mubr.f32.mxu0 0.0
    %584 = vmatmul.mubr.f32.gmra.mrb[0].mxu0 %v517
    %v585 = vpop.f32.mrb[0].mxu0
    %v586 = vadd.f32 0.0, %v585
    %v587 = vpop.f32.mrb[0].mxu0
    %588 = vdwg.mxu0
    %v590 = vsel %vm260, %v586, 0
    %592 = vmatprep.subr.mxu0 0.0
    %593 = vmatpush1.msra.mxu0 %v165
    %594 = vmatprep.subr.mxu0 0.0
    %595 = vmatpush1.msra.mxu0 0.0
    %596 = vmatprep.subr.mxu0 0.0
    %597 = vmatpush1.msra.mxu0 0.0
    %598 = vmatprep.subr.mxu0 0.0
    %599 = vmatpush1.msra.mxu0 0.0
    %600 = vmatprep.subr.mxu0 0.0
    %601 = vmatpush1.msra.mxu0 0.0
    %602 = vmatprep.subr.mxu0 0.0
    %603 = vmatpush1.msra.mxu0 0.0
    %604 = vmatprep.subr.mxu0 0.0
    %605 = vmatpush1.msra.mxu0 0.0
    %606 = vmatprep.subr.mxu0 0.0
    %607 = vmatpush1.msra.mxu0 0.0
    %608 = vmatprep.subr.mxu0 0.0
    %609 = vmatpush1.msra.mxu0 0.0
    %610 = vmatprep.subr.mxu0 0.0
    %611 = vmatpush1.msra.mxu0 0.0
    %612 = vmatprep.subr.mxu0 0.0
    %613 = vmatpush1.msra.mxu0 0.0
    %614 = vmatprep.subr.mxu0 0.0
    %615 = vmatpush1.msra.mxu0 0.0
    %616 = vmatprep.subr.mxu0 0.0
    %617 = vmatpush1.msra.mxu0 0.0
    %618 = vmatprep.subr.mxu0 0.0
    %619 = vmatpush1.msra.mxu0 0.0
    %620 = vmatprep.subr.mxu0 0.0
    %621 = vmatpush1.msra.mxu0 0.0
    %622 = vmatprep.subr.mxu0 0.0
    %623 = vmatpush1.msra.mxu0 0.0
    %624 = vmatprep.subr.mxu0 0.0
    %625 = vmatpush1.msra.mxu0 0.0
    %626 = vmatprep.subr.mxu0 0.0
    %627 = vmatpush1.msra.mxu0 0.0
    %628 = vmatprep.subr.mxu0 0.0
    %629 = vmatpush1.msra.mxu0 0.0
    %630 = vmatprep.subr.mxu0 0.0
    %631 = vmatpush1.msra.mxu0 0.0
    %632 = vmatprep.subr.mxu0 0.0
    %633 = vmatpush1.msra.mxu0 0.0
    %634 = vmatprep.subr.mxu0 0.0
    %635 = vmatpush1.msra.mxu0 0.0
    %636 = vmatprep.subr.mxu0 0.0
    %637 = vmatpush1.msra.mxu0 0.0
    %638 = vmatprep.subr.mxu0 0.0
    %639 = vmatpush1.msra.mxu0 0.0
    %640 = vmatprep.subr.mxu0 0.0
    %641 = vmatpush1.msra.mxu0 0.0
    %642 = vmatprep.subr.mxu0 0.0
    %643 = vmatpush1.msra.mxu0 0.0
    %644 = vmatprep.subr.mxu0 0.0
    %645 = vmatpush1.msra.mxu0 0.0
    %646 = vmatprep.subr.mxu0 0.0
    %647 = vmatpush1.msra.mxu0 0.0
    %648 = vmatprep.subr.mxu0 0.0
    %649 = vmatpush1.msra.mxu0 0.0
    %650 = vmatprep.subr.mxu0 0.0
    %651 = vmatpush1.msra.mxu0 0.0
    %652 = vmatprep.subr.mxu0 0.0
    %653 = vmatpush1.msra.mxu0 0.0
    %654 = vmatprep.subr.mxu0 0.0
    %655 = vmatpush1.msra.mxu0 0.0
    %656 = vmatprep.mubr.f32.mxu0 0.0
    %657 = vmatmul.mubr.f32.gmra.mrb[0].mxu0 %v590
    %v658 = vpop.f32.mrb[0].mxu0
    %v659 = vadd.f32 0.0, %v658
    %v660 = vpop.f32.mrb[0].mxu0
    %661 = vdwg.mxu0
    %v663 = vsel %vm260, %v420, 0
    %665 = vmatprep.subr.mxu0 0.0
    %666 = vmatpush1.msra.mxu0 %v164
    %667 = vmatprep.subr.mxu0 0.0
    %668 = vmatpush1.msra.mxu0 0.0
    %669 = vmatprep.subr.mxu0 0.0
    %670 = vmatpush1.msra.mxu0 0.0
    %671 = vmatprep.subr.mxu0 0.0
    %672 = vmatpush1.msra.mxu0 0.0
    %673 = vmatprep.subr.mxu0 0.0
    %674 = vmatpush1.msra.mxu0 0.0
    %675 = vmatprep.subr.mxu0 0.0
    %676 = vmatpush1.msra.mxu0 0.0
    %677 = vmatprep.subr.mxu0 0.0
    %678 = vmatpush1.msra.mxu0 0.0
    %679 = vmatprep.subr.mxu0 0.0
    %680 = vmatpush1.msra.mxu0 0.0
    %681 = vmatprep.subr.mxu0 0.0
    %682 = vmatpush1.msra.mxu0 0.0
    %683 = vmatprep.subr.mxu0 0.0
    %684 = vmatpush1.msra.mxu0 0.0
    %685 = vmatprep.subr.mxu0 0.0
    %686 = vmatpush1.msra.mxu0 0.0
    %687 = vmatprep.subr.mxu0 0.0
    %688 = vmatpush1.msra.mxu0 0.0
    %689 = vmatprep.subr.mxu0 0.0
    %690 = vmatpush1.msra.mxu0 0.0
    %691 = vmatprep.subr.mxu0 0.0
    %692 = vmatpush1.msra.mxu0 0.0
    %693 = vmatprep.subr.mxu0 0.0
    %694 = vmatpush1.msra.mxu0 0.0
    %695 = vmatprep.subr.mxu0 0.0
    %696 = vmatpush1.msra.mxu0 0.0
    %697 = vmatprep.subr.mxu0 0.0
    %698 = vmatpush1.msra.mxu0 0.0
    %699 = vmatprep.subr.mxu0 0.0
    %700 = vmatpush1.msra.mxu0 0.0
    %701 = vmatprep.subr.mxu0 0.0
    %702 = vmatpush1.msra.mxu0 0.0
    %703 = vmatprep.subr.mxu0 0.0
    %704 = vmatpush1.msra.mxu0 0.0
    %705 = vmatprep.subr.mxu0 0.0
    %706 = vmatpush1.msra.mxu0 0.0
    %707 = vmatprep.subr.mxu0 0.0
    %708 = vmatpush1.msra.mxu0 0.0
    %709 = vmatprep.subr.mxu0 0.0
    %710 = vmatpush1.msra.mxu0 0.0
    %711 = vmatprep.subr.mxu0 0.0
    %712 = vmatpush1.msra.mxu0 0.0
    %713 = vmatprep.subr.mxu0 0.0
    %714 = vmatpush1.msra.mxu0 0.0
    %715 = vmatprep.subr.mxu0 0.0
    %716 = vmatpush1.msra.mxu0 0.0
    %717 = vmatprep.subr.mxu0 0.0
    %718 = vmatpush1.msra.mxu0 0.0
    %719 = vmatprep.subr.mxu0 0.0
    %720 = vmatpush1.msra.mxu0 0.0
    %721 = vmatprep.subr.mxu0 0.0
    %722 = vmatpush1.msra.mxu0 0.0
    %723 = vmatprep.subr.mxu0 0.0
    %724 = vmatpush1.msra.mxu0 0.0
    %725 = vmatprep.subr.mxu0 0.0
    %726 = vmatpush1.msra.mxu0 0.0
    %727 = vmatprep.subr.mxu0 0.0
    %728 = vmatpush1.msra.mxu0 0.0
    %729 = vmatprep.mubr.f32.mxu0 0.0
    %730 = vmatmul.mubr.f32.gmra.mrb[0].mxu0 %v663
    %v731 = vpop.f32.mrb[0].mxu0
    %v732 = vadd.f32 %v659, %v731
    %v733 = vpop.f32.mrb[0].mxu0
    %734 = vdwg.mxu0
    %735 = vrot.lane.b32.xlu0 %v249, 112
    %v736 = vpop.permute.xlu0 %735
    %737 = vrot.lane.b32.xlu0 %v249, 80
    %v738 = vpop.permute.xlu0 %737
    %v739 = vsel %vm260, %v736, 0
    %v741 = vsel %vm260, %v738, 0
    %743 = vmatprep.subr.mxu0 0.0
    %744 = vmatpush1.xpose.msra.mxu0 %v741
    %745 = vmatprep.subr.mxu0 0.0
    %746 = vmatpush1.xpose.msra.mxu0 0.0
    %747 = vmatprep.subr.mxu0 0.0
    %748 = vmatpush1.xpose.msra.mxu0 0.0
    %749 = vmatprep.subr.mxu0 0.0
    %750 = vmatpush1.xpose.msra.mxu0 0.0
    %751 = vmatprep.subr.mxu0 0.0
    %752 = vmatpush1.xpose.msra.mxu0 0.0
    %753 = vmatprep.subr.mxu0 0.0
    %754 = vmatpush1.xpose.msra.mxu0 0.0
    %755 = vmatprep.subr.mxu0 0.0
    %756 = vmatpush1.xpose.msra.mxu0 0.0
    %757 = vmatprep.subr.mxu0 0.0
    %758 = vmatpush1.xpose.msra.mxu0 0.0
    %759 = vmatprep.subr.mxu0 0.0
    %760 = vmatpush1.xpose.msra.mxu0 0.0
    %761 = vmatprep.subr.mxu0 0.0
    %762 = vmatpush1.xpose.msra.mxu0 0.0
    %763 = vmatprep.subr.mxu0 0.0
    %764 = vmatpush1.xpose.msra.mxu0 0.0
    %765 = vmatprep.subr.mxu0 0.0
    %766 = vmatpush1.xpose.msra.mxu0 0.0
    %767 = vmatprep.subr.mxu0 0.0
    %768 = vmatpush1.xpose.msra.mxu0 0.0
    %769 = vmatprep.subr.mxu0 0.0
    %770 = vmatpush1.xpose.msra.mxu0 0.0
    %771 = vmatprep.subr.mxu0 0.0
    %772 = vmatpush1.xpose.msra.mxu0 0.0
    %773 = vmatprep.subr.mxu0 0.0
    %774 = vmatpush1.xpose.msra.mxu0 0.0
    %775 = vmatprep.subr.mxu0 0.0
    %776 = vmatpush1.xpose.msra.mxu0 0.0
    %777 = vmatprep.subr.mxu0 0.0
    %778 = vmatpush1.xpose.msra.mxu0 0.0
    %779 = vmatprep.subr.mxu0 0.0
    %780 = vmatpush1.xpose.msra.mxu0 0.0
    %781 = vmatprep.subr.mxu0 0.0
    %782 = vmatpush1.xpose.msra.mxu0 0.0
    %783 = vmatprep.subr.mxu0 0.0
    %784 = vmatpush1.xpose.msra.mxu0 0.0
    %785 = vmatprep.subr.mxu0 0.0
    %786 = vmatpush1.xpose.msra.mxu0 0.0
    %787 = vmatprep.subr.mxu0 0.0
    %788 = vmatpush1.xpose.msra.mxu0 0.0
    %789 = vmatprep.subr.mxu0 0.0
    %790 = vmatpush1.xpose.msra.mxu0 0.0
    %791 = vmatprep.subr.mxu0 0.0
    %792 = vmatpush1.xpose.msra.mxu0 0.0
    %793 = vmatprep.subr.mxu0 0.0
    %794 = vmatpush1.xpose.msra.mxu0 0.0
    %795 = vmatprep.subr.mxu0 0.0
    %796 = vmatpush1.xpose.msra.mxu0 0.0
    %797 = vmatprep.subr.mxu0 0.0
    %798 = vmatpush1.xpose.msra.mxu0 0.0
    %799 = vmatprep.subr.mxu0 0.0
    %800 = vmatpush1.xpose.msra.mxu0 0.0
    %801 = vmatprep.subr.mxu0 0.0
    %802 = vmatpush1.xpose.msra.mxu0 0.0
    %803 = vmatprep.subr.mxu0 0.0
    %804 = vmatpush1.xpose.msra.mxu0 0.0
    %805 = vmatprep.subr.mxu0 0.0
    %806 = vmatpush1.xpose.msra.mxu0 0.0
    %807 = vmatprep.mubr.f32.mxu0 0.0
    %808 = vmatmul.mubr.f32.gmra.mrb[0].mxu0 %v739
    %v809 = vpop.f32.mrb[0].mxu0
    %v810 = vadd.f32 0.0, %v809
    %v811 = vpop.f32.mrb[0].mxu0
    %812 = vdwg.mxu0
    %v813 = vmul.f32 %v810, 0.35355338
    %v814 = vsel %vm260, %v813, -inf
    %815 = vmax.xlane.f32.xlu0 %v814
    %v816 = vpop.xlane.xlu0 %815
    %v817 = vsub.f32 %v813, %v816
    %v818 = vmul.f32 %v817, 1.442695
    %v819 = vpow.pop %v818
    %v820 = vsel %vm260, %v819, 0.0
    %821 = vadd.xlane.f32.xlu0 %v820
    %v822 = vpop.xlane.xlu0 %821
    %v823 = vrcp.pop %v822
    %v824 = vmul.f32 %v819, %v823
    %825 = vrot.lane.b32.xlu0 %v249, 48
    %v826 = vpop.permute.xlu0 %825
    %v829 = vsel %vm260, %v824, 0
    %831 = vmatprep.subr.mxu0 0.0
    %832 = vmatpush1.msra.mxu0 %v826
    %833 = vmatprep.subr.mxu0 0.0
    %834 = vmatpush1.msra.mxu0 0.0
    %835 = vmatprep.subr.mxu0 0.0
    %836 = vmatpush1.msra.mxu0 0.0
    %837 = vmatprep.subr.mxu0 0.0
    %838 = vmatpush1.msra.mxu0 0.0
    %839 = vmatprep.subr.mxu0 0.0
    %840 = vmatpush1.msra.mxu0 0.0
    %841 = vmatprep.subr.mxu0 0.0
    %842 = vmatpush1.msra.mxu0 0.0
    %843 = vmatprep.subr.mxu0 0.0
    %844 = vmatpush1.msra.mxu0 0.0
    %845 = vmatprep.subr.mxu0 0.0
    %846 = vmatpush1.msra.mxu0 0.0
    %847 = vmatprep.subr.mxu0 0.0
    %848 = vmatpush1.msra.mxu0 0.0
    %849 = vmatprep.subr.mxu0 0.0
    %850 = vmatpush1.msra.mxu0 0.0
    %851 = vmatprep.subr.mxu0 0.0
    %852 = vmatpush1.msra.mxu0 0.0
    %853 = vmatprep.subr.mxu0 0.0
    %854 = vmatpush1.msra.mxu0 0.0
    %855 = vmatprep.subr.mxu0 0.0
    %856 = vmatpush1.msra.mxu0 0.0
    %857 = vmatprep.subr.mxu0 0.0
    %858 = vmatpush1.msra.mxu0 0.0
    %859 = vmatprep.subr.mxu0 0.0
    %860 = vmatpush1.msra.mxu0 0.0
    %861 = vmatprep.subr.mxu0 0.0
    %862 = vmatpush1.msra.mxu0 0.0
    %863 = vmatprep.subr.mxu0 0.0
    %864 = vmatpush1.msra.mxu0 0.0
    %865 = vmatprep.subr.mxu0 0.0
    %866 = vmatpush1.msra.mxu0 0.0
    %867 = vmatprep.subr.mxu0 0.0
    %868 = vmatpush1.msra.mxu0 0.0
    %869 = vmatprep.subr.mxu0 0.0
    %870 = vmatpush1.msra.mxu0 0.0
    %871 = vmatprep.subr.mxu0 0.0
    %872 = vmatpush1.msra.mxu0 0.0
    %873 = vmatprep.subr.mxu0 0.0
    %874 = vmatpush1.msra.mxu0 0.0
    %875 = vmatprep.subr.mxu0 0.0
    %876 = vmatpush1.msra.mxu0 0.0
    %877 = vmatprep.subr.mxu0 0.0
    %878 = vmatpush1.msra.mxu0 0.0
    %879 = vmatprep.subr.mxu0 0.0
    %880 = vmatpush1.msra.mxu0 0.0
    %881 = vmatprep.subr.mxu0 0.0
    %882 = vmatpush1.msra.mxu0 0.0
    %883 = vmatprep.subr.mxu0 0.0
    %884 = vmatpush1.msra.mxu0 0.0
    %885 = vmatprep.subr.mxu0 0.0
    %886 = vmatpush1.msra.mxu0 0.0
    %887 = vmatprep.subr.mxu0 0.0
    %888 = vmatpush1.msra.mxu0 0.0
    %889 = vmatprep.subr.mxu0 0.0
    %890 = vmatpush1.msra.mxu0 0.0
    %891 = vmatprep.subr.mxu0 0.0
    %892 = vmatpush1.msra.mxu0 0.0
    %893 = vmatprep.subr.mxu0 0.0
    %894 = vmatpush1.msra.mxu0 0.0
    %895 = vmatprep.mubr.f32.mxu0 0.0
    %896 = vmatmul.mubr.f32.gmra.mrb[0].mxu0 %v829
    %v897 = vpop.f32.mrb[0].mxu0
    %v898 = vadd.f32 0.0, %v897
    %v899 = vpop.f32.mrb[0].mxu0
    %900 = vdwg.mxu0
    %v902 = vsel %vm260, %v898, 0
    %904 = vmatprep.subr.mxu0 0.0
    %905 = vmatpush1.msra.mxu0 %v166
    %906 = vmatprep.subr.mxu0 0.0
    %907 = vmatpush1.msra.mxu0 0.0
    %908 = vmatprep.subr.mxu0 0.0
    %909 = vmatpush1.msra.mxu0 0.0
    %910 = vmatprep.subr.mxu0 0.0
    %911 = vmatpush1.msra.mxu0 0.0
    %912 = vmatprep.subr.mxu0 0.0
    %913 = vmatpush1.msra.mxu0 0.0
    %914 = vmatprep.subr.mxu0 0.0
    %915 = vmatpush1.msra.mxu0 0.0
    %916 = vmatprep.subr.mxu0 0.0
    %917 = vmatpush1.msra.mxu0 0.0
    %918 = vmatprep.subr.mxu0 0.0
    %919 = vmatpush1.msra.mxu0 0.0
    %920 = vmatprep.subr.mxu0 0.0
    %921 = vmatpush1.msra.mxu0 0.0
    %922 = vmatprep.subr.mxu0 0.0
    %923 = vmatpush1.msra.mxu0 0.0
    %924 = vmatprep.subr.mxu0 0.0
    %925 = vmatpush1.msra.mxu0 0.0
    %926 = vmatprep.subr.mxu0 0.0
    %927 = vmatpush1.msra.mxu0 0.0
    %928 = vmatprep.subr.mxu0 0.0
    %929 = vmatpush1.msra.mxu0 0.0
    %930 = vmatprep.subr.mxu0 0.0
    %931 = vmatpush1.msra.mxu0 0.0
    %932 = vmatprep.subr.mxu0 0.0
    %933 = vmatpush1.msra.mxu0 0.0
    %934 = vmatprep.subr.mxu0 0.0
    %935 = vmatpush1.msra.mxu0 0.0
    %936 = vmatprep.subr.mxu0 0.0
    %937 = vmatpush1.msra.mxu0 0.0
    %938 = vmatprep.subr.mxu0 0.0
    %939 = vmatpush1.msra.mxu0 0.0
    %940 = vmatprep.subr.mxu0 0.0
    %941 = vmatpush1.msra.mxu0 0.0
    %942 = vmatprep.subr.mxu0 0.0
    %943 = vmatpush1.msra.mxu0 0.0
    %944 = vmatprep.subr.mxu0 0.0
    %945 = vmatpush1.msra.mxu0 0.0
    %946 = vmatprep.subr.mxu0 0.0
    %947 = vmatpush1.msra.mxu0 0.0
    %948 = vmatprep.subr.mxu0 0.0
    %949 = vmatpush1.msra.mxu0 0.0
    %950 = vmatprep.subr.mxu0 0.0
    %951 = vmatpush1.msra.mxu0 0.0
    %952 = vmatprep.subr.mxu0 0.0
    %953 = vmatpush1.msra.mxu0 0.0
    %954 = vmatprep.subr.mxu0 0.0
    %955 = vmatpush1.msra.mxu0 0.0
    %956 = vmatprep.subr.mxu0 0.0
    %957 = vmatpush1.msra.mxu0 0.0
    %958 = vmatprep.subr.mxu0 0.0
    %959 = vmatpush1.msra.mxu0 0.0
    %960 = vmatprep.subr.mxu0 0.0
    %961 = vmatpush1.msra.mxu0 0.0
    %962 = vmatprep.subr.mxu0 0.0
    %963 = vmatpush1.msra.mxu0 0.0
    %964 = vmatprep.subr.mxu0 0.0
    %965 = vmatpush1.msra.mxu0 0.0
    %966 = vmatprep.subr.mxu0 0.0
    %967 = vmatpush1.msra.mxu0 0.0
    %968 = vmatprep.mubr.f32.mxu0 0.0
    %969 = vmatmul.mubr.f32.gmra.mrb[0].mxu0 %v902
    %v970 = vpop.f32.mrb[0].mxu0
    %v971 = vadd.f32 0.0, %v970
    %v972 = vpop.f32.mrb[0].mxu0
    %973 = vdwg.mxu0
    %v974 = vadd.f32 %v732, %v971
    %975 = vrot.lane.b32.xlu0 %v249, 104
    %v976 = vpop.permute.xlu0 %975
    %977 = vrot.lane.b32.xlu0 %v249, 72
    %v978 = vpop.permute.xlu0 %977
    %v979 = vsel %vm260, %v976, 0
    %v981 = vsel %vm260, %v978, 0
    %983 = vmatprep.subr.mxu0 0.0
    %984 = vmatpush1.xpose.msra.mxu0 %v981
    %985 = vmatprep.subr.mxu0 0.0
    %986 = vmatpush1.xpose.msra.mxu0 0.0
    %987 = vmatprep.subr.mxu0 0.0
    %988 = vmatpush1.xpose.msra.mxu0 0.0
    %989 = vmatprep.subr.mxu0 0.0
    %990 = vmatpush1.xpose.msra.mxu0 0.0
    %991 = vmatprep.subr.mxu0 0.0
    %992 = vmatpush1.xpose.msra.mxu0 0.0
    %993 = vmatprep.subr.mxu0 0.0
    %994 = vmatpush1.xpose.msra.mxu0 0.0
    %995 = vmatprep.subr.mxu0 0.0
    %996 = vmatpush1.xpose.msra.mxu0 0.0
    %997 = vmatprep.subr.mxu0 0.0
    %998 = vmatpush1.xpose.msra.mxu0 0.0
    %999 = vmatprep.subr.mxu0 0.0
    %1000 = vmatpush1.xpose.msra.mxu0 0.0
    %1001 = vmatprep.subr.mxu0 0.0
    %1002 = vmatpush1.xpose.msra.mxu0 0.0
    %1003 = vmatprep.subr.mxu0 0.0
    %1004 = vmatpush1.xpose.msra.mxu0 0.0
    %1005 = vmatprep.subr.mxu0 0.0
    %1006 = vmatpush1.xpose.msra.mxu0 0.0
    %1007 = vmatprep.subr.mxu0 0.0
    %1008 = vmatpush1.xpose.msra.mxu0 0.0
    %1009 = vmatprep.subr.mxu0 0.0
    %1010 = vmatpush1.xpose.msra.mxu0 0.0
    %1011 = vmatprep.subr.mxu0 0.0
    %1012 = vmatpush1.xpose.msra.mxu0 0.0
    %1013 = vmatprep.subr.mxu0 0.0
    %1014 = vmatpush1.xpose.msra.mxu0 0.0
    %1015 = vmatprep.subr.mxu0 0.0
    %1016 = vmatpush1.xpose.msra.mxu0 0.0
    %1017 = vmatprep.subr.mxu0 0.0
    %1018 = vmatpush1.xpose.msra.mxu0 0.0
    %1019 = vmatprep.subr.mxu0 0.0
    %1020 = vmatpush1.xpose.msra.mxu0 0.0
    %1021 = vmatprep.subr.mxu0 0.0
    %1022 = vmatpush1.xpose.msra.mxu0 0.0
    %1023 = vmatprep.subr.mxu0 0.0
    %1024 = vmatpush1.xpose.msra.mxu0 0.0
    %1025 = vmatprep.subr.mxu0 0.0
    %1026 = vmatpush1.xpose.msra.mxu0 0.0
    %1027 = vmatprep.subr.mxu0 0.0
    %1028 = vmatpush1.xpose.msra.mxu0 0.0
    %1029 = vmatprep.subr.mxu0 0.0
    %1030 = vmatpush1.xpose.msra.mxu0 0.0
    %1031 = vmatprep.subr.mxu0 0.0
    %1032 = vmatpush1.xpose.msra.mxu0 0.0
    %1033 = vmatprep.subr.mxu0 0.0
    %1034 = vmatpush1.xpose.msra.mxu0 0.0
    %1035 = vmatprep.subr.mxu0 0.0
    %1036 = vmatpush1.xpose.msra.mxu0 0.0
    %1037 = vmatprep.subr.mxu0 0.0
    %1038 = vmatpush1.xpose.msra.mxu0 0.0
    %1039 = vmatprep.subr.mxu0 0.0
    %1040 = vmatpush1.xpose.msra.mxu0 0.0
    %1041 = vmatprep.subr.mxu0 0.0
    %1042 = vmatpush1.xpose.msra.mxu0 0.0
    %1043 = vmatprep.subr.mxu0 0.0
    %1044 = vmatpush1.xpose.msra.mxu0 0.0
    %1045 = vmatprep.subr.mxu0 0.0
    %1046 = vmatpush1.xpose.msra.mxu0 0.0
    %1047 = vmatprep.mubr.f32.mxu0 0.0
    %1048 = vmatmul.mubr.f32.gmra.mrb[0].mxu0 %v979
    %v1049 = vpop.f32.mrb[0].mxu0
    %v1050 = vadd.f32 0.0, %v1049
    %v1051 = vpop.f32.mrb[0].mxu0
    %1052 = vdwg.mxu0
    %v1053 = vmul.f32 %v1050, 0.35355338
    %v1054 = vsel %vm260, %v1053, -inf
    %1055 = vmax.xlane.f32.xlu0 %v1054
    %v1056 = vpop.xlane.xlu0 %1055
    %v1057 = vsub.f32 %v1053, %v1056
    %v1058 = vmul.f32 %v1057, 1.442695
    %v1059 = vpow.pop %v1058
    %v1060 = vsel %vm260, %v1059, 0.0
    %1061 = vadd.xlane.f32.xlu0 %v1060
    %v1062 = vpop.xlane.xlu0 %1061
    %v1063 = vrcp.pop %v1062
    %v1064 = vmul.f32 %v1059, %v1063
    %1065 = vrot.lane.b32.xlu0 %v249, 40
    %v1066 = vpop.permute.xlu0 %1065
    %v1069 = vsel %vm260, %v1064, 0
    %1071 = vmatprep.subr.mxu0 0.0
    %1072 = vmatpush1.msra.mxu0 %v1066
    %1073 = vmatprep.subr.mxu0 0.0
    %1074 = vmatpush1.msra.mxu0 0.0
    %1075 = vmatprep.subr.mxu0 0.0
    %1076 = vmatpush1.msra.mxu0 0.0
    %1077 = vmatprep.subr.mxu0 0.0
    %1078 = vmatpush1.msra.mxu0 0.0
    %1079 = vmatprep.subr.mxu0 0.0
    %1080 = vmatpush1.msra.mxu0 0.0
    %1081 = vmatprep.subr.mxu0 0.0
    %1082 = vmatpush1.msra.mxu0 0.0
    %1083 = vmatprep.subr.mxu0 0.0
    %1084 = vmatpush1.msra.mxu0 0.0
    %1085 = vmatprep.subr.mxu0 0.0
    %1086 = vmatpush1.msra.mxu0 0.0
    %1087 = vmatprep.subr.mxu0 0.0
    %1088 = vmatpush1.msra.mxu0 0.0
    %1089 = vmatprep.subr.mxu0 0.0
    %1090 = vmatpush1.msra.mxu0 0.0
    %1091 = vmatprep.subr.mxu0 0.0
    %1092 = vmatpush1.msra.mxu0 0.0
    %1093 = vmatprep.subr.mxu0 0.0
    %1094 = vmatpush1.msra.mxu0 0.0
    %1095 = vmatprep.subr.mxu0 0.0
    %1096 = vmatpush1.msra.mxu0 0.0
    %1097 = vmatprep.subr.mxu0 0.0
    %1098 = vmatpush1.msra.mxu0 0.0
    %1099 = vmatprep.subr.mxu0 0.0
    %1100 = vmatpush1.msra.mxu0 0.0
    %1101 = vmatprep.subr.mxu0 0.0
    %1102 = vmatpush1.msra.mxu0 0.0
    %1103 = vmatprep.subr.mxu0 0.0
    %1104 = vmatpush1.msra.mxu0 0.0
    %1105 = vmatprep.subr.mxu0 0.0
    %1106 = vmatpush1.msra.mxu0 0.0
    %1107 = vmatprep.subr.mxu0 0.0
    %1108 = vmatpush1.msra.mxu0 0.0
    %1109 = vmatprep.subr.mxu0 0.0
    %1110 = vmatpush1.msra.mxu0 0.0
    %1111 = vmatprep.subr.mxu0 0.0
    %1112 = vmatpush1.msra.mxu0 0.0
    %1113 = vmatprep.subr.mxu0 0.0
    %1114 = vmatpush1.msra.mxu0 0.0
    %1115 = vmatprep.subr.mxu0 0.0
    %1116 = vmatpush1.msra.mxu0 0.0
    %1117 = vmatprep.subr.mxu0 0.0
    %1118 = vmatpush1.msra.mxu0 0.0
    %1119 = vmatprep.subr.mxu0 0.0
    %1120 = vmatpush1.msra.mxu0 0.0
    %1121 = vmatprep.subr.mxu0 0.0
    %1122 = vmatpush1.msra.mxu0 0.0
    %1123 = vmatprep.subr.mxu0 0.0
    %1124 = vmatpush1.msra.mxu0 0.0
    %1125 = vmatprep.subr.mxu0 0.0
    %1126 = vmatpush1.msra.mxu0 0.0
    %1127 = vmatprep.subr.mxu0 0.0
    %1128 = vmatpush1.msra.mxu0 0.0
    %1129 = vmatprep.subr.mxu0 0.0
    %1130 = vmatpush1.msra.mxu0 0.0
    %1131 = vmatprep.subr.mxu0 0.0
    %1132 = vmatpush1.msra.mxu0 0.0
    %1133 = vmatprep.subr.mxu0 0.0
    %1134 = vmatpush1.msra.mxu0 0.0
    %1135 = vmatprep.mubr.f32.mxu0 0.0
    %1136 = vmatmul.mubr.f32.gmra.mrb[0].mxu0 %v1069
    %v1137 = vpop.f32.mrb[0].mxu0
    %v1138 = vadd.f32 0.0, %v1137
    %v1139 = vpop.f32.mrb[0].mxu0
    %1140 = vdwg.mxu0
    %v1142 = vsel %vm260, %v1138, 0
    %1144 = vmatprep.subr.mxu0 0.0
    %1145 = vmatpush1.msra.mxu0 %v167
    %1146 = vmatprep.subr.mxu0 0.0
    %1147 = vmatpush1.msra.mxu0 0.0
    %1148 = vmatprep.subr.mxu0 0.0
    %1149 = vmatpush1.msra.mxu0 0.0
    %1150 = vmatprep.subr.mxu0 0.0
    %1151 = vmatpush1.msra.mxu0 0.0
    %1152 = vmatprep.subr.mxu0 0.0
    %1153 = vmatpush1.msra.mxu0 0.0
    %1154 = vmatprep.subr.mxu0 0.0
    %1155 = vmatpush1.msra.mxu0 0.0
    %1156 = vmatprep.subr.mxu0 0.0
    %1157 = vmatpush1.msra.mxu0 0.0
    %1158 = vmatprep.subr.mxu0 0.0
    %1159 = vmatpush1.msra.mxu0 0.0
    %1160 = vmatprep.subr.mxu0 0.0
    %1161 = vmatpush1.msra.mxu0 0.0
    %1162 = vmatprep.subr.mxu0 0.0
    %1163 = vmatpush1.msra.mxu0 0.0
    %1164 = vmatprep.subr.mxu0 0.0
    %1165 = vmatpush1.msra.mxu0 0.0
    %1166 = vmatprep.subr.mxu0 0.0
    %1167 = vmatpush1.msra.mxu0 0.0
    %1168 = vmatprep.subr.mxu0 0.0
    %1169 = vmatpush1.msra.mxu0 0.0
    %1170 = vmatprep.subr.mxu0 0.0
    %1171 = vmatpush1.msra.mxu0 0.0
    %1172 = vmatprep.subr.mxu0 0.0
    %1173 = vmatpush1.msra.mxu0 0.0
    %1174 = vmatprep.subr.mxu0 0.0
    %1175 = vmatpush1.msra.mxu0 0.0
    %1176 = vmatprep.subr.mxu0 0.0
    %1177 = vmatpush1.msra.mxu0 0.0
    %1178 = vmatprep.subr.mxu0 0.0
    %1179 = vmatpush1.msra.mxu0 0.0
    %1180 = vmatprep.subr.mxu0 0.0
    %1181 = vmatpush1.msra.mxu0 0.0
    %1182 = vmatprep.subr.mxu0 0.0
    %1183 = vmatpush1.msra.mxu0 0.0
    %1184 = vmatprep.subr.mxu0 0.0
    %1185 = vmatpush1.msra.mxu0 0.0
    %1186 = vmatprep.subr.mxu0 0.0
    %1187 = vmatpush1.msra.mxu0 0.0
    %1188 = vmatprep.subr.mxu0 0.0
    %1189 = vmatpush1.msra.mxu0 0.0
    %1190 = vmatprep.subr.mxu0 0.0
    %1191 = vmatpush1.msra.mxu0 0.0
    %1192 = vmatprep.subr.mxu0 0.0
    %1193 = vmatpush1.msra.mxu0 0.0
    %1194 = vmatprep.subr.mxu0 0.0
    %1195 = vmatpush1.msra.mxu0 0.0
    %1196 = vmatprep.subr.mxu0 0.0
    %1197 = vmatpush1.msra.mxu0 0.0
    %1198 = vmatprep.subr.mxu0 0.0
    %1199 = vmatpush1.msra.mxu0 0.0
    %1200 = vmatprep.subr.mxu0 0.0
    %1201 = vmatpush1.msra.mxu0 0.0
    %1202 = vmatprep.subr.mxu0 0.0
    %1203 = vmatpush1.msra.mxu0 0.0
    %1204 = vmatprep.subr.mxu0 0.0
    %1205 = vmatpush1.msra.mxu0 0.0
    %1206 = vmatprep.subr.mxu0 0.0
    %1207 = vmatpush1.msra.mxu0 0.0
    %1208 = vmatprep.mubr.f32.mxu0 0.0
    %1209 = vmatmul.mubr.f32.gmra.mrb[0].mxu0 %v1142
    %v1210 = vpop.f32.mrb[0].mxu0
    %v1211 = vadd.f32 0.0, %v1210
    %v1212 = vpop.f32.mrb[0].mxu0
    %1213 = vdwg.mxu0
    %v1214 = vadd.f32 %v974, %v1211
    %1216 = vrot.lane.b32.xlu0 %v254, 96
    %v1217 = vpop.permute.xlu0 %1216
    %v1218 = vsel %vm260, %v254, 0
    %v1220 = vsel %vm260, %v1217, 0
    %1222 = vmatprep.subr.mxu0 0.0
    %1223 = vmatpush1.xpose.msra.mxu0 %v1220
    %1224 = vmatprep.subr.mxu0 0.0
    %1225 = vmatpush1.xpose.msra.mxu0 0.0
    %1226 = vmatprep.subr.mxu0 0.0
    %1227 = vmatpush1.xpose.msra.mxu0 0.0
    %1228 = vmatprep.subr.mxu0 0.0
    %1229 = vmatpush1.xpose.msra.mxu0 0.0
    %1230 = vmatprep.subr.mxu0 0.0
    %1231 = vmatpush1.xpose.msra.mxu0 0.0
    %1232 = vmatprep.subr.mxu0 0.0
    %1233 = vmatpush1.xpose.msra.mxu0 0.0
    %1234 = vmatprep.subr.mxu0 0.0
    %1235 = vmatpush1.xpose.msra.mxu0 0.0
    %1236 = vmatprep.subr.mxu0 0.0
    %1237 = vmatpush1.xpose.msra.mxu0 0.0
    %1238 = vmatprep.subr.mxu0 0.0
    %1239 = vmatpush1.xpose.msra.mxu0 0.0
    %1240 = vmatprep.subr.mxu0 0.0
    %1241 = vmatpush1.xpose.msra.mxu0 0.0
    %1242 = vmatprep.subr.mxu0 0.0
    %1243 = vmatpush1.xpose.msra.mxu0 0.0
    %1244 = vmatprep.subr.mxu0 0.0
    %1245 = vmatpush1.xpose.msra.mxu0 0.0
    %1246 = vmatprep.subr.mxu0 0.0
    %1247 = vmatpush1.xpose.msra.mxu0 0.0
    %1248 = vmatprep.subr.mxu0 0.0
    %1249 = vmatpush1.xpose.msra.mxu0 0.0
    %1250 = vmatprep.subr.mxu0 0.0
    %1251 = vmatpush1.xpose.msra.mxu0 0.0
    %1252 = vmatprep.subr.mxu0 0.0
    %1253 = vmatpush1.xpose.msra.mxu0 0.0
    %1254 = vmatprep.subr.mxu0 0.0
    %1255 = vmatpush1.xpose.msra.mxu0 0.0
    %1256 = vmatprep.subr.mxu0 0.0
    %1257 = vmatpush1.xpose.msra.mxu0 0.0
    %1258 = vmatprep.subr.mxu0 0.0
    %1259 = vmatpush1.xpose.msra.mxu0 0.0
    %1260 = vmatprep.subr.mxu0 0.0
    %1261 = vmatpush1.xpose.msra.mxu0 0.0
    %1262 = vmatprep.subr.mxu0 0.0
    %1263 = vmatpush1.xpose.msra.mxu0 0.0
    %1264 = vmatprep.subr.mxu0 0.0
    %1265 = vmatpush1.xpose.msra.mxu0 0.0
    %1266 = vmatprep.subr.mxu0 0.0
    %1267 = vmatpush1.xpose.msra.mxu0 0.0
    %1268 = vmatprep.subr.mxu0 0.0
    %1269 = vmatpush1.xpose.msra.mxu0 0.0
    %1270 = vmatprep.subr.mxu0 0.0
    %1271 = vmatpush1.xpose.msra.mxu0 0.0
    %1272 = vmatprep.subr.mxu0 0.0
    %1273 = vmatpush1.xpose.msra.mxu0 0.0
    %1274 = vmatprep.subr.mxu0 0.0
    %1275 = vmatpush1.xpose.msra.mxu0 0.0
    %1276 = vmatprep.subr.mxu0 0.0
    %1277 = vmatpush1.xpose.msra.mxu0 0.0
    %1278 = vmatprep.subr.mxu0 0.0
    %1279 = vmatpush1.xpose.msra.mxu0 0.0
    %1280 = vmatprep.subr.mxu0 0.0
    %1281 = vmatpush1.xpose.msra.mxu0 0.0
    %1282 = vmatprep.subr.mxu0 0.0
    %1283 = vmatpush1.xpose.msra.mxu0 0.0
    %1284 = vmatprep.subr.mxu0 0.0
    %1285 = vmatpush1.xpose.msra.mxu0 0.0
    %1286 = vmatprep.mubr.f32.mxu0 0.0
    %1287 = vmatmul.mubr.f32.gmra.mrb[0].mxu0 %v1218
    %v1288 = vpop.f32.mrb[0].mxu0
    %v1289 = vadd.f32 0.0, %v1288
    %v1290 = vpop.f32.mrb[0].mxu0
    %1291 = vdwg.mxu0
    %v1292 = vmul.f32 %v1289, 0.35355338
    %v1293 = vsel %vm260, %v1292, -inf
    %1294 = vmax.xlane.f32.xlu0 %v1293
    %v1295 = vpop.xlane.xlu0 %1294
    %v1296 = vsub.f32 %v1292, %v1295
    %v1297 = vmul.f32 %v1296, 1.442695
    %v1298 = vpow.pop %v1297
    %v1299 = vsel %vm260, %v1298, 0.0
    %1300 = vadd.xlane.f32.xlu0 %v1299
    %v1301 = vpop.xlane.xlu0 %1300
    %v1302 = vrcp.pop %v1301
    %v1303 = vmul.f32 %v1298, %v1302
    %1304 = vrot.lane.b32.xlu0 %v254, 64
    %v1305 = vpop.permute.xlu0 %1304
    %v1308 = vsel %vm260, %v1303, 0
    %1310 = vmatprep.subr.mxu0 0.0
    %1311 = vmatpush1.msra.mxu0 %v1305
    %1312 = vmatprep.subr.mxu0 0.0
    %1313 = vmatpush1.msra.mxu0 0.0
    %1314 = vmatprep.subr.mxu0 0.0
    %1315 = vmatpush1.msra.mxu0 0.0
    %1316 = vmatprep.subr.mxu0 0.0
    %1317 = vmatpush1.msra.mxu0 0.0
    %1318 = vmatprep.subr.mxu0 0.0
    %1319 = vmatpush1.msra.mxu0 0.0
    %1320 = vmatprep.subr.mxu0 0.0
    %1321 = vmatpush1.msra.mxu0 0.0
    %1322 = vmatprep.subr.mxu0 0.0
    %1323 = vmatpush1.msra.mxu0 0.0
    %1324 = vmatprep.subr.mxu0 0.0
    %1325 = vmatpush1.msra.mxu0 0.0
    %1326 = vmatprep.subr.mxu0 0.0
    %1327 = vmatpush1.msra.mxu0 0.0
    %1328 = vmatprep.subr.mxu0 0.0
    %1329 = vmatpush1.msra.mxu0 0.0
    %1330 = vmatprep.subr.mxu0 0.0
    %1331 = vmatpush1.msra.mxu0 0.0
    %1332 = vmatprep.subr.mxu0 0.0
    %1333 = vmatpush1.msra.mxu0 0.0
    %1334 = vmatprep.subr.mxu0 0.0
    %1335 = vmatpush1.msra.mxu0 0.0
    %1336 = vmatprep.subr.mxu0 0.0
    %1337 = vmatpush1.msra.mxu0 0.0
    %1338 = vmatprep.subr.mxu0 0.0
    %1339 = vmatpush1.msra.mxu0 0.0
    %1340 = vmatprep.subr.mxu0 0.0
    %1341 = vmatpush1.msra.mxu0 0.0
    %1342 = vmatprep.subr.mxu0 0.0
    %1343 = vmatpush1.msra.mxu0 0.0
    %1344 = vmatprep.subr.mxu0 0.0
    %1345 = vmatpush1.msra.mxu0 0.0
    %1346 = vmatprep.subr.mxu0 0.0
    %1347 = vmatpush1.msra.mxu0 0.0
    %1348 = vmatprep.subr.mxu0 0.0
    %1349 = vmatpush1.msra.mxu0 0.0
    %1350 = vmatprep.subr.mxu0 0.0
    %1351 = vmatpush1.msra.mxu0 0.0
    %1352 = vmatprep.subr.mxu0 0.0
    %1353 = vmatpush1.msra.mxu0 0.0
    %1354 = vmatprep.subr.mxu0 0.0
    %1355 = vmatpush1.msra.mxu0 0.0
    %1356 = vmatprep.subr.mxu0 0.0
    %1357 = vmatpush1.msra.mxu0 0.0
    %1358 = vmatprep.subr.mxu0 0.0
    %1359 = vmatpush1.msra.mxu0 0.0
    %1360 = vmatprep.subr.mxu0 0.0
    %1361 = vmatpush1.msra.mxu0 0.0
    %1362 = vmatprep.subr.mxu0 0.0
    %1363 = vmatpush1.msra.mxu0 0.0
    %1364 = vmatprep.subr.mxu0 0.0
    %1365 = vmatpush1.msra.mxu0 0.0
    %1366 = vmatprep.subr.mxu0 0.0
    %1367 = vmatpush1.msra.mxu0 0.0
    %1368 = vmatprep.subr.mxu0 0.0
    %1369 = vmatpush1.msra.mxu0 0.0
    %1370 = vmatprep.subr.mxu0 0.0
    %1371 = vmatpush1.msra.mxu0 0.0
    %1372 = vmatprep.subr.mxu0 0.0
    %1373 = vmatpush1.msra.mxu0 0.0
    %1374 = vmatprep.mubr.f32.mxu0 0.0
    %1375 = vmatmul.mubr.f32.gmra.mrb[0].mxu0 %v1308
    %v1376 = vpop.f32.mrb[0].mxu0
    %v1377 = vadd.f32 0.0, %v1376
    %v1378 = vpop.f32.mrb[0].mxu0
    %1379 = vdwg.mxu0
    %1380 = vrot.lane.b32.xlu0 %v254, 120
    %v1381 = vpop.permute.xlu0 %1380
    %1382 = vrot.lane.b32.xlu0 %v254, 88
    %v1383 = vpop.permute.xlu0 %1382
    %v1384 = vsel %vm260, %v1381, 0
    %v1386 = vsel %vm260, %v1383, 0
    %1388 = vmatprep.subr.mxu0 0.0
    %1389 = vmatpush1.xpose.msra.mxu0 %v1386
    %1390 = vmatprep.subr.mxu0 0.0
    %1391 = vmatpush1.xpose.msra.mxu0 0.0
    %1392 = vmatprep.subr.mxu0 0.0
    %1393 = vmatpush1.xpose.msra.mxu0 0.0
    %1394 = vmatprep.subr.mxu0 0.0
    %1395 = vmatpush1.xpose.msra.mxu0 0.0
    %1396 = vmatprep.subr.mxu0 0.0
    %1397 = vmatpush1.xpose.msra.mxu0 0.0
    %1398 = vmatprep.subr.mxu0 0.0
    %1399 = vmatpush1.xpose.msra.mxu0 0.0
    %1400 = vmatprep.subr.mxu0 0.0
    %1401 = vmatpush1.xpose.msra.mxu0 0.0
    %1402 = vmatprep.subr.mxu0 0.0
    %1403 = vmatpush1.xpose.msra.mxu0 0.0
    %1404 = vmatprep.subr.mxu0 0.0
    %1405 = vmatpush1.xpose.msra.mxu0 0.0
    %1406 = vmatprep.subr.mxu0 0.0
    %1407 = vmatpush1.xpose.msra.mxu0 0.0
    %1408 = vmatprep.subr.mxu0 0.0
    %1409 = vmatpush1.xpose.msra.mxu0 0.0
    %1410 = vmatprep.subr.mxu0 0.0
    %1411 = vmatpush1.xpose.msra.mxu0 0.0
    %1412 = vmatprep.subr.mxu0 0.0
    %1413 = vmatpush1.xpose.msra.mxu0 0.0
    %1414 = vmatprep.subr.mxu0 0.0
    %1415 = vmatpush1.xpose.msra.mxu0 0.0
    %1416 = vmatprep.subr.mxu0 0.0
    %1417 = vmatpush1.xpose.msra.mxu0 0.0
    %1418 = vmatprep.subr.mxu0 0.0
    %1419 = vmatpush1.xpose.msra.mxu0 0.0
    %1420 = vmatprep.subr.mxu0 0.0
    %1421 = vmatpush1.xpose.msra.mxu0 0.0
    %1422 = vmatprep.subr.mxu0 0.0
    %1423 = vmatpush1.xpose.msra.mxu0 0.0
    %1424 = vmatprep.subr.mxu0 0.0
    %1425 = vmatpush1.xpose.msra.mxu0 0.0
    %1426 = vmatprep.subr.mxu0 0.0
    %1427 = vmatpush1.xpose.msra.mxu0 0.0
    %1428 = vmatprep.subr.mxu0 0.0
    %1429 = vmatpush1.xpose.msra.mxu0 0.0
    %1430 = vmatprep.subr.mxu0 0.0
    %1431 = vmatpush1.xpose.msra.mxu0 0.0
    %1432 = vmatprep.subr.mxu0 0.0
    %1433 = vmatpush1.xpose.msra.mxu0 0.0
    %1434 = vmatprep.subr.mxu0 0.0
    %1435 = vmatpush1.xpose.msra.mxu0 0.0
    %1436 = vmatprep.subr.mxu0 0.0
    %1437 = vmatpush1.xpose.msra.mxu0 0.0
    %1438 = vmatprep.subr.mxu0 0.0
    %1439 = vmatpush1.xpose.msra.mxu0 0.0
    %1440 = vmatprep.subr.mxu0 0.0
    %1441 = vmatpush1.xpose.msra.mxu0 0.0
    %1442 = vmatprep.subr.mxu0 0.0
    %1443 = vmatpush1.xpose.msra.mxu0 0.0
    %1444 = vmatprep.subr.mxu0 0.0
    %1445 = vmatpush1.xpose.msra.mxu0 0.0
    %1446 = vmatprep.subr.mxu0 0.0
    %1447 = vmatpush1.xpose.msra.mxu0 0.0
    %1448 = vmatprep.subr.mxu0 0.0
    %1449 = vmatpush1.xpose.msra.mxu0 0.0
    %1450 = vmatprep.subr.mxu0 0.0
    %1451 = vmatpush1.xpose.msra.mxu0 0.0
    %1452 = vmatprep.mubr.f32.mxu0 0.0
    %1453 = vmatmul.mubr.f32.gmra.mrb[0].mxu0 %v1384
    %v1454 = vpop.f32.mrb[0].mxu0
    %v1455 = vadd.f32 0.0, %v1454
    %v1456 = vpop.f32.mrb[0].mxu0
    %1457 = vdwg.mxu0
    %v1458 = vmul.f32 %v1455, 0.35355338
    %v1459 = vsel %vm260, %v1458, -inf
    %1460 = vmax.xlane.f32.xlu0 %v1459
    %v1461 = vpop.xlane.xlu0 %1460
    %v1462 = vsub.f32 %v1458, %v1461
    %v1463 = vmul.f32 %v1462, 1.442695
    %v1464 = vpow.pop %v1463
    %v1465 = vsel %vm260, %v1464, 0.0
    %1466 = vadd.xlane.f32.xlu0 %v1465
    %v1467 = vpop.xlane.xlu0 %1466
    %v1468 = vrcp.pop %v1467
    %v1469 = vmul.f32 %v1464, %v1468
    %1470 = vrot.lane.b32.xlu0 %v254, 56
    %v1471 = vpop.permute.xlu0 %1470
    %v1474 = vsel %vm260, %v1469, 0
    %1476 = vmatprep.subr.mxu0 0.0
    %1477 = vmatpush1.msra.mxu0 %v1471
    %1478 = vmatprep.subr.mxu0 0.0
    %1479 = vmatpush1.msra.mxu0 0.0
    %1480 = vmatprep.subr.mxu0 0.0
    %1481 = vmatpush1.msra.mxu0 0.0
    %1482 = vmatprep.subr.mxu0 0.0
    %1483 = vmatpush1.msra.mxu0 0.0
    %1484 = vmatprep.subr.mxu0 0.0
    %1485 = vmatpush1.msra.mxu0 0.0
    %1486 = vmatprep.subr.mxu0 0.0
    %1487 = vmatpush1.msra.mxu0 0.0
    %1488 = vmatprep.subr.mxu0 0.0
    %1489 = vmatpush1.msra.mxu0 0.0
    %1490 = vmatprep.subr.mxu0 0.0
    %1491 = vmatpush1.msra.mxu0 0.0
    %1492 = vmatprep.subr.mxu0 0.0
    %1493 = vmatpush1.msra.mxu0 0.0
    %1494 = vmatprep.subr.mxu0 0.0
    %1495 = vmatpush1.msra.mxu0 0.0
    %1496 = vmatprep.subr.mxu0 0.0
    %1497 = vmatpush1.msra.mxu0 0.0
    %1498 = vmatprep.subr.mxu0 0.0
    %1499 = vmatpush1.msra.mxu0 0.0
    %1500 = vmatprep.subr.mxu0 0.0
    %1501 = vmatpush1.msra.mxu0 0.0
    %1502 = vmatprep.subr.mxu0 0.0
    %1503 = vmatpush1.msra.mxu0 0.0
    %1504 = vmatprep.subr.mxu0 0.0
    %1505 = vmatpush1.msra.mxu0 0.0
    %1506 = vmatprep.subr.mxu0 0.0
    %1507 = vmatpush1.msra.mxu0 0.0
    %1508 = vmatprep.subr.mxu0 0.0
    %1509 = vmatpush1.msra.mxu0 0.0
    %1510 = vmatprep.subr.mxu0 0.0
    %1511 = vmatpush1.msra.mxu0 0.0
    %1512 = vmatprep.subr.mxu0 0.0
    %1513 = vmatpush1.msra.mxu0 0.0
    %1514 = vmatprep.subr.mxu0 0.0
    %1515 = vmatpush1.msra.mxu0 0.0
    %1516 = vmatprep.subr.mxu0 0.0
    %1517 = vmatpush1.msra.mxu0 0.0
    %1518 = vmatprep.subr.mxu0 0.0
    %1519 = vmatpush1.msra.mxu0 0.0
    %1520 = vmatprep.subr.mxu0 0.0
    %1521 = vmatpush1.msra.mxu0 0.0
    %1522 = vmatprep.subr.mxu0 0.0
    %1523 = vmatpush1.msra.mxu0 0.0
    %1524 = vmatprep.subr.mxu0 0.0
    %1525 = vmatpush1.msra.mxu0 0.0
    %1526 = vmatprep.subr.mxu0 0.0
    %1527 = vmatpush1.msra.mxu0 0.0
    %1528 = vmatprep.subr.mxu0 0.0
    %1529 = vmatpush1.msra.mxu0 0.0
    %1530 = vmatprep.subr.mxu0 0.0
    %1531 = vmatpush1.msra.mxu0 0.0
    %1532 = vmatprep.subr.mxu0 0.0
    %1533 = vmatpush1.msra.mxu0 0.0
    %1534 = vmatprep.subr.mxu0 0.0
    %1535 = vmatpush1.msra.mxu0 0.0
    %1536 = vmatprep.subr.mxu0 0.0
    %1537 = vmatpush1.msra.mxu0 0.0
    %1538 = vmatprep.subr.mxu0 0.0
    %1539 = vmatpush1.msra.mxu0 0.0
    %1540 = vmatprep.mubr.f32.mxu0 0.0
    %1541 = vmatmul.mubr.f32.gmra.mrb[0].mxu0 %v1474
    %v1542 = vpop.f32.mrb[0].mxu0
    %v1543 = vadd.f32 0.0, %v1542
    %v1544 = vpop.f32.mrb[0].mxu0
    %1545 = vdwg.mxu0
    %v1547 = vsel %vm260, %v1543, 0
    %1549 = vmatprep.subr.mxu0 0.0
    %1550 = vmatpush1.msra.mxu0 %v165
    %1551 = vmatprep.subr.mxu0 0.0
    %1552 = vmatpush1.msra.mxu0 0.0
    %1553 = vmatprep.subr.mxu0 0.0
    %1554 = vmatpush1.msra.mxu0 0.0
    %1555 = vmatprep.subr.mxu0 0.0
    %1556 = vmatpush1.msra.mxu0 0.0
    %1557 = vmatprep.subr.mxu0 0.0
    %1558 = vmatpush1.msra.mxu0 0.0
    %1559 = vmatprep.subr.mxu0 0.0
    %1560 = vmatpush1.msra.mxu0 0.0
    %1561 = vmatprep.subr.mxu0 0.0
    %1562 = vmatpush1.msra.mxu0 0.0
    %1563 = vmatprep.subr.mxu0 0.0
    %1564 = vmatpush1.msra.mxu0 0.0
    %1565 = vmatprep.subr.mxu0 0.0
    %1566 = vmatpush1.msra.mxu0 0.0
    %1567 = vmatprep.subr.mxu0 0.0
    %1568 = vmatpush1.msra.mxu0 0.0
    %1569 = vmatprep.subr.mxu0 0.0
    %1570 = vmatpush1.msra.mxu0 0.0
    %1571 = vmatprep.subr.mxu0 0.0
    %1572 = vmatpush1.msra.mxu0 0.0
    %1573 = vmatprep.subr.mxu0 0.0
    %1574 = vmatpush1.msra.mxu0 0.0
    %1575 = vmatprep.subr.mxu0 0.0
    %1576 = vmatpush1.msra.mxu0 0.0
    %1577 = vmatprep.subr.mxu0 0.0
    %1578 = vmatpush1.msra.mxu0 0.0
    %1579 = vmatprep.subr.mxu0 0.0
    %1580 = vmatpush1.msra.mxu0 0.0
    %1581 = vmatprep.subr.mxu0 0.0
    %1582 = vmatpush1.msra.mxu0 0.0
    %1583 = vmatprep.subr.mxu0 0.0
    %1584 = vmatpush1.msra.mxu0 0.0
    %1585 = vmatprep.subr.mxu0 0.0
    %1586 = vmatpush1.msra.mxu0 0.0
    %1587 = vmatprep.subr.mxu0 0.0
    %1588 = vmatpush1.msra.mxu0 0.0
    %1589 = vmatprep.subr.mxu0 0.0
    %1590 = vmatpush1.msra.mxu0 0.0
    %1591 = vmatprep.subr.mxu0 0.0
    %1592 = vmatpush1.msra.mxu0 0.0
    %1593 = vmatprep.subr.mxu0 0.0
    %1594 = vmatpush1.msra.mxu0 0.0
    %1595 = vmatprep.subr.mxu0 0.0
    %1596 = vmatpush1.msra.mxu0 0.0
    %1597 = vmatprep.subr.mxu0 0.0
    %1598 = vmatpush1.msra.mxu0 0.0
    %1599 = vmatprep.subr.mxu0 0.0
    %1600 = vmatpush1.msra.mxu0 0.0
    %1601 = vmatprep.subr.mxu0 0.0
    %1602 = vmatpush1.msra.mxu0 0.0
    %1603 = vmatprep.subr.mxu0 0.0
    %1604 = vmatpush1.msra.mxu0 0.0
    %1605 = vmatprep.subr.mxu0 0.0
    %1606 = vmatpush1.msra.mxu0 0.0
    %1607 = vmatprep.subr.mxu0 0.0
    %1608 = vmatpush1.msra.mxu0 0.0
    %1609 = vmatprep.subr.mxu0 0.0
    %1610 = vmatpush1.msra.mxu0 0.0
    %1611 = vmatprep.subr.mxu0 0.0
    %1612 = vmatpush1.msra.mxu0 0.0
    %1613 = vmatprep.mubr.f32.mxu0 0.0
    %1614 = vmatmul.mubr.f32.gmra.mrb[0].mxu0 %v1547
    %v1615 = vpop.f32.mrb[0].mxu0
    %v1616 = vadd.f32 0.0, %v1615
    %v1617 = vpop.f32.mrb[0].mxu0
    %1618 = vdwg.mxu0
    %v1620 = vsel %vm260, %v1377, 0
    %1622 = vmatprep.subr.mxu0 0.0
    %1623 = vmatpush1.msra.mxu0 %v164
    %1624 = vmatprep.subr.mxu0 0.0
    %1625 = vmatpush1.msra.mxu0 0.0
    %1626 = vmatprep.subr.mxu0 0.0
    %1627 = vmatpush1.msra.mxu0 0.0
    %1628 = vmatprep.subr.mxu0 0.0
    %1629 = vmatpush1.msra.mxu0 0.0
    %1630 = vmatprep.subr.mxu0 0.0
    %1631 = vmatpush1.msra.mxu0 0.0
    %1632 = vmatprep.subr.mxu0 0.0
    %1633 = vmatpush1.msra.mxu0 0.0
    %1634 = vmatprep.subr.mxu0 0.0
    %1635 = vmatpush1.msra.mxu0 0.0
    %1636 = vmatprep.subr.mxu0 0.0
    %1637 = vmatpush1.msra.mxu0 0.0
    %1638 = vmatprep.subr.mxu0 0.0
    %1639 = vmatpush1.msra.mxu0 0.0
    %1640 = vmatprep.subr.mxu0 0.0
    %1641 = vmatpush1.msra.mxu0 0.0
    %1642 = vmatprep.subr.mxu0 0.0
    %1643 = vmatpush1.msra.mxu0 0.0
    %1644 = vmatprep.subr.mxu0 0.0
    %1645 = vmatpush1.msra.mxu0 0.0
    %1646 = vmatprep.subr.mxu0 0.0
    %1647 = vmatpush1.msra.mxu0 0.0
    %1648 = vmatprep.subr.mxu0 0.0
    %1649 = vmatpush1.msra.mxu0 0.0
    %1650 = vmatprep.subr.mxu0 0.0
    %1651 = vmatpush1.msra.mxu0 0.0
    %1652 = vmatprep.subr.mxu0 0.0
    %1653 = vmatpush1.msra.mxu0 0.0
    %1654 = vmatprep.subr.mxu0 0.0
    %1655 = vmatpush1.msra.mxu0 0.0
    %1656 = vmatprep.subr.mxu0 0.0
    %1657 = vmatpush1.msra.mxu0 0.0
    %1658 = vmatprep.subr.mxu0 0.0
    %1659 = vmatpush1.msra.mxu0 0.0
    %1660 = vmatprep.subr.mxu0 0.0
    %1661 = vmatpush1.msra.mxu0 0.0
    %1662 = vmatprep.subr.mxu0 0.0
    %1663 = vmatpush1.msra.mxu0 0.0
    %1664 = vmatprep.subr.mxu0 0.0
    %1665 = vmatpush1.msra.mxu0 0.0
    %1666 = vmatprep.subr.mxu0 0.0
    %1667 = vmatpush1.msra.mxu0 0.0
    %1668 = vmatprep.subr.mxu0 0.0
    %1669 = vmatpush1.msra.mxu0 0.0
    %1670 = vmatprep.subr.mxu0 0.0
    %1671 = vmatpush1.msra.mxu0 0.0
    %1672 = vmatprep.subr.mxu0 0.0
    %1673 = vmatpush1.msra.mxu0 0.0
    %1674 = vmatprep.subr.mxu0 0.0
    %1675 = vmatpush1.msra.mxu0 0.0
    %1676 = vmatprep.subr.mxu0 0.0
    %1677 = vmatpush1.msra.mxu0 0.0
    %1678 = vmatprep.subr.mxu0 0.0
    %1679 = vmatpush1.msra.mxu0 0.0
    %1680 = vmatprep.subr.mxu0 0.0
    %1681 = vmatpush1.msra.mxu0 0.0
    %1682 = vmatprep.subr.mxu0 0.0
    %1683 = vmatpush1.msra.mxu0 0.0
    %1684 = vmatprep.subr.mxu0 0.0
    %1685 = vmatpush1.msra.mxu0 0.0
    %1686 = vmatprep.mubr.f32.mxu0 0.0
    %1687 = vmatmul.mubr.f32.gmra.mrb[0].mxu0 %v1620
    %v1688 = vpop.f32.mrb[0].mxu0
    %v1689 = vadd.f32 %v1616, %v1688
    %v1690 = vpop.f32.mrb[0].mxu0
    %1691 = vdwg.mxu0
    %1692 = vrot.lane.b32.xlu0 %v254, 112
    %v1693 = vpop.permute.xlu0 %1692
    %1694 = vrot.lane.b32.xlu0 %v254, 80
    %v1695 = vpop.permute.xlu0 %1694
    %v1696 = vsel %vm260, %v1693, 0
    %v1698 = vsel %vm260, %v1695, 0
    %1700 = vmatprep.subr.mxu0 0.0
    %1701 = vmatpush1.xpose.msra.mxu0 %v1698
    %1702 = vmatprep.subr.mxu0 0.0
    %1703 = vmatpush1.xpose.msra.mxu0 0.0
    %1704 = vmatprep.subr.mxu0 0.0
    %1705 = vmatpush1.xpose.msra.mxu0 0.0
    %1706 = vmatprep.subr.mxu0 0.0
    %1707 = vmatpush1.xpose.msra.mxu0 0.0
    %1708 = vmatprep.subr.mxu0 0.0
    %1709 = vmatpush1.xpose.msra.mxu0 0.0
    %1710 = vmatprep.subr.mxu0 0.0
    %1711 = vmatpush1.xpose.msra.mxu0 0.0
    %1712 = vmatprep.subr.mxu0 0.0
    %1713 = vmatpush1.xpose.msra.mxu0 0.0
    %1714 = vmatprep.subr.mxu0 0.0
    %1715 = vmatpush1.xpose.msra.mxu0 0.0
    %1716 = vmatprep.subr.mxu0 0.0
    %1717 = vmatpush1.xpose.msra.mxu0 0.0
    %1718 = vmatprep.subr.mxu0 0.0
    %1719 = vmatpush1.xpose.msra.mxu0 0.0
    %1720 = vmatprep.subr.mxu0 0.0
    %1721 = vmatpush1.xpose.msra.mxu0 0.0
    %1722 = vmatprep.subr.mxu0 0.0
    %1723 = vmatpush1.xpose.msra.mxu0 0.0
    %1724 = vmatprep.subr.mxu0 0.0
    %1725 = vmatpush1.xpose.msra.mxu0 0.0
    %1726 = vmatprep.subr.mxu0 0.0
    %1727 = vmatpush1.xpose.msra.mxu0 0.0
    %1728 = vmatprep.subr.mxu0 0.0
    %1729 = vmatpush1.xpose.msra.mxu0 0.0
    %1730 = vmatprep.subr.mxu0 0.0
    %1731 = vmatpush1.xpose.msra.mxu0 0.0
    %1732 = vmatprep.subr.mxu0 0.0
    %1733 = vmatpush1.xpose.msra.mxu0 0.0
    %1734 = vmatprep.subr.mxu0 0.0
    %1735 = vmatpush1.xpose.msra.mxu0 0.0
    %1736 = vmatprep.subr.mxu0 0.0
    %1737 = vmatpush1.xpose.msra.mxu0 0.0
    %1738 = vmatprep.subr.mxu0 0.0
    %1739 = vmatpush1.xpose.msra.mxu0 0.0
    %1740 = vmatprep.subr.mxu0 0.0
    %1741 = vmatpush1.xpose.msra.mxu0 0.0
    %1742 = vmatprep.subr.mxu0 0.0
    %1743 = vmatpush1.xpose.msra.mxu0 0.0
    %1744 = vmatprep.subr.mxu0 0.0
    %1745 = vmatpush1.xpose.msra.mxu0 0.0
    %1746 = vmatprep.subr.mxu0 0.0
    %1747 = vmatpush1.xpose.msra.mxu0 0.0
    %1748 = vmatprep.subr.mxu0 0.0
    %1749 = vmatpush1.xpose.msra.mxu0 0.0
    %1750 = vmatprep.subr.mxu0 0.0
    %1751 = vmatpush1.xpose.msra.mxu0 0.0
    %1752 = vmatprep.subr.mxu0 0.0
    %1753 = vmatpush1.xpose.msra.mxu0 0.0
    %1754 = vmatprep.subr.mxu0 0.0
    %1755 = vmatpush1.xpose.msra.mxu0 0.0
    %1756 = vmatprep.subr.mxu0 0.0
    %1757 = vmatpush1.xpose.msra.mxu0 0.0
    %1758 = vmatprep.subr.mxu0 0.0
    %1759 = vmatpush1.xpose.msra.mxu0 0.0
    %1760 = vmatprep.subr.mxu0 0.0
    %1761 = vmatpush1.xpose.msra.mxu0 0.0
    %1762 = vmatprep.subr.mxu0 0.0
    %1763 = vmatpush1.xpose.msra.mxu0 0.0
    %1764 = vmatprep.mubr.f32.mxu0 0.0
    %1765 = vmatmul.mubr.f32.gmra.mrb[0].mxu0 %v1696
    %v1766 = vpop.f32.mrb[0].mxu0
    %v1767 = vadd.f32 0.0, %v1766
    %v1768 = vpop.f32.mrb[0].mxu0
    %1769 = vdwg.mxu0
    %v1770 = vmul.f32 %v1767, 0.35355338
    %v1771 = vsel %vm260, %v1770, -inf
    %1772 = vmax.xlane.f32.xlu0 %v1771
    %v1773 = vpop.xlane.xlu0 %1772
    %v1774 = vsub.f32 %v1770, %v1773
    %v1775 = vmul.f32 %v1774, 1.442695
    %v1776 = vpow.pop %v1775
    %v1777 = vsel %vm260, %v1776, 0.0
    %1778 = vadd.xlane.f32.xlu0 %v1777
    %v1779 = vpop.xlane.xlu0 %1778
    %v1780 = vrcp.pop %v1779
    %v1781 = vmul.f32 %v1776, %v1780
    %1782 = vrot.lane.b32.xlu0 %v254, 48
    %v1783 = vpop.permute.xlu0 %1782
    %v1786 = vsel %vm260, %v1781, 0
    %1788 = vmatprep.subr.mxu0 0.0
    %1789 = vmatpush1.msra.mxu0 %v1783
    %1790 = vmatprep.subr.mxu0 0.0
    %1791 = vmatpush1.msra.mxu0 0.0
    %1792 = vmatprep.subr.mxu0 0.0
    %1793 = vmatpush1.msra.mxu0 0.0
    %1794 = vmatprep.subr.mxu0 0.0
    %1795 = vmatpush1.msra.mxu0 0.0
    %1796 = vmatprep.subr.mxu0 0.0
    %1797 = vmatpush1.msra.mxu0 0.0
    %1798 = vmatprep.subr.mxu0 0.0
    %1799 = vmatpush1.msra.mxu0 0.0
    %1800 = vmatprep.subr.mxu0 0.0
    %1801 = vmatpush1.msra.mxu0 0.0
    %1802 = vmatprep.subr.mxu0 0.0
    %1803 = vmatpush1.msra.mxu0 0.0
    %1804 = vmatprep.subr.mxu0 0.0
    %1805 = vmatpush1.msra.mxu0 0.0
    %1806 = vmatprep.subr.mxu0 0.0
    %1807 = vmatpush1.msra.mxu0 0.0
    %1808 = vmatprep.subr.mxu0 0.0
    %1809 = vmatpush1.msra.mxu0 0.0
    %1810 = vmatprep.subr.mxu0 0.0
    %1811 = vmatpush1.msra.mxu0 0.0
    %1812 = vmatprep.subr.mxu0 0.0
    %1813 = vmatpush1.msra.mxu0 0.0
    %1814 = vmatprep.subr.mxu0 0.0
    %1815 = vmatpush1.msra.mxu0 0.0
    %1816 = vmatprep.subr.mxu0 0.0
    %1817 = vmatpush1.msra.mxu0 0.0
    %1818 = vmatprep.subr.mxu0 0.0
    %1819 = vmatpush1.msra.mxu0 0.0
    %1820 = vmatprep.subr.mxu0 0.0
    %1821 = vmatpush1.msra.mxu0 0.0
    %1822 = vmatprep.subr.mxu0 0.0
    %1823 = vmatpush1.msra.mxu0 0.0
    %1824 = vmatprep.subr.mxu0 0.0
    %1825 = vmatpush1.msra.mxu0 0.0
    %1826 = vmatprep.subr.mxu0 0.0
    %1827 = vmatpush1.msra.mxu0 0.0
    %1828 = vmatprep.subr.mxu0 0.0
    %1829 = vmatpush1.msra.mxu0 0.0
    %1830 = vmatprep.subr.mxu0 0.0
    %1831 = vmatpush1.msra.mxu0 0.0
    %1832 = vmatprep.subr.mxu0 0.0
    %1833 = vmatpush1.msra.mxu0 0.0
    %1834 = vmatprep.subr.mxu0 0.0
    %1835 = vmatpush1.msra.mxu0 0.0
    %1836 = vmatprep.subr.mxu0 0.0
    %1837 = vmatpush1.msra.mxu0 0.0
    %1838 = vmatprep.subr.mxu0 0.0
    %1839 = vmatpush1.msra.mxu0 0.0
    %1840 = vmatprep.subr.mxu0 0.0
    %1841 = vmatpush1.msra.mxu0 0.0
    %1842 = vmatprep.subr.mxu0 0.0
    %1843 = vmatpush1.msra.mxu0 0.0
    %1844 = vmatprep.subr.mxu0 0.0
    %1845 = vmatpush1.msra.mxu0 0.0
    %1846 = vmatprep.subr.mxu0 0.0
    %1847 = vmatpush1.msra.mxu0 0.0
    %1848 = vmatprep.subr.mxu0 0.0
    %1849 = vmatpush1.msra.mxu0 0.0
    %1850 = vmatprep.subr.mxu0 0.0
    %1851 = vmatpush1.msra.mxu0 0.0
    %1852 = vmatprep.mubr.f32.mxu0 0.0
    %1853 = vmatmul.mubr.f32.gmra.mrb[0].mxu0 %v1786
    %v1854 = vpop.f32.mrb[0].mxu0
    %v1855 = vadd.f32 0.0, %v1854
    %v1856 = vpop.f32.mrb[0].mxu0
    %1857 = vdwg.mxu0
    %v1859 = vsel %vm260, %v1855, 0
    %1861 = vmatprep.subr.mxu0 0.0
    %1862 = vmatpush1.msra.mxu0 %v166
    %1863 = vmatprep.subr.mxu0 0.0
    %1864 = vmatpush1.msra.mxu0 0.0
    %1865 = vmatprep.subr.mxu0 0.0
    %1866 = vmatpush1.msra.mxu0 0.0
    %1867 = vmatprep.subr.mxu0 0.0
    %1868 = vmatpush1.msra.mxu0 0.0
    %1869 = vmatprep.subr.mxu0 0.0
    %1870 = vmatpush1.msra.mxu0 0.0
    %1871 = vmatprep.subr.mxu0 0.0
    %1872 = vmatpush1.msra.mxu0 0.0
    %1873 = vmatprep.subr.mxu0 0.0
    %1874 = vmatpush1.msra.mxu0 0.0
    %1875 = vmatprep.subr.mxu0 0.0
    %1876 = vmatpush1.msra.mxu0 0.0
    %1877 = vmatprep.subr.mxu0 0.0
    %1878 = vmatpush1.msra.mxu0 0.0
    %1879 = vmatprep.subr.mxu0 0.0
    %1880 = vmatpush1.msra.mxu0 0.0
    %1881 = vmatprep.subr.mxu0 0.0
    %1882 = vmatpush1.msra.mxu0 0.0
    %1883 = vmatprep.subr.mxu0 0.0
    %1884 = vmatpush1.msra.mxu0 0.0
    %1885 = vmatprep.subr.mxu0 0.0
    %1886 = vmatpush1.msra.mxu0 0.0
    %1887 = vmatprep.subr.mxu0 0.0
    %1888 = vmatpush1.msra.mxu0 0.0
    %1889 = vmatprep.subr.mxu0 0.0
    %1890 = vmatpush1.msra.mxu0 0.0
    %1891 = vmatprep.subr.mxu0 0.0
    %1892 = vmatpush1.msra.mxu0 0.0
    %1893 = vmatprep.subr.mxu0 0.0
    %1894 = vmatpush1.msra.mxu0 0.0
    %1895 = vmatprep.subr.mxu0 0.0
    %1896 = vmatpush1.msra.mxu0 0.0
    %1897 = vmatprep.subr.mxu0 0.0
    %1898 = vmatpush1.msra.mxu0 0.0
    %1899 = vmatprep.subr.mxu0 0.0
    %1900 = vmatpush1.msra.mxu0 0.0
    %1901 = vmatprep.subr.mxu0 0.0
    %1902 = vmatpush1.msra.mxu0 0.0
    %1903 = vmatprep.subr.mxu0 0.0
    %1904 = vmatpush1.msra.mxu0 0.0
    %1905 = vmatprep.subr.mxu0 0.0
    %1906 = vmatpush1.msra.mxu0 0.0
    %1907 = vmatprep.subr.mxu0 0.0
    %1908 = vmatpush1.msra.mxu0 0.0
    %1909 = vmatprep.subr.mxu0 0.0
    %1910 = vmatpush1.msra.mxu0 0.0
    %1911 = vmatprep.subr.mxu0 0.0
    %1912 = vmatpush1.msra.mxu0 0.0
    %1913 = vmatprep.subr.mxu0 0.0
    %1914 = vmatpush1.msra.mxu0 0.0
    %1915 = vmatprep.subr.mxu0 0.0
    %1916 = vmatpush1.msra.mxu0 0.0
    %1917 = vmatprep.subr.mxu0 0.0
    %1918 = vmatpush1.msra.mxu0 0.0
    %1919 = vmatprep.subr.mxu0 0.0
    %1920 = vmatpush1.msra.mxu0 0.0
    %1921 = vmatprep.subr.mxu0 0.0
    %1922 = vmatpush1.msra.mxu0 0.0
    %1923 = vmatprep.subr.mxu0 0.0
    %1924 = vmatpush1.msra.mxu0 0.0
    %1925 = vmatprep.mubr.f32.mxu0 0.0
    %1926 = vmatmul.mubr.f32.gmra.mrb[0].mxu0 %v1859
    %v1927 = vpop.f32.mrb[0].mxu0
    %v1928 = vadd.f32 0.0, %v1927
    %v1929 = vpop.f32.mrb[0].mxu0
    %1930 = vdwg.mxu0
    %v1931 = vadd.f32 %v1689, %v1928
    %1932 = vrot.lane.b32.xlu0 %v254, 104
    %v1933 = vpop.permute.xlu0 %1932
    %1934 = vrot.lane.b32.xlu0 %v254, 72
    %v1935 = vpop.permute.xlu0 %1934
    %v1936 = vsel %vm260, %v1933, 0
    %v1938 = vsel %vm260, %v1935, 0
    %1940 = vmatprep.subr.mxu0 0.0
    %1941 = vmatpush1.xpose.msra.mxu0 %v1938
    %1942 = vmatprep.subr.mxu0 0.0
    %1943 = vmatpush1.xpose.msra.mxu0 0.0
    %1944 = vmatprep.subr.mxu0 0.0
    %1945 = vmatpush1.xpose.msra.mxu0 0.0
    %1946 = vmatprep.subr.mxu0 0.0
    %1947 = vmatpush1.xpose.msra.mxu0 0.0
    %1948 = vmatprep.subr.mxu0 0.0
    %1949 = vmatpush1.xpose.msra.mxu0 0.0
    %1950 = vmatprep.subr.mxu0 0.0
    %1951 = vmatpush1.xpose.msra.mxu0 0.0
    %1952 = vmatprep.subr.mxu0 0.0
    %1953 = vmatpush1.xpose.msra.mxu0 0.0
    %1954 = vmatprep.subr.mxu0 0.0
    %1955 = vmatpush1.xpose.msra.mxu0 0.0
    %1956 = vmatprep.subr.mxu0 0.0
    %1957 = vmatpush1.xpose.msra.mxu0 0.0
    %1958 = vmatprep.subr.mxu0 0.0
    %1959 = vmatpush1.xpose.msra.mxu0 0.0
    %1960 = vmatprep.subr.mxu0 0.0
    %1961 = vmatpush1.xpose.msra.mxu0 0.0
    %1962 = vmatprep.subr.mxu0 0.0
    %1963 = vmatpush1.xpose.msra.mxu0 0.0
    %1964 = vmatprep.subr.mxu0 0.0
    %1965 = vmatpush1.xpose.msra.mxu0 0.0
    %1966 = vmatprep.subr.mxu0 0.0
    %1967 = vmatpush1.xpose.msra.mxu0 0.0
    %1968 = vmatprep.subr.mxu0 0.0
    %1969 = vmatpush1.xpose.msra.mxu0 0.0
    %1970 = vmatprep.subr.mxu0 0.0
    %1971 = vmatpush1.xpose.msra.mxu0 0.0
    %1972 = vmatprep.subr.mxu0 0.0
    %1973 = vmatpush1.xpose.msra.mxu0 0.0
    %1974 = vmatprep.subr.mxu0 0.0
    %1975 = vmatpush1.xpose.msra.mxu0 0.0
    %1976 = vmatprep.subr.mxu0 0.0
    %1977 = vmatpush1.xpose.msra.mxu0 0.0
    %1978 = vmatprep.subr.mxu0 0.0
    %1979 = vmatpush1.xpose.msra.mxu0 0.0
    %1980 = vmatprep.subr.mxu0 0.0
    %1981 = vmatpush1.xpose.msra.mxu0 0.0
    %1982 = vmatprep.subr.mxu0 0.0
    %1983 = vmatpush1.xpose.msra.mxu0 0.0
    %1984 = vmatprep.subr.mxu0 0.0
    %1985 = vmatpush1.xpose.msra.mxu0 0.0
    %1986 = vmatprep.subr.mxu0 0.0
    %1987 = vmatpush1.xpose.msra.mxu0 0.0
    %1988 = vmatprep.subr.mxu0 0.0
    %1989 = vmatpush1.xpose.msra.mxu0 0.0
    %1990 = vmatprep.subr.mxu0 0.0
    %1991 = vmatpush1.xpose.msra.mxu0 0.0
    %1992 = vmatprep.subr.mxu0 0.0
    %1993 = vmatpush1.xpose.msra.mxu0 0.0
    %1994 = vmatprep.subr.mxu0 0.0
    %1995 = vmatpush1.xpose.msra.mxu0 0.0
    %1996 = vmatprep.subr.mxu0 0.0
    %1997 = vmatpush1.xpose.msra.mxu0 0.0
    %1998 = vmatprep.subr.mxu0 0.0
    %1999 = vmatpush1.xpose.msra.mxu0 0.0
    %2000 = vmatprep.subr.mxu0 0.0
    %2001 = vmatpush1.xpose.msra.mxu0 0.0
    %2002 = vmatprep.subr.mxu0 0.0
    %2003 = vmatpush1.xpose.msra.mxu0 0.0
    %2004 = vmatprep.mubr.f32.mxu0 0.0
    %2005 = vmatmul.mubr.f32.gmra.mrb[0].mxu0 %v1936
    %v2006 = vpop.f32.mrb[0].mxu0
    %v2007 = vadd.f32 0.0, %v2006
    %v2008 = vpop.f32.mrb[0].mxu0
    %2009 = vdwg.mxu0
    %v2010 = vmul.f32 %v2007, 0.35355338
    %v2011 = vsel %vm260, %v2010, -inf
    %2012 = vmax.xlane.f32.xlu0 %v2011
    %v2013 = vpop.xlane.xlu0 %2012
    %v2014 = vsub.f32 %v2010, %v2013
    %v2015 = vmul.f32 %v2014, 1.442695
    %v2016 = vpow.pop %v2015
    %v2017 = vsel %vm260, %v2016, 0.0
    %2018 = vadd.xlane.f32.xlu0 %v2017
    %v2019 = vpop.xlane.xlu0 %2018
    %v2020 = vrcp.pop %v2019
    %v2021 = vmul.f32 %v2016, %v2020
    %2022 = vrot.lane.b32.xlu0 %v254, 40
    %v2023 = vpop.permute.xlu0 %2022
    %v2026 = vsel %vm260, %v2021, 0
    %2028 = vmatprep.subr.mxu0 0.0
    %2029 = vmatpush1.msra.mxu0 %v2023
    %2030 = vmatprep.subr.mxu0 0.0
    %2031 = vmatpush1.msra.mxu0 0.0
    %2032 = vmatprep.subr.mxu0 0.0
    %2033 = vmatpush1.msra.mxu0 0.0
    %2034 = vmatprep.subr.mxu0 0.0
    %2035 = vmatpush1.msra.mxu0 0.0
    %2036 = vmatprep.subr.mxu0 0.0
    %2037 = vmatpush1.msra.mxu0 0.0
    %2038 = vmatprep.subr.mxu0 0.0
    %2039 = vmatpush1.msra.mxu0 0.0
    %2040 = vmatprep.subr.mxu0 0.0
    %2041 = vmatpush1.msra.mxu0 0.0
    %2042 = vmatprep.subr.mxu0 0.0
    %2043 = vmatpush1.msra.mxu0 0.0
    %2044 = vmatprep.subr.mxu0 0.0
    %2045 = vmatpush1.msra.mxu0 0.0
    %2046 = vmatprep.subr.mxu0 0.0
    %2047 = vmatpush1.msra.mxu0 0.0
    %2048 = vmatprep.subr.mxu0 0.0
    %2049 = vmatpush1.msra.mxu0 0.0
    %2050 = vmatprep.subr.mxu0 0.0
    %2051 = vmatpush1.msra.mxu0 0.0
    %2052 = vmatprep.subr.mxu0 0.0
    %2053 = vmatpush1.msra.mxu0 0.0
    %2054 = vmatprep.subr.mxu0 0.0
    %2055 = vmatpush1.msra.mxu0 0.0
    %2056 = vmatprep.subr.mxu0 0.0
    %2057 = vmatpush1.msra.mxu0 0.0
    %2058 = vmatprep.subr.mxu0 0.0
    %2059 = vmatpush1.msra.mxu0 0.0
    %2060 = vmatprep.subr.mxu0 0.0
    %2061 = vmatpush1.msra.mxu0 0.0
    %2062 = vmatprep.subr.mxu0 0.0
    %2063 = vmatpush1.msra.mxu0 0.0
    %2064 = vmatprep.subr.mxu0 0.0
    %2065 = vmatpush1.msra.mxu0 0.0
    %2066 = vmatprep.subr.mxu0 0.0
    %2067 = vmatpush1.msra.mxu0 0.0
    %2068 = vmatprep.subr.mxu0 0.0
    %2069 = vmatpush1.msra.mxu0 0.0
    %2070 = vmatprep.subr.mxu0 0.0
    %2071 = vmatpush1.msra.mxu0 0.0
    %2072 = vmatprep.subr.mxu0 0.0
    %2073 = vmatpush1.msra.mxu0 0.0
    %2074 = vmatprep.subr.mxu0 0.0
    %2075 = vmatpush1.msra.mxu0 0.0
    %2076 = vmatprep.subr.mxu0 0.0
    %2077 = vmatpush1.msra.mxu0 0.0
    %2078 = vmatprep.subr.mxu0 0.0
    %2079 = vmatpush1.msra.mxu0 0.0
    %2080 = vmatprep.subr.mxu0 0.0
    %2081 = vmatpush1.msra.mxu0 0.0
    %2082 = vmatprep.subr.mxu0 0.0
    %2083 = vmatpush1.msra.mxu0 0.0
    %2084 = vmatprep.subr.mxu0 0.0
    %2085 = vmatpush1.msra.mxu0 0.0
    %2086 = vmatprep.subr.mxu0 0.0
    %2087 = vmatpush1.msra.mxu0 0.0
    %2088 = vmatprep.subr.mxu0 0.0
    %2089 = vmatpush1.msra.mxu0 0.0
    %2090 = vmatprep.subr.mxu0 0.0
    %2091 = vmatpush1.msra.mxu0 0.0
    %2092 = vmatprep.mubr.f32.mxu0 0.0
    %2093 = vmatmul.mubr.f32.gmra.mrb[0].mxu0 %v2026
    %v2094 = vpop.f32.mrb[0].mxu0
    %v2095 = vadd.f32 0.0, %v2094
    %v2096 = vpop.f32.mrb[0].mxu0
    %2097 = vdwg.mxu0
    %v2099 = vsel %vm260, %v2095, 0
    %2101 = vmatprep.subr.mxu0 0.0
    %2102 = vmatpush1.msra.mxu0 %v167
    %2103 = vmatprep.subr.mxu0 0.0
    %2104 = vmatpush1.msra.mxu0 0.0
    %2105 = vmatprep.subr.mxu0 0.0
    %2106 = vmatpush1.msra.mxu0 0.0
    %2107 = vmatprep.subr.mxu0 0.0
    %2108 = vmatpush1.msra.mxu0 0.0
    %2109 = vmatprep.subr.mxu0 0.0
    %2110 = vmatpush1.msra.mxu0 0.0
    %2111 = vmatprep.subr.mxu0 0.0
    %2112 = vmatpush1.msra.mxu0 0.0
    %2113 = vmatprep.subr.mxu0 0.0
    %2114 = vmatpush1.msra.mxu0 0.0
    %2115 = vmatprep.subr.mxu0 0.0
    %2116 = vmatpush1.msra.mxu0 0.0
    %2117 = vmatprep.subr.mxu0 0.0
    %2118 = vmatpush1.msra.mxu0 0.0
    %2119 = vmatprep.subr.mxu0 0.0
    %2120 = vmatpush1.msra.mxu0 0.0
    %2121 = vmatprep.subr.mxu0 0.0
    %2122 = vmatpush1.msra.mxu0 0.0
    %2123 = vmatprep.subr.mxu0 0.0
    %2124 = vmatpush1.msra.mxu0 0.0
    %2125 = vmatprep.subr.mxu0 0.0
    %2126 = vmatpush1.msra.mxu0 0.0
    %2127 = vmatprep.subr.mxu0 0.0
    %2128 = vmatpush1.msra.mxu0 0.0
    %2129 = vmatprep.subr.mxu0 0.0
    %2130 = vmatpush1.msra.mxu0 0.0
    %2131 = vmatprep.subr.mxu0 0.0
    %2132 = vmatpush1.msra.mxu0 0.0
    %2133 = vmatprep.subr.mxu0 0.0
    %2134 = vmatpush1.msra.mxu0 0.0
    %2135 = vmatprep.subr.mxu0 0.0
    %2136 = vmatpush1.msra.mxu0 0.0
    %2137 = vmatprep.subr.mxu0 0.0
    %2138 = vmatpush1.msra.mxu0 0.0
    %2139 = vmatprep.subr.mxu0 0.0
    %2140 = vmatpush1.msra.mxu0 0.0
    %2141 = vmatprep.subr.mxu0 0.0
    %2142 = vmatpush1.msra.mxu0 0.0
    %2143 = vmatprep.subr.mxu0 0.0
    %2144 = vmatpush1.msra.mxu0 0.0
    %2145 = vmatprep.subr.mxu0 0.0
    %2146 = vmatpush1.msra.mxu0 0.0
    %2147 = vmatprep.subr.mxu0 0.0
    %2148 = vmatpush1.msra.mxu0 0.0
    %2149 = vmatprep.subr.mxu0 0.0
    %2150 = vmatpush1.msra.mxu0 0.0
    %2151 = vmatprep.subr.mxu0 0.0
    %2152 = vmatpush1.msra.mxu0 0.0
    %2153 = vmatprep.subr.mxu0 0.0
    %2154 = vmatpush1.msra.mxu0 0.0
    %2155 = vmatprep.subr.mxu0 0.0
    %2156 = vmatpush1.msra.mxu0 0.0
    %2157 = vmatprep.subr.mxu0 0.0
    %2158 = vmatpush1.msra.mxu0 0.0
    %2159 = vmatprep.subr.mxu0 0.0
    %2160 = vmatpush1.msra.mxu0 0.0
    %2161 = vmatprep.subr.mxu0 0.0
    %2162 = vmatpush1.msra.mxu0 0.0
    %2163 = vmatprep.subr.mxu0 0.0
    %2164 = vmatpush1.msra.mxu0 0.0
    %2165 = vmatprep.mubr.f32.mxu0 0.0
    %2166 = vmatmul.mubr.f32.gmra.mrb[0].mxu0 %v2099
    %v2167 = vpop.f32.mrb[0].mxu0
    %v2168 = vadd.f32 0.0, %v2167
    %v2169 = vpop.f32.mrb[0].mxu0
    %2170 = vdwg.mxu0
    %v2171 = vadd.f32 %v1931, %v2168
    %v2172 = vld [vmem:[%s8] sm:$0x1]
    %v2174 = vlaneseq
    %v2175 = vshrl.u32 %v2174, 7
    %v2176 = vsub.s32 0, %v2175
    %v2177 = vrot.slane %v2172, %v2176
    %v2179 = vadd.f32 %v1214, %v2177
    %v2180 = vadd.f32 %v2171, %v2177
    %v2181 = vadd.f32 %v158, %v2179
    %v2182 = vadd.f32 %v159, %v2180
    %v2183 = vld [vmem:[%s9] sm:$0x1]
    %v2184 = vld [vmem:[%s10] sm:$0x1]
    %v2185 = vsel %vm175, %v2181, 0.0
    %2186 = vadd.xlane.f32.xlu0 %v2185
    %v2187 = vpop.xlane.xlu0 %2186
    %v2188 = vsel %vm175, %v2182, 0.0
    %2189 = vadd.xlane.f32.xlu0 %v2188
    %v2190 = vpop.xlane.xlu0 %2189
    %v2191 = vrcp.pop 32.0
    %v2192 = vmul.f32 %v2187, %v2191
    %v2193 = vmul.f32 %v2190, %v2191
    %v2194 = vsub.f32 %v2181, %v2192
    %v2195 = vsub.f32 %v2182, %v2193
    %v2196 = vmul.f32 %v2194, %v2194
    %v2197 = vmul.f32 %v2195, %v2195
    %v2198 = vsel %vm175, %v2196, 0.0
    %2199 = vadd.xlane.f32.xlu0 %v2198
    %v2200 = vpop.xlane.xlu0 %2199
    %v2201 = vsel %vm175, %v2197, 0.0
    %2202 = vadd.xlane.f32.xlu0 %v2201
    %v2203 = vpop.xlane.xlu0 %2202
    %v2204 = vmul.f32 %v2200, %v2191
    %v2205 = vmul.f32 %v2203, %v2191
    %v2206 = vadd.f32 %v2204, 1e-05
    %v2207 = vadd.f32 %v2205, 1e-05
    %v2208 = vrsqrt.pop %v2206
    %v2209 = vrsqrt.pop %v2207
    %v2210 = vmul.f32 %v2194, %v2208
    %v2211 = vmul.f32 %v2195, %v2209
    %v2213 = vlaneseq
    %v2214 = vshrl.u32 %v2213, 7
    %v2215 = vsub.s32 0, %v2214
    %v2216 = vrot.slane %v2183, %v2215
    %v2218 = vmul.f32 %v2210, %v2216
    %v2219 = vmul.f32 %v2211, %v2216
    %v2221 = vlaneseq
    %v2222 = vshrl.u32 %v2221, 7
    %v2223 = vsub.s32 0, %v2222
    %v2224 = vrot.slane %v2184, %v2223
    %v2226 = vadd.f32 %v2218, %v2224
    %v2227 = vadd.f32 %v2219, %v2224
    %v2228 = vld [vmem:[%s11] sm:$0xff]
    %v2229 = vld [vmem:[%s11 + $0x8] sm:$0xff]
    %v2230 = vld [vmem:[%s11 + $0x10] sm:$0xff]
    %v2231 = vld [vmem:[%s11 + $0x18] sm:$0xff]
    %v2232 = vld [vmem:[%s12] sm:$0x1]
    %v2234 = vlaneseq
    %v2235 = vshrl.u32 %v2234, 7
    %v2236 = vsub.s32 0, %v2235
    %v2237 = vrot.slane %v2232, %v2236
    %v2240 = vsel %vm175, %v2226, 0
    %v2243 = vsel %vm175, %v2227, 0
    %2245 = vmatprep.subr.mxu0 0.0
    %2246 = vmatpush1.msra.mxu0 %v2228
    %2247 = vmatprep.subr.mxu0 0.0
    %2248 = vmatpush1.msra.mxu0 %v2229
    %2249 = vmatprep.subr.mxu0 0.0
    %2250 = vmatpush1.msra.mxu0 %v2230
    %2251 = vmatprep.subr.mxu0 0.0
    %2252 = vmatpush1.msra.mxu0 %v2231
    %2253 = vmatprep.subr.mxu0 0.0
    %2254 = vmatpush1.msra.mxu0 0.0
    %2255 = vmatprep.subr.mxu0 0.0
    %2256 = vmatpush1.msra.mxu0 0.0
    %2257 = vmatprep.subr.mxu0 0.0
    %2258 = vmatpush1.msra.mxu0 0.0
    %2259 = vmatprep.subr.mxu0 0.0
    %2260 = vmatpush1.msra.mxu0 0.0
    %2261 = vmatprep.subr.mxu0 0.0
    %2262 = vmatpush1.msra.mxu0 0.0
    %2263 = vmatprep.subr.mxu0 0.0
    %2264 = vmatpush1.msra.mxu0 0.0
    %2265 = vmatprep.subr.mxu0 0.0
    %2266 = vmatpush1.msra.mxu0 0.0
    %2267 = vmatprep.subr.mxu0 0.0
    %2268 = vmatpush1.msra.mxu0 0.0
    %2269 = vmatprep.subr.mxu0 0.0
    %2270 = vmatpush1.msra.mxu0 0.0
    %2271 = vmatprep.subr.mxu0 0.0
    %2272 = vmatpush1.msra.mxu0 0.0
    %2273 = vmatprep.subr.mxu0 0.0
    %2274 = vmatpush1.msra.mxu0 0.0
    %2275 = vmatprep.subr.mxu0 0.0
    %2276 = vmatpush1.msra.mxu0 0.0
    %2277 = vmatprep.subr.mxu0 0.0
    %2278 = vmatpush1.msra.mxu0 0.0
    %2279 = vmatprep.subr.mxu0 0.0
    %2280 = vmatpush1.msra.mxu0 0.0
    %2281 = vmatprep.subr.mxu0 0.0
    %2282 = vmatpush1.msra.mxu0 0.0
    %2283 = vmatprep.subr.mxu0 0.0
    %2284 = vmatpush1.msra.mxu0 0.0
    %2285 = vmatprep.subr.mxu0 0.0
    %2286 = vmatpush1.msra.mxu0 0.0
    %2287 = vmatprep.subr.mxu0 0.0
    %2288 = vmatpush1.msra.mxu0 0.0
    %2289 = vmatprep.subr.mxu0 0.0
    %2290 = vmatpush1.msra.mxu0 0.0
    %2291 = vmatprep.subr.mxu0 0.0
    %2292 = vmatpush1.msra.mxu0 0.0
    %2293 = vmatprep.subr.mxu0 0.0
    %2294 = vmatpush1.msra.mxu0 0.0
    %2295 = vmatprep.subr.mxu0 0.0
    %2296 = vmatpush1.msra.mxu0 0.0
    %2297 = vmatprep.subr.mxu0 0.0
    %2298 = vmatpush1.msra.mxu0 0.0
    %2299 = vmatprep.subr.mxu0 0.0
    %2300 = vmatpush1.msra.mxu0 0.0
    %2301 = vmatprep.subr.mxu0 0.0
    %2302 = vmatpush1.msra.mxu0 0.0
    %2303 = vmatprep.subr.mxu0 0.0
    %2304 = vmatpush1.msra.mxu0 0.0
    %2305 = vmatprep.subr.mxu0 0.0
    %2306 = vmatpush1.msra.mxu0 0.0
    %2307 = vmatprep.subr.mxu0 0.0
    %2308 = vmatpush1.msra.mxu0 0.0
    %2309 = vmatprep.mubr.f32.mxu0 0.0
    %2310 = vmatmul.mubr.f32.gmra.mrb[0].mxu0 %v2240
    %v2311 = vpop.f32.mrb[0].mxu0
    %v2312 = vadd.f32 %v2237, %v2311
    %v2313 = vpop.f32.mrb[0].mxu0
    %2314 = vmatprep.mubr.f32.mxu0 0.0
    %2315 = vmatmul.mubr.f32.gmra.mrb[0].mxu0 %v2243
    %v2316 = vpop.f32.mrb[0].mxu0
    %v2317 = vadd.f32 %v2237, %v2316
    %v2318 = vpop.f32.mrb[0].mxu0
    %2319 = vdwg.mxu0
    %v2320 = vmax.f32 %v2312, 0.0
    %v2321 = vmax.f32 %v2317, 0.0
    %v2322 = vld [vmem:[%s13] sm:$0xff]
    %v2323 = vld [vmem:[%s13 + $0x8] sm:$0xff]
    %v2324 = vld [vmem:[%s13 + $0x10] sm:$0xff]
    %v2325 = vld [vmem:[%s13 + $0x18] sm:$0xff]
    %v2326 = vld [vmem:[%s13 + $0x20] sm:$0xff]
    %v2327 = vld [vmem:[%s13 + $0x28] sm:$0xff]
    %v2328 = vld [vmem:[%s13 + $0x30] sm:$0xff]
    %v2329 = vld [vmem:[%s13 + $0x38] sm:$0xff]
    %v2330 = vld [vmem:[%s14] sm:$0x1]
    %v2332 = vlaneseq
    %v2333 = vshrl.u32 %v2332, 7
    %v2334 = vsub.s32 0, %v2333
    %v2335 = vrot.slane %v2330, %v2334
    %vm2337 = vcmask 523264
    %v2339 = vsel %vm2337, %v2320, 0
    %v2342 = vsel %vm2337, %v2321, 0
    %2344 = vmatprep.subr.mxu0 0.0
    %2345 = vmatpush1.msra.mxu0 %v2322
    %2346 = vmatprep.subr.mxu0 0.0
    %2347 = vmatpush1.msra.mxu0 %v2323
    %2348 = vmatprep.subr.mxu0 0.0
    %2349 = vmatpush1.msra.mxu0 %v2324
    %2350 = vmatprep.subr.mxu0 0.0
    %2351 = vmatpush1.msra.mxu0 %v2325
    %2352 = vmatprep.subr.mxu0 0.0
    %2353 = vmatpush1.msra.mxu0 %v2326
    %2354 = vmatprep.subr.mxu0 0.0
    %2355 = vmatpush1.msra.mxu0 %v2327
    %2356 = vmatprep.subr.mxu0 0.0
    %2357 = vmatpush1.msra.mxu0 %v2328
    %2358 = vmatprep.subr.mxu0 0.0
    %2359 = vmatpush1.msra.mxu0 %v2329
    %2360 = vmatprep.subr.mxu0 0.0
    %2361 = vmatpush1.msra.mxu0 0.0
    %2362 = vmatprep.subr.mxu0 0.0
    %2363 = vmatpush1.msra.mxu0 0.0
    %2364 = vmatprep.subr.mxu0 0.0
    %2365 = vmatpush1.msra.mxu0 0.0
    %2366 = vmatprep.subr.mxu0 0.0
    %2367 = vmatpush1.msra.mxu0 0.0
    %2368 = vmatprep.subr.mxu0 0.0
    %2369 = vmatpush1.msra.mxu0 0.0
    %2370 = vmatprep.subr.mxu0 0.0
    %2371 = vmatpush1.msra.mxu0 0.0
    %2372 = vmatprep.subr.mxu0 0.0
    %2373 = vmatpush1.msra.mxu0 0.0
    %2374 = vmatprep.subr.mxu0 0.0
    %2375 = vmatpush1.msra.mxu0 0.0
    %2376 = vmatprep.subr.mxu0 0.0
    %2377 = vmatpush1.msra.mxu0 0.0
    %2378 = vmatprep.subr.mxu0 0.0
    %2379 = vmatpush1.msra.mxu0 0.0
    %2380 = vmatprep.subr.mxu0 0.0
    %2381 = vmatpush1.msra.mxu0 0.0
    %2382 = vmatprep.subr.mxu0 0.0
    %2383 = vmatpush1.msra.mxu0 0.0
    %2384 = vmatprep.subr.mxu0 0.0
    %2385 = vmatpush1.msra.mxu0 0.0
    %2386 = vmatprep.subr.mxu0 0.0
    %2387 = vmatpush1.msra.mxu0 0.0
    %2388 = vmatprep.subr.mxu0 0.0
    %2389 = vmatpush1.msra.mxu0 0.0
    %2390 = vmatprep.subr.mxu0 0.0
    %2391 = vmatpush1.msra.mxu0 0.0
    %2392 = vmatprep.subr.mxu0 0.0
    %2393 = vmatpush1.msra.mxu0 0.0
    %2394 = vmatprep.subr.mxu0 0.0
    %2395 = vmatpush1.msra.mxu0 0.0
    %2396 = vmatprep.subr.mxu0 0.0
    %2397 = vmatpush1.msra.mxu0 0.0
    %2398 = vmatprep.subr.mxu0 0.0
    %2399 = vmatpush1.msra.mxu0 0.0
    %2400 = vmatprep.subr.mxu0 0.0
    %2401 = vmatpush1.msra.mxu0 0.0
    %2402 = vmatprep.subr.mxu0 0.0
    %2403 = vmatpush1.msra.mxu0 0.0
    %2404 = vmatprep.subr.mxu0 0.0
    %2405 = vmatpush1.msra.mxu0 0.0
    %2406 = vmatprep.subr.mxu0 0.0
    %2407 = vmatpush1.msra.mxu0 0.0
    %2408 = vmatprep.mubr.f32.mxu0 0.0
    %2409 = vmatmul.mubr.f32.gmra.mrb[0].mxu0 %v2339
    %v2410 = vpop.f32.mrb[0].mxu0
    %v2411 = vadd.f32 %v2335, %v2410
    %v2412 = vpop.f32.mrb[0].mxu0
    %2413 = vmatprep.mubr.f32.mxu0 0.0
    %2414 = vmatmul.mubr.f32.gmra.mrb[0].mxu0 %v2342
    %v2415 = vpop.f32.mrb[0].mxu0
    %v2416 = vadd.f32 %v2335, %v2415
    %v2417 = vpop.f32.mrb[0].mxu0
    %2418 = vdwg.mxu0
    %v2419 = vadd.f32 %v2226, %v2411
    %v2420 = vadd.f32 %v2227, %v2416
    %v2421 = vld [vmem:[%s15] sm:$0x1]
    %v2422 = vld [vmem:[%s16] sm:$0x1]
    %v2423 = vsel %vm175, %v2419, 0.0
    %2424 = vadd.xlane.f32.xlu0 %v2423
    %v2425 = vpop.xlane.xlu0 %2424
    %v2426 = vsel %vm175, %v2420, 0.0
    %2427 = vadd.xlane.f32.xlu0 %v2426
    %v2428 = vpop.xlane.xlu0 %2427
    %v2429 = vmul.f32 %v2425, %v2191
    %v2430 = vmul.f32 %v2428, %v2191
    %v2431 = vsub.f32 %v2419, %v2429
    %v2432 = vsub.f32 %v2420, %v2430
    %v2433 = vmul.f32 %v2431, %v2431
    %v2434 = vmul.f32 %v2432, %v2432
    %v2435 = vsel %vm175, %v2433, 0.0
    %2436 = vadd.xlane.f32.xlu0 %v2435
    %v2437 = vpop.xlane.xlu0 %2436
    %v2438 = vsel %vm175, %v2434, 0.0
    %2439 = vadd.xlane.f32.xlu0 %v2438
    %v2440 = vpop.xlane.xlu0 %2439
    %v2441 = vmul.f32 %v2437, %v2191
    %v2442 = vmul.f32 %v2440, %v2191
    %v2443 = vadd.f32 %v2441, 1e-05
    %v2444 = vadd.f32 %v2442, 1e-05
    %v2445 = vrsqrt.pop %v2443
    %v2446 = vrsqrt.pop %v2444
    %v2447 = vmul.f32 %v2431, %v2445
    %v2448 = vmul.f32 %v2432, %v2446
    %v2450 = vlaneseq
    %v2451 = vshrl.u32 %v2450, 7
    %v2452 = vsub.s32 0, %v2451
    %v2453 = vrot.slane %v2421, %v2452
    %v2455 = vmul.f32 %v2447, %v2453
    %v2456 = vmul.f32 %v2448, %v2453
    %v2458 = vlaneseq
    %v2459 = vshrl.u32 %v2458, 7
    %v2460 = vsub.s32 0, %v2459
    %v2461 = vrot.slane %v2422, %v2460
    %v2463 = vadd.f32 %v2455, %v2461
    %v2464 = vadd.f32 %v2456, %v2461
    %s2465 = scalar_lea.vmem %s5, 32
    %v2466 = vld [vmem:[%s2465] sm:$0xff]
    %v2467 = vld [vmem:[%s2465 + $0x8] sm:$0xff]
    %v2468 = vld [vmem:[%s2465 + $0x10] sm:$0xff]
    %v2469 = vld [vmem:[%s2465 + $0x18] sm:$0xff]
    %s2470 = scalar_lea.vmem %s7, 32
    %v2471 = vld [vmem:[%s2470] sm:$0xff]
    %v2472 = vld [vmem:[%s2470 + $0x8] sm:$0xff]
    %v2473 = vld [vmem:[%s2470 + $0x10] sm:$0xff]
    %v2474 = vld [vmem:[%s2470 + $0x18] sm:$0xff]
    %s2475 = scalar_lea.vmem %s6, 1
    %v2476 = vld [vmem:[%s2475] sm:$0x1]
    %v2478 = vlaneseq
    %v2479 = vshrl.u32 %v2478, 7
    %v2480 = vsub.s32 0, %v2479
    %v2481 = vrot.slane %v2476, %v2480
    %v2484 = vsel %vm175, %v2463, 0
    %v2487 = vsel %vm175, %v2464, 0
    %2489 = vmatprep.subr.mxu0 0.0
    %2490 = vmatpush1.msra.mxu0 %v2466
    %2491 = vmatprep.subr.mxu0 0.0
    %2492 = vmatpush1.msra.mxu0 %v2467
    %2493 = vmatprep.subr.mxu0 0.0
    %2494 = vmatpush1.msra.mxu0 %v2468
    %2495 = vmatprep.subr.mxu0 0.0
    %2496 = vmatpush1.msra.mxu0 %v2469
    %2497 = vmatprep.subr.mxu0 0.0
    %2498 = vmatpush1.msra.mxu0 0.0
    %2499 = vmatprep.subr.mxu0 0.0
    %2500 = vmatpush1.msra.mxu0 0.0
    %2501 = vmatprep.subr.mxu0 0.0
    %2502 = vmatpush1.msra.mxu0 0.0
    %2503 = vmatprep.subr.mxu0 0.0
    %2504 = vmatpush1.msra.mxu0 0.0
    %2505 = vmatprep.subr.mxu0 0.0
    %2506 = vmatpush1.msra.mxu0 0.0
    %2507 = vmatprep.subr.mxu0 0.0
    %2508 = vmatpush1.msra.mxu0 0.0
    %2509 = vmatprep.subr.mxu0 0.0
    %2510 = vmatpush1.msra.mxu0 0.0
    %2511 = vmatprep.subr.mxu0 0.0
    %2512 = vmatpush1.msra.mxu0 0.0
    %2513 = vmatprep.subr.mxu0 0.0
    %2514 = vmatpush1.msra.mxu0 0.0
    %2515 = vmatprep.subr.mxu0 0.0
    %2516 = vmatpush1.msra.mxu0 0.0
    %2517 = vmatprep.subr.mxu0 0.0
    %2518 = vmatpush1.msra.mxu0 0.0
    %2519 = vmatprep.subr.mxu0 0.0
    %2520 = vmatpush1.msra.mxu0 0.0
    %2521 = vmatprep.subr.mxu0 0.0
    %2522 = vmatpush1.msra.mxu0 0.0
    %2523 = vmatprep.subr.mxu0 0.0
    %2524 = vmatpush1.msra.mxu0 0.0
    %2525 = vmatprep.subr.mxu0 0.0
    %2526 = vmatpush1.msra.mxu0 0.0
    %2527 = vmatprep.subr.mxu0 0.0
    %2528 = vmatpush1.msra.mxu0 0.0
    %2529 = vmatprep.subr.mxu0 0.0
    %2530 = vmatpush1.msra.mxu0 0.0
    %2531 = vmatprep.subr.mxu0 0.0
    %2532 = vmatpush1.msra.mxu0 0.0
    %2533 = vmatprep.subr.mxu0 0.0
    %2534 = vmatpush1.msra.mxu0 0.0
    %2535 = vmatprep.subr.mxu0 0.0
    %2536 = vmatpush1.msra.mxu0 0.0
    %2537 = vmatprep.subr.mxu0 0.0
    %2538 = vmatpush1.msra.mxu0 0.0
    %2539 = vmatprep.subr.mxu0 0.0
    %2540 = vmatpush1.msra.mxu0 0.0
    %2541 = vmatprep.subr.mxu0 0.0
    %2542 = vmatpush1.msra.mxu0 0.0
    %2543 = vmatprep.subr.mxu0 0.0
    %2544 = vmatpush1.msra.mxu0 0.0
    %2545 = vmatprep.subr.mxu0 0.0
    %2546 = vmatpush1.msra.mxu0 0.0
    %2547 = vmatprep.subr.mxu0 0.0
    %2548 = vmatpush1.msra.mxu0 0.0
    %2549 = vmatprep.subr.mxu0 0.0
    %2550 = vmatpush1.msra.mxu0 0.0
    %2551 = vmatprep.subr.mxu0 0.0
    %2552 = vmatpush1.msra.mxu0 0.0
    %2553 = vmatprep.mubr.f32.mxu0 0.0
    %2554 = vmatmul.mubr.f32.gmra.mrb[0].mxu0 %v2484
    %v2555 = vpop.f32.mrb[0].mxu0
    %v2556 = vadd.f32 %v2481, %v2555
    %v2557 = vpop.f32.mrb[0].mxu0
    %2558 = vmatprep.mubr.f32.mxu0 0.0
    %2559 = vmatmul.mubr.f32.gmra.mrb[0].mxu0 %v2487
    %v2560 = vpop.f32.mrb[0].mxu0
    %v2561 = vadd.f32 %v2481, %v2560
    %v2562 = vpop.f32.mrb[0].mxu0
    %2563 = vdwg.mxu0
    %2565 = vrot.lane.b32.xlu0 %v2556, 96
    %v2566 = vpop.permute.xlu0 %2565
    %v2567 = vsel %vm260, %v2556, 0
    %v2569 = vsel %vm260, %v2566, 0
    %2571 = vmatprep.subr.mxu0 0.0
    %2572 = vmatpush1.xpose.msra.mxu0 %v2569
    %2573 = vmatprep.subr.mxu0 0.0
    %2574 = vmatpush1.xpose.msra.mxu0 0.0
    %2575 = vmatprep.subr.mxu0 0.0
    %2576 = vmatpush1.xpose.msra.mxu0 0.0
    %2577 = vmatprep.subr.mxu0 0.0
    %2578 = vmatpush1.xpose.msra.mxu0 0.0
    %2579 = vmatprep.subr.mxu0 0.0
    %2580 = vmatpush1.xpose.msra.mxu0 0.0
    %2581 = vmatprep.subr.mxu0 0.0
    %2582 = vmatpush1.xpose.msra.mxu0 0.0
    %2583 = vmatprep.subr.mxu0 0.0
    %2584 = vmatpush1.xpose.msra.mxu0 0.0
    %2585 = vmatprep.subr.mxu0 0.0
    %2586 = vmatpush1.xpose.msra.mxu0 0.0
    %2587 = vmatprep.subr.mxu0 0.0
    %2588 = vmatpush1.xpose.msra.mxu0 0.0
    %2589 = vmatprep.subr.mxu0 0.0
    %2590 = vmatpush1.xpose.msra.mxu0 0.0
    %2591 = vmatprep.subr.mxu0 0.0
    %2592 = vmatpush1.xpose.msra.mxu0 0.0
    %2593 = vmatprep.subr.mxu0 0.0
    %2594 = vmatpush1.xpose.msra.mxu0 0.0
    %2595 = vmatprep.subr.mxu0 0.0
    %2596 = vmatpush1.xpose.msra.mxu0 0.0
    %2597 = vmatprep.subr.mxu0 0.0
    %2598 = vmatpush1.xpose.msra.mxu0 0.0
    %2599 = vmatprep.subr.mxu0 0.0
    %2600 = vmatpush1.xpose.msra.mxu0 0.0
    %2601 = vmatprep.subr.mxu0 0.0
    %2602 = vmatpush1.xpose.msra.mxu0 0.0
    %2603 = vmatprep.subr.mxu0 0.0
    %2604 = vmatpush1.xpose.msra.mxu0 0.0
    %2605 = vmatprep.subr.mxu0 0.0
    %2606 = vmatpush1.xpose.msra.mxu0 0.0
    %2607 = vmatprep.subr.mxu0 0.0
    %2608 = vmatpush1.xpose.msra.mxu0 0.0
    %2609 = vmatprep.subr.mxu0 0.0
    %2610 = vmatpush1.xpose.msra.mxu0 0.0
    %2611 = vmatprep.subr.mxu0 0.0
    %2612 = vmatpush1.xpose.msra.mxu0 0.0
    %2613 = vmatprep.subr.mxu0 0.0
    %2614 = vmatpush1.xpose.msra.mxu0 0.0
    %2615 = vmatprep.subr.mxu0 0.0
    %2616 = vmatpush1.xpose.msra.mxu0 0.0
    %2617 = vmatprep.subr.mxu0 0.0
    %2618 = vmatpush1.xpose.msra.mxu0 0.0
    %2619 = vmatprep.subr.mxu0 0.0
    %2620 = vmatpush1.xpose.msra.mxu0 0.0
    %2621 = vmatprep.subr.mxu0 0.0
    %2622 = vmatpush1.xpose.msra.mxu0 0.0
    %2623 = vmatprep.subr.mxu0 0.0
    %2624 = vmatpush1.xpose.msra.mxu0 0.0
    %2625 = vmatprep.subr.mxu0 0.0
    %2626 = vmatpush1.xpose.msra.mxu0 0.0
    %2627 = vmatprep.subr.mxu0 0.0
    %2628 = vmatpush1.xpose.msra.mxu0 0.0
    %2629 = vmatprep.subr.mxu0 0.0
    %2630 = vmatpush1.xpose.msra.mxu0 0.0
    %2631 = vmatprep.subr.mxu0 0.0
    %2632 = vmatpush1.xpose.msra.mxu0 0.0
    %2633 = vmatprep.subr.mxu0 0.0
    %2634 = vmatpush1.xpose.msra.mxu0 0.0
    %2635 = vmatprep.mubr.f32.mxu0 0.0
    %2636 = vmatmul.mubr.f32.gmra.mrb[0].mxu0 %v2567
    %v2637 = vpop.f32.mrb[0].mxu0
    %v2638 = vadd.f32 0.0, %v2637
    %v2639 = vpop.f32.mrb[0].mxu0
    %2640 = vdwg.mxu0
    %v2641 = vmul.f32 %v2638, 0.35355338
    %v2642 = vsel %vm260, %v2641, -inf
    %2643 = vmax.xlane.f32.xlu0 %v2642
    %v2644 = vpop.xlane.xlu0 %2643
    %v2645 = vsub.f32 %v2641, %v2644
    %v2646 = vmul.f32 %v2645, 1.442695
    %v2647 = vpow.pop %v2646
    %v2648 = vsel %vm260, %v2647, 0.0
    %2649 = vadd.xlane.f32.xlu0 %v2648
    %v2650 = vpop.xlane.xlu0 %2649
    %v2651 = vrcp.pop %v2650
    %v2652 = vmul.f32 %v2647, %v2651
    %2653 = vrot.lane.b32.xlu0 %v2556, 64
    %v2654 = vpop.permute.xlu0 %2653
    %v2657 = vsel %vm260, %v2652, 0
    %2659 = vmatprep.subr.mxu0 0.0
    %2660 = vmatpush1.msra.mxu0 %v2654
    %2661 = vmatprep.subr.mxu0 0.0
    %2662 = vmatpush1.msra.mxu0 0.0
    %2663 = vmatprep.subr.mxu0 0.0
    %2664 = vmatpush1.msra.mxu0 0.0
    %2665 = vmatprep.subr.mxu0 0.0
    %2666 = vmatpush1.msra.mxu0 0.0
    %2667 = vmatprep.subr.mxu0 0.0
    %2668 = vmatpush1.msra.mxu0 0.0
    %2669 = vmatprep.subr.mxu0 0.0
    %2670 = vmatpush1.msra.mxu0 0.0
    %2671 = vmatprep.subr.mxu0 0.0
    %2672 = vmatpush1.msra.mxu0 0.0
    %2673 = vmatprep.subr.mxu0 0.0
    %2674 = vmatpush1.msra.mxu0 0.0
    %2675 = vmatprep.subr.mxu0 0.0
    %2676 = vmatpush1.msra.mxu0 0.0
    %2677 = vmatprep.subr.mxu0 0.0
    %2678 = vmatpush1.msra.mxu0 0.0
    %2679 = vmatprep.subr.mxu0 0.0
    %2680 = vmatpush1.msra.mxu0 0.0
    %2681 = vmatprep.subr.mxu0 0.0
    %2682 = vmatpush1.msra.mxu0 0.0
    %2683 = vmatprep.subr.mxu0 0.0
    %2684 = vmatpush1.msra.mxu0 0.0
    %2685 = vmatprep.subr.mxu0 0.0
    %2686 = vmatpush1.msra.mxu0 0.0
    %2687 = vmatprep.subr.mxu0 0.0
    %2688 = vmatpush1.msra.mxu0 0.0
    %2689 = vmatprep.subr.mxu0 0.0
    %2690 = vmatpush1.msra.mxu0 0.0
    %2691 = vmatprep.subr.mxu0 0.0
    %2692 = vmatpush1.msra.mxu0 0.0
    %2693 = vmatprep.subr.mxu0 0.0
    %2694 = vmatpush1.msra.mxu0 0.0
    %2695 = vmatprep.subr.mxu0 0.0
    %2696 = vmatpush1.msra.mxu0 0.0
    %2697 = vmatprep.subr.mxu0 0.0
    %2698 = vmatpush1.msra.mxu0 0.0
    %2699 = vmatprep.subr.mxu0 0.0
    %2700 = vmatpush1.msra.mxu0 0.0
    %2701 = vmatprep.subr.mxu0 0.0
    %2702 = vmatpush1.msra.mxu0 0.0
    %2703 = vmatprep.subr.mxu0 0.0
    %2704 = vmatpush1.msra.mxu0 0.0
    %2705 = vmatprep.subr.mxu0 0.0
    %2706 = vmatpush1.msra.mxu0 0.0
    %2707 = vmatprep.subr.mxu0 0.0
    %2708 = vmatpush1.msra.mxu0 0.0
    %2709 = vmatprep.subr.mxu0 0.0
    %2710 = vmatpush1.msra.mxu0 0.0
    %2711 = vmatprep.subr.mxu0 0.0
    %2712 = vmatpush1.msra.mxu0 0.0
    %2713 = vmatprep.subr.mxu0 0.0
    %2714 = vmatpush1.msra.mxu0 0.0
    %2715 = vmatprep.subr.mxu0 0.0
    %2716 = vmatpush1.msra.mxu0 0.0
    %2717 = vmatprep.subr.mxu0 0.0
    %2718 = vmatpush1.msra.mxu0 0.0
    %2719 = vmatprep.subr.mxu0 0.0
    %2720 = vmatpush1.msra.mxu0 0.0
    %2721 = vmatprep.subr.mxu0 0.0
    %2722 = vmatpush1.msra.mxu0 0.0
    %2723 = vmatprep.mubr.f32.mxu0 0.0
    %2724 = vmatmul.mubr.f32.gmra.mrb[0].mxu0 %v2657
    %v2725 = vpop.f32.mrb[0].mxu0
    %v2726 = vadd.f32 0.0, %v2725
    %v2727 = vpop.f32.mrb[0].mxu0
    %2728 = vdwg.mxu0
    %2729 = vrot.lane.b32.xlu0 %v2556, 120
    %v2730 = vpop.permute.xlu0 %2729
    %2731 = vrot.lane.b32.xlu0 %v2556, 88
    %v2732 = vpop.permute.xlu0 %2731
    %v2733 = vsel %vm260, %v2730, 0
    %v2735 = vsel %vm260, %v2732, 0
    %2737 = vmatprep.subr.mxu0 0.0
    %2738 = vmatpush1.xpose.msra.mxu0 %v2735
    %2739 = vmatprep.subr.mxu0 0.0
    %2740 = vmatpush1.xpose.msra.mxu0 0.0
    %2741 = vmatprep.subr.mxu0 0.0
    %2742 = vmatpush1.xpose.msra.mxu0 0.0
    %2743 = vmatprep.subr.mxu0 0.0
    %2744 = vmatpush1.xpose.msra.mxu0 0.0
    %2745 = vmatprep.subr.mxu0 0.0
    %2746 = vmatpush1.xpose.msra.mxu0 0.0
    %2747 = vmatprep.subr.mxu0 0.0
    %2748 = vmatpush1.xpose.msra.mxu0 0.0
    %2749 = vmatprep.subr.mxu0 0.0
    %2750 = vmatpush1.xpose.msra.mxu0 0.0
    %2751 = vmatprep.subr.mxu0 0.0
    %2752 = vmatpush1.xpose.msra.mxu0 0.0
    %2753 = vmatprep.subr.mxu0 0.0
    %2754 = vmatpush1.xpose.msra.mxu0 0.0
    %2755 = vmatprep.subr.mxu0 0.0
    %2756 = vmatpush1.xpose.msra.mxu0 0.0
    %2757 = vmatprep.subr.mxu0 0.0
    %2758 = vmatpush1.xpose.msra.mxu0 0.0
    %2759 = vmatprep.subr.mxu0 0.0
    %2760 = vmatpush1.xpose.msra.mxu0 0.0
    %2761 = vmatprep.subr.mxu0 0.0
    %2762 = vmatpush1.xpose.msra.mxu0 0.0
    %2763 = vmatprep.subr.mxu0 0.0
    %2764 = vmatpush1.xpose.msra.mxu0 0.0
    %2765 = vmatprep.subr.mxu0 0.0
    %2766 = vmatpush1.xpose.msra.mxu0 0.0
    %2767 = vmatprep.subr.mxu0 0.0
    %2768 = vmatpush1.xpose.msra.mxu0 0.0
    %2769 = vmatprep.subr.mxu0 0.0
    %2770 = vmatpush1.xpose.msra.mxu0 0.0
    %2771 = vmatprep.subr.mxu0 0.0
    %2772 = vmatpush1.xpose.msra.mxu0 0.0
    %2773 = vmatprep.subr.mxu0 0.0
    %2774 = vmatpush1.xpose.msra.mxu0 0.0
    %2775 = vmatprep.subr.mxu0 0.0
    %2776 = vmatpush1.xpose.msra.mxu0 0.0
    %2777 = vmatprep.subr.mxu0 0.0
    %2778 = vmatpush1.xpose.msra.mxu0 0.0
    %2779 = vmatprep.subr.mxu0 0.0
    %2780 = vmatpush1.xpose.msra.mxu0 0.0
    %2781 = vmatprep.subr.mxu0 0.0
    %2782 = vmatpush1.xpose.msra.mxu0 0.0
    %2783 = vmatprep.subr.mxu0 0.0
    %2784 = vmatpush1.xpose.msra.mxu0 0.0
    %2785 = vmatprep.subr.mxu0 0.0
    %2786 = vmatpush1.xpose.msra.mxu0 0.0
    %2787 = vmatprep.subr.mxu0 0.0
    %2788 = vmatpush1.xpose.msra.mxu0 0.0
    %2789 = vmatprep.subr.mxu0 0.0
    %2790 = vmatpush1.xpose.msra.mxu0 0.0
    %2791 = vmatprep.subr.mxu0 0.0
    %2792 = vmatpush1.xpose.msra.mxu0 0.0
    %2793 = vmatprep.subr.mxu0 0.0
    %2794 = vmatpush1.xpose.msra.mxu0 0.0
    %2795 = vmatprep.subr.mxu0 0.0
    %2796 = vmatpush1.xpose.msra.mxu0 0.0
    %2797 = vmatprep.subr.mxu0 0.0
    %2798 = vmatpush1.xpose.msra.mxu0 0.0
    %2799 = vmatprep.subr.mxu0 0.0
    %2800 = vmatpush1.xpose.msra.mxu0 0.0
    %2801 = vmatprep.mubr.f32.mxu0 0.0
    %2802 = vmatmul.mubr.f32.gmra.mrb[0].mxu0 %v2733
    %v2803 = vpop.f32.mrb[0].mxu0
    %v2804 = vadd.f32 0.0, %v2803
    %v2805 = vpop.f32.mrb[0].mxu0
    %2806 = vdwg.mxu0
    %v2807 = vmul.f32 %v2804, 0.35355338
    %v2808 = vsel %vm260, %v2807, -inf
    %2809 = vmax.xlane.f32.xlu0 %v2808
    %v2810 = vpop.xlane.xlu0 %2809
    %v2811 = vsub.f32 %v2807, %v2810
    %v2812 = vmul.f32 %v2811, 1.442695
    %v2813 = vpow.pop %v2812
    %v2814 = vsel %vm260, %v2813, 0.0
    %2815 = vadd.xlane.f32.xlu0 %v2814
    %v2816 = vpop.xlane.xlu0 %2815
    %v2817 = vrcp.pop %v2816
    %v2818 = vmul.f32 %v2813, %v2817
    %2819 = vrot.lane.b32.xlu0 %v2556, 56
    %v2820 = vpop.permute.xlu0 %2819
    %v2823 = vsel %vm260, %v2818, 0
    %2825 = vmatprep.subr.mxu0 0.0
    %2826 = vmatpush1.msra.mxu0 %v2820
    %2827 = vmatprep.subr.mxu0 0.0
    %2828 = vmatpush1.msra.mxu0 0.0
    %2829 = vmatprep.subr.mxu0 0.0
    %2830 = vmatpush1.msra.mxu0 0.0
    %2831 = vmatprep.subr.mxu0 0.0
    %2832 = vmatpush1.msra.mxu0 0.0
    %2833 = vmatprep.subr.mxu0 0.0
    %2834 = vmatpush1.msra.mxu0 0.0
    %2835 = vmatprep.subr.mxu0 0.0
    %2836 = vmatpush1.msra.mxu0 0.0
    %2837 = vmatprep.subr.mxu0 0.0
    %2838 = vmatpush1.msra.mxu0 0.0
    %2839 = vmatprep.subr.mxu0 0.0
    %2840 = vmatpush1.msra.mxu0 0.0
    %2841 = vmatprep.subr.mxu0 0.0
    %2842 = vmatpush1.msra.mxu0 0.0
    %2843 = vmatprep.subr.mxu0 0.0
    %2844 = vmatpush1.msra.mxu0 0.0
    %2845 = vmatprep.subr.mxu0 0.0
    %2846 = vmatpush1.msra.mxu0 0.0
    %2847 = vmatprep.subr.mxu0 0.0
    %2848 = vmatpush1.msra.mxu0 0.0
    %2849 = vmatprep.subr.mxu0 0.0
    %2850 = vmatpush1.msra.mxu0 0.0
    %2851 = vmatprep.subr.mxu0 0.0
    %2852 = vmatpush1.msra.mxu0 0.0
    %2853 = vmatprep.subr.mxu0 0.0
    %2854 = vmatpush1.msra.mxu0 0.0
    %2855 = vmatprep.subr.mxu0 0.0
    %2856 = vmatpush1.msra.mxu0 0.0
    %2857 = vmatprep.subr.mxu0 0.0
    %2858 = vmatpush1.msra.mxu0 0.0
    %2859 = vmatprep.subr.mxu0 0.0
    %2860 = vmatpush1.msra.mxu0 0.0
    %2861 = vmatprep.subr.mxu0 0.0
    %2862 = vmatpush1.msra.mxu0 0.0
    %2863 = vmatprep.subr.mxu0 0.0
    %2864 = vmatpush1.msra.mxu0 0.0
    %2865 = vmatprep.subr.mxu0 0.0
    %2866 = vmatpush1.msra.mxu0 0.0
    %2867 = vmatprep.subr.mxu0 0.0
    %2868 = vmatpush1.msra.mxu0 0.0
    %2869 = vmatprep.subr.mxu0 0.0
    %2870 = vmatpush1.msra.mxu0 0.0
    %2871 = vmatprep.subr.mxu0 0.0
    %2872 = vmatpush1.msra.mxu0 0.0
    %2873 = vmatprep.subr.mxu0 0.0
    %2874 = vmatpush1.msra.mxu0 0.0
    %2875 = vmatprep.subr.mxu0 0.0
    %2876 = vmatpush1.msra.mxu0 0.0
    %2877 = vmatprep.subr.mxu0 0.0
    %2878 = vmatpush1.msra.mxu0 0.0
    %2879 = vmatprep.subr.mxu0 0.0
    %2880 = vmatpush1.msra.mxu0 0.0
    %2881 = vmatprep.subr.mxu0 0.0
    %2882 = vmatpush1.msra.mxu0 0.0
    %2883 = vmatprep.subr.mxu0 0.0
    %2884 = vmatpush1.msra.mxu0 0.0
    %2885 = vmatprep.subr.mxu0 0.0
    %2886 = vmatpush1.msra.mxu0 0.0
    %2887 = vmatprep.subr.mxu0 0.0
    %2888 = vmatpush1.msra.mxu0 0.0
    %2889 = vmatprep.mubr.f32.mxu0 0.0
    %2890 = vmatmul.mubr.f32.gmra.mrb[0].mxu0 %v2823
    %v2891 = vpop.f32.mrb[0].mxu0
    %v2892 = vadd.f32 0.0, %v2891
    %v2893 = vpop.f32.mrb[0].mxu0
    %2894 = vdwg.mxu0
    %v2896 = vsel %vm260, %v2892, 0
    %2898 = vmatprep.subr.mxu0 0.0
    %2899 = vmatpush1.msra.mxu0 %v2472
    %2900 = vmatprep.subr.mxu0 0.0
    %2901 = vmatpush1.msra.mxu0 0.0
    %2902 = vmatprep.subr.mxu0 0.0
    %2903 = vmatpush1.msra.mxu0 0.0
    %2904 = vmatprep.subr.mxu0 0.0
    %2905 = vmatpush1.msra.mxu0 0.0
    %2906 = vmatprep.subr.mxu0 0.0
    %2907 = vmatpush1.msra.mxu0 0.0
    %2908 = vmatprep.subr.mxu0 0.0
    %2909 = vmatpush1.msra.mxu0 0.0
    %2910 = vmatprep.subr.mxu0 0.0
    %2911 = vmatpush1.msra.mxu0 0.0
    %2912 = vmatprep.subr.mxu0 0.0
    %2913 = vmatpush1.msra.mxu0 0.0
    %2914 = vmatprep.subr.mxu0 0.0
    %2915 = vmatpush1.msra.mxu0 0.0
    %2916 = vmatprep.subr.mxu0 0.0
    %2917 = vmatpush1.msra.mxu0 0.0
    %2918 = vmatprep.subr.mxu0 0.0
    %2919 = vmatpush1.msra.mxu0 0.0
    %2920 = vmatprep.subr.mxu0 0.0
    %2921 = vmatpush1.msra.mxu0 0.0
    %2922 = vmatprep.subr.mxu0 0.0
    %2923 = vmatpush1.msra.mxu0 0.0
    %2924 = vmatprep.subr.mxu0 0.0
    %2925 = vmatpush1.msra.mxu0 0.0
    %2926 = vmatprep.subr.mxu0 0.0
    %2927 = vmatpush1.msra.mxu0 0.0
    %2928 = vmatprep.subr.mxu0 0.0
    %2929 = vmatpush1.msra.mxu0 0.0
    %2930 = vmatprep.subr.mxu0 0.0
    %2931 = vmatpush1.msra.mxu0 0.0
    %2932 = vmatprep.subr.mxu0 0.0
    %2933 = vmatpush1.msra.mxu0 0.0
    %2934 = vmatprep.subr.mxu0 0.0
    %2935 = vmatpush1.msra.mxu0 0.0
    %2936 = vmatprep.subr.mxu0 0.0
    %2937 = vmatpush1.msra.mxu0 0.0
    %2938 = vmatprep.subr.mxu0 0.0
    %2939 = vmatpush1.msra.mxu0 0.0
    %2940 = vmatprep.subr.mxu0 0.0
    %2941 = vmatpush1.msra.mxu0 0.0
    %2942 = vmatprep.subr.mxu0 0.0
    %2943 = vmatpush1.msra.mxu0 0.0
    %2944 = vmatprep.subr.mxu0 0.0
    %2945 = vmatpush1.msra.mxu0 0.0
    %2946 = vmatprep.subr.mxu0 0.0
    %2947 = vmatpush1.msra.mxu0 0.0
    %2948 = vmatprep.subr.mxu0 0.0
    %2949 = vmatpush1.msra.mxu0 0.0
    %2950 = vmatprep.subr.mxu0 0.0
    %2951 = vmatpush1.msra.mxu0 0.0
    %2952 = vmatprep.subr.mxu0 0.0
    %2953 = vmatpush1.msra.mxu0 0.0
    %2954 = vmatprep.subr.mxu0 0.0
    %2955 = vmatpush1.msra.mxu0 0.0
    %2956 = vmatprep.subr.mxu0 0.0
    %2957 = vmatpush1.msra.mxu0 0.0
    %2958 = vmatprep.subr.mxu0 0.0
    %2959 = vmatpush1.msra.mxu0 0.0
    %2960 = vmatprep.subr.mxu0 0.0
    %2961 = vmatpush1.msra.mxu0 0.0
    %2962 = vmatprep.mubr.f32.mxu0 0.0
    %2963 = vmatmul.mubr.f32.gmra.mrb[0].mxu0 %v2896
    %v2964 = vpop.f32.mrb[0].mxu0
    %v2965 = vadd.f32 0.0, %v2964
    %v2966 = vpop.f32.mrb[0].mxu0
    %2967 = vdwg.mxu0
    %v2969 = vsel %vm260, %v2726, 0
    %2971 = vmatprep.subr.mxu0 0.0
    %2972 = vmatpush1.msra.mxu0 %v2471
    %2973 = vmatprep.subr.mxu0 0.0
    %2974 = vmatpush1.msra.mxu0 0.0
    %2975 = vmatprep.subr.mxu0 0.0
    %2976 = vmatpush1.msra.mxu0 0.0
    %2977 = vmatprep.subr.mxu0 0.0
    %2978 = vmatpush1.msra.mxu0 0.0
    %2979 = vmatprep.subr.mxu0 0.0
    %2980 = vmatpush1.msra.mxu0 0.0
    %2981 = vmatprep.subr.mxu0 0.0
    %2982 = vmatpush1.msra.mxu0 0.0
    %2983 = vmatprep.subr.mxu0 0.0
    %2984 = vmatpush1.msra.mxu0 0.0
    %2985 = vmatprep.subr.mxu0 0.0
    %2986 = vmatpush1.msra.mxu0 0.0
    %2987 = vmatprep.subr.mxu0 0.0
    %2988 = vmatpush1.msra.mxu0 0.0
    %2989 = vmatprep.subr.mxu0 0.0
    %2990 = vmatpush1.msra.mxu0 0.0
    %2991 = vmatprep.subr.mxu0 0.0
    %2992 = vmatpush1.msra.mxu0 0.0
    %2993 = vmatprep.subr.mxu0 0.0
    %2994 = vmatpush1.msra.mxu0 0.0
    %2995 = vmatprep.subr.mxu0 0.0
    %2996 = vmatpush1.msra.mxu0 0.0
    %2997 = vmatprep.subr.mxu0 0.0
    %2998 = vmatpush1.msra.mxu0 0.0
    %2999 = vmatprep.subr.mxu0 0.0
    %3000 = vmatpush1.msra.mxu0 0.0
    %3001 = vmatprep.subr.mxu0 0.0
    %3002 = vmatpush1.msra.mxu0 0.0
    %3003 = vmatprep.subr.mxu0 0.0
    %3004 = vmatpush1.msra.mxu0 0.0
    %3005 = vmatprep.subr.mxu0 0.0
    %3006 = vmatpush1.msra.mxu0 0.0
    %3007 = vmatprep.subr.mxu0 0.0
    %3008 = vmatpush1.msra.mxu0 0.0
    %3009 = vmatprep.subr.mxu0 0.0
    %3010 = vmatpush1.msra.mxu0 0.0
    %3011 = vmatprep.subr.mxu0 0.0
    %3012 = vmatpush1.msra.mxu0 0.0
    %3013 = vmatprep.subr.mxu0 0.0
    %3014 = vmatpush1.msra.mxu0 0.0
    %3015 = vmatprep.subr.mxu0 0.0
    %3016 = vmatpush1.msra.mxu0 0.0
    %3017 = vmatprep.subr.mxu0 0.0
    %3018 = vmatpush1.msra.mxu0 0.0
    %3019 = vmatprep.subr.mxu0 0.0
    %3020 = vmatpush1.msra.mxu0 0.0
    %3021 = vmatprep.subr.mxu0 0.0
    %3022 = vmatpush1.msra.mxu0 0.0
    %3023 = vmatprep.subr.mxu0 0.0
    %3024 = vmatpush1.msra.mxu0 0.0
    %3025 = vmatprep.subr.mxu0 0.0
    %3026 = vmatpush1.msra.mxu0 0.0
    %3027 = vmatprep.subr.mxu0 0.0
    %3028 = vmatpush1.msra.mxu0 0.0
    %3029 = vmatprep.subr.mxu0 0.0
    %3030 = vmatpush1.msra.mxu0 0.0
    %3031 = vmatprep.subr.mxu0 0.0
    %3032 = vmatpush1.msra.mxu0 0.0
    %3033 = vmatprep.subr.mxu0 0.0
    %3034 = vmatpush1.msra.mxu0 0.0
    %3035 = vmatprep.mubr.f32.mxu0 0.0
    %3036 = vmatmul.mubr.f32.gmra.mrb[0].mxu0 %v2969
    %v3037 = vpop.f32.mrb[0].mxu0
    %v3038 = vadd.f32 %v2965, %v3037
    %v3039 = vpop.f32.mrb[0].mxu0
    %3040 = vdwg.mxu0
    %3041 = vrot.lane.b32.xlu0 %v2556, 112
    %v3042 = vpop.permute.xlu0 %3041
    %3043 = vrot.lane.b32.xlu0 %v2556, 80
    %v3044 = vpop.permute.xlu0 %3043
    %v3045 = vsel %vm260, %v3042, 0
    %v3047 = vsel %vm260, %v3044, 0
    %3049 = vmatprep.subr.mxu0 0.0
    %3050 = vmatpush1.xpose.msra.mxu0 %v3047
    %3051 = vmatprep.subr.mxu0 0.0
    %3052 = vmatpush1.xpose.msra.mxu0 0.0
    %3053 = vmatprep.subr.mxu0 0.0
    %3054 = vmatpush1.xpose.msra.mxu0 0.0
    %3055 = vmatprep.subr.mxu0 0.0
    %3056 = vmatpush1.xpose.msra.mxu0 0.0
    %3057 = vmatprep.subr.mxu0 0.0
    %3058 = vmatpush1.xpose.msra.mxu0 0.0
    %3059 = vmatprep.subr.mxu0 0.0
    %3060 = vmatpush1.xpose.msra.mxu0 0.0
    %3061 = vmatprep.subr.mxu0 0.0
    %3062 = vmatpush1.xpose.msra.mxu0 0.0
    %3063 = vmatprep.subr.mxu0 0.0
    %3064 = vmatpush1.xpose.msra.mxu0 0.0
    %3065 = vmatprep.subr.mxu0 0.0
    %3066 = vmatpush1.xpose.msra.mxu0 0.0
    %3067 = vmatprep.subr.mxu0 0.0
    %3068 = vmatpush1.xpose.msra.mxu0 0.0
    %3069 = vmatprep.subr.mxu0 0.0
    %3070 = vmatpush1.xpose.msra.mxu0 0.0
    %3071 = vmatprep.subr.mxu0 0.0
    %3072 = vmatpush1.xpose.msra.mxu0 0.0
    %3073 = vmatprep.subr.mxu0 0.0
    %3074 = vmatpush1.xpose.msra.mxu0 0.0
    %3075 = vmatprep.subr.mxu0 0.0
    %3076 = vmatpush1.xpose.msra.mxu0 0.0
    %3077 = vmatprep.subr.mxu0 0.0
    %3078 = vmatpush1.xpose.msra.mxu0 0.0
    %3079 = vmatprep.subr.mxu0 0.0
    %3080 = vmatpush1.xpose.msra.mxu0 0.0
    %3081 = vmatprep.subr.mxu0 0.0
    %3082 = vmatpush1.xpose.msra.mxu0 0.0
    %3083 = vmatprep.subr.mxu0 0.0
    %3084 = vmatpush1.xpose.msra.mxu0 0.0
    %3085 = vmatprep.subr.mxu0 0.0
    %3086 = vmatpush1.xpose.msra.mxu0 0.0
    %3087 = vmatprep.subr.mxu0 0.0
    %3088 = vmatpush1.xpose.msra.mxu0 0.0
    %3089 = vmatprep.subr.mxu0 0.0
    %3090 = vmatpush1.xpose.msra.mxu0 0.0
    %3091 = vmatprep.subr.mxu0 0.0
    %3092 = vmatpush1.xpose.msra.mxu0 0.0
    %3093 = vmatprep.subr.mxu0 0.0
    %3094 = vmatpush1.xpose.msra.mxu0 0.0
    %3095 = vmatprep.subr.mxu0 0.0
    %3096 = vmatpush1.xpose.msra.mxu0 0.0
    %3097 = vmatprep.subr.mxu0 0.0
    %3098 = vmatpush1.xpose.msra.mxu0 0.0
    %3099 = vmatprep.subr.mxu0 0.0
    %3100 = vmatpush1.xpose.msra.mxu0 0.0
    %3101 = vmatprep.subr.mxu0 0.0
    %3102 = vmatpush1.xpose.msra.mxu0 0.0
    %3103 = vmatprep.subr.mxu0 0.0
    %3104 = vmatpush1.xpose.msra.mxu0 0.0
    %3105 = vmatprep.subr.mxu0 0.0
    %3106 = vmatpush1.xpose.msra.mxu0 0.0
    %3107 = vmatprep.subr.mxu0 0.0
    %3108 = vmatpush1.xpose.msra.mxu0 0.0
    %3109 = vmatprep.subr.mxu0 0.0
    %3110 = vmatpush1.xpose.msra.mxu0 0.0
    %3111 = vmatprep.subr.mxu0 0.0
    %3112 = vmatpush1.xpose.msra.mxu0 0.0
    %3113 = vmatprep.mubr.f32.mxu0 0.0
    %3114 = vmatmul.mubr.f32.gmra.mrb[0].mxu0 %v3045
    %v3115 = vpop.f32.mrb[0].mxu0
    %v3116 = vadd.f32 0.0, %v3115
    %v3117 = vpop.f32.mrb[0].mxu0
    %3118 = vdwg.mxu0
    %v3119 = vmul.f32 %v3116, 0.35355338
    %v3120 = vsel %vm260, %v3119, -inf
    %3121 = vmax.xlane.f32.xlu0 %v3120
    %v3122 = vpop.xlane.xlu0 %3121
    %v3123 = vsub.f32 %v3119, %v3122
    %v3124 = vmul.f32 %v3123, 1.442695
    %v3125 = vpow.pop %v3124
    %v3126 = vsel %vm260, %v3125, 0.0
    %3127 = vadd.xlane.f32.xlu0 %v3126
    %v3128 = vpop.xlane.xlu0 %3127
    %v3129 = vrcp.pop %v3128
    %v3130 = vmul.f32 %v3125, %v3129
    %3131 = vrot.lane.b32.xlu0 %v2556, 48
    %v3132 = vpop.permute.xlu0 %3131
    %v3135 = vsel %vm260, %v3130, 0
    %3137 = vmatprep.subr.mxu0 0.0
    %3138 = vmatpush1.msra.mxu0 %v3132
    %3139 = vmatprep.subr.mxu0 0.0
    %3140 = vmatpush1.msra.mxu0 0.0
    %3141 = vmatprep.subr.mxu0 0.0
    %3142 = vmatpush1.msra.mxu0 0.0
    %3143 = vmatprep.subr.mxu0 0.0
    %3144 = vmatpush1.msra.mxu0 0.0
    %3145 = vmatprep.subr.mxu0 0.0
    %3146 = vmatpush1.msra.mxu0 0.0
    %3147 = vmatprep.subr.mxu0 0.0
    %3148 = vmatpush1.msra.mxu0 0.0
    %3149 = vmatprep.subr.mxu0 0.0
    %3150 = vmatpush1.msra.mxu0 0.0
    %3151 = vmatprep.subr.mxu0 0.0
    %3152 = vmatpush1.msra.mxu0 0.0
    %3153 = vmatprep.subr.mxu0 0.0
    %3154 = vmatpush1.msra.mxu0 0.0
    %3155 = vmatprep.subr.mxu0 0.0
    %3156 = vmatpush1.msra.mxu0 0.0
    %3157 = vmatprep.subr.mxu0 0.0
    %3158 = vmatpush1.msra.mxu0 0.0
    %3159 = vmatprep.subr.mxu0 0.0
    %3160 = vmatpush1.msra.mxu0 0.0
    %3161 = vmatprep.subr.mxu0 0.0
    %3162 = vmatpush1.msra.mxu0 0.0
    %3163 = vmatprep.subr.mxu0 0.0
    %3164 = vmatpush1.msra.mxu0 0.0
    %3165 = vmatprep.subr.mxu0 0.0
    %3166 = vmatpush1.msra.mxu0 0.0
    %3167 = vmatprep.subr.mxu0 0.0
    %3168 = vmatpush1.msra.mxu0 0.0
    %3169 = vmatprep.subr.mxu0 0.0
    %3170 = vmatpush1.msra.mxu0 0.0
    %3171 = vmatprep.subr.mxu0 0.0
    %3172 = vmatpush1.msra.mxu0 0.0
    %3173 = vmatprep.subr.mxu0 0.0
    %3174 = vmatpush1.msra.mxu0 0.0
    %3175 = vmatprep.subr.mxu0 0.0
    %3176 = vmatpush1.msra.mxu0 0.0
    %3177 = vmatprep.subr.mxu0 0.0
    %3178 = vmatpush1.msra.mxu0 0.0
    %3179 = vmatprep.subr.mxu0 0.0
    %3180 = vmatpush1.msra.mxu0 0.0
    %3181 = vmatprep.subr.mxu0 0.0
    %3182 = vmatpush1.msra.mxu0 0.0
    %3183 = vmatprep.subr.mxu0 0.0
    %3184 = vmatpush1.msra.mxu0 0.0
    %3185 = vmatprep.subr.mxu0 0.0
    %3186 = vmatpush1.msra.mxu0 0.0
    %3187 = vmatprep.subr.mxu0 0.0
    %3188 = vmatpush1.msra.mxu0 0.0
    %3189 = vmatprep.subr.mxu0 0.0
    %3190 = vmatpush1.msra.mxu0 0.0
    %3191 = vmatprep.subr.mxu0 0.0
    %3192 = vmatpush1.msra.mxu0 0.0
    %3193 = vmatprep.subr.mxu0 0.0
    %3194 = vmatpush1.msra.mxu0 0.0
    %3195 = vmatprep.subr.mxu0 0.0
    %3196 = vmatpush1.msra.mxu0 0.0
    %3197 = vmatprep.subr.mxu0 0.0
    %3198 = vmatpush1.msra.mxu0 0.0
    %3199 = vmatprep.subr.mxu0 0.0
    %3200 = vmatpush1.msra.mxu0 0.0
    %3201 = vmatprep.mubr.f32.mxu0 0.0
    %3202 = vmatmul.mubr.f32.gmra.mrb[0].mxu0 %v3135
    %v3203 = vpop.f32.mrb[0].mxu0
    %v3204 = vadd.f32 0.0, %v3203
    %v3205 = vpop.f32.mrb[0].mxu0
    %3206 = vdwg.mxu0
    %v3208 = vsel %vm260, %v3204, 0
    %3210 = vmatprep.subr.mxu0 0.0
    %3211 = vmatpush1.msra.mxu0 %v2473
    %3212 = vmatprep.subr.mxu0 0.0
    %3213 = vmatpush1.msra.mxu0 0.0
    %3214 = vmatprep.subr.mxu0 0.0
    %3215 = vmatpush1.msra.mxu0 0.0
    %3216 = vmatprep.subr.mxu0 0.0
    %3217 = vmatpush1.msra.mxu0 0.0
    %3218 = vmatprep.subr.mxu0 0.0
    %3219 = vmatpush1.msra.mxu0 0.0
    %3220 = vmatprep.subr.mxu0 0.0
    %3221 = vmatpush1.msra.mxu0 0.0
    %3222 = vmatprep.subr.mxu0 0.0
    %3223 = vmatpush1.msra.mxu0 0.0
    %3224 = vmatprep.subr.mxu0 0.0
    %3225 = vmatpush1.msra.mxu0 0.0
    %3226 = vmatprep.subr.mxu0 0.0
    %3227 = vmatpush1.msra.mxu0 0.0
    %3228 = vmatprep.subr.mxu0 0.0
    %3229 = vmatpush1.msra.mxu0 0.0
    %3230 = vmatprep.subr.mxu0 0.0
    %3231 = vmatpush1.msra.mxu0 0.0
    %3232 = vmatprep.subr.mxu0 0.0
    %3233 = vmatpush1.msra.mxu0 0.0
    %3234 = vmatprep.subr.mxu0 0.0
    %3235 = vmatpush1.msra.mxu0 0.0
    %3236 = vmatprep.subr.mxu0 0.0
    %3237 = vmatpush1.msra.mxu0 0.0
    %3238 = vmatprep.subr.mxu0 0.0
    %3239 = vmatpush1.msra.mxu0 0.0
    %3240 = vmatprep.subr.mxu0 0.0
    %3241 = vmatpush1.msra.mxu0 0.0
    %3242 = vmatprep.subr.mxu0 0.0
    %3243 = vmatpush1.msra.mxu0 0.0
    %3244 = vmatprep.subr.mxu0 0.0
    %3245 = vmatpush1.msra.mxu0 0.0
    %3246 = vmatprep.subr.mxu0 0.0
    %3247 = vmatpush1.msra.mxu0 0.0
    %3248 = vmatprep.subr.mxu0 0.0
    %3249 = vmatpush1.msra.mxu0 0.0
    %3250 = vmatprep.subr.mxu0 0.0
    %3251 = vmatpush1.msra.mxu0 0.0
    %3252 = vmatprep.subr.mxu0 0.0
    %3253 = vmatpush1.msra.mxu0 0.0
    %3254 = vmatprep.subr.mxu0 0.0
    %3255 = vmatpush1.msra.mxu0 0.0
    %3256 = vmatprep.subr.mxu0 0.0
    %3257 = vmatpush1.msra.mxu0 0.0
    %3258 = vmatprep.subr.mxu0 0.0
    %3259 = vmatpush1.msra.mxu0 0.0
    %3260 = vmatprep.subr.mxu0 0.0
    %3261 = vmatpush1.msra.mxu0 0.0
    %3262 = vmatprep.subr.mxu0 0.0
    %3263 = vmatpush1.msra.mxu0 0.0
    %3264 = vmatprep.subr.mxu0 0.0
    %3265 = vmatpush1.msra.mxu0 0.0
    %3266 = vmatprep.subr.mxu0 0.0
    %3267 = vmatpush1.msra.mxu0 0.0
    %3268 = vmatprep.subr.mxu0 0.0
    %3269 = vmatpush1.msra.mxu0 0.0
    %3270 = vmatprep.subr.mxu0 0.0
    %3271 = vmatpush1.msra.mxu0 0.0
    %3272 = vmatprep.subr.mxu0 0.0
    %3273 = vmatpush1.msra.mxu0 0.0
    %3274 = vmatprep.mubr.f32.mxu0 0.0
    %3275 = vmatmul.mubr.f32.gmra.mrb[0].mxu0 %v3208
    %v3276 = vpop.f32.mrb[0].mxu0
    %v3277 = vadd.f32 0.0, %v3276
    %v3278 = vpop.f32.mrb[0].mxu0
    %3279 = vdwg.mxu0
    %v3280 = vadd.f32 %v3038, %v3277
    %3281 = vrot.lane.b32.xlu0 %v2556, 104
    %v3282 = vpop.permute.xlu0 %3281
    %3283 = vrot.lane.b32.xlu0 %v2556, 72
    %v3284 = vpop.permute.xlu0 %3283
    %v3285 = vsel %vm260, %v3282, 0
    %v3287 = vsel %vm260, %v3284, 0
    %3289 = vmatprep.subr.mxu0 0.0
    %3290 = vmatpush1.xpose.msra.mxu0 %v3287
    %3291 = vmatprep.subr.mxu0 0.0
    %3292 = vmatpush1.xpose.msra.mxu0 0.0
    %3293 = vmatprep.subr.mxu0 0.0
    %3294 = vmatpush1.xpose.msra.mxu0 0.0
    %3295 = vmatprep.subr.mxu0 0.0
    %3296 = vmatpush1.xpose.msra.mxu0 0.0
    %3297 = vmatprep.subr.mxu0 0.0
    %3298 = vmatpush1.xpose.msra.mxu0 0.0
    %3299 = vmatprep.subr.mxu0 0.0
    %3300 = vmatpush1.xpose.msra.mxu0 0.0
    %3301 = vmatprep.subr.mxu0 0.0
    %3302 = vmatpush1.xpose.msra.mxu0 0.0
    %3303 = vmatprep.subr.mxu0 0.0
    %3304 = vmatpush1.xpose.msra.mxu0 0.0
    %3305 = vmatprep.subr.mxu0 0.0
    %3306 = vmatpush1.xpose.msra.mxu0 0.0
    %3307 = vmatprep.subr.mxu0 0.0
    %3308 = vmatpush1.xpose.msra.mxu0 0.0
    %3309 = vmatprep.subr.mxu0 0.0
    %3310 = vmatpush1.xpose.msra.mxu0 0.0
    %3311 = vmatprep.subr.mxu0 0.0
    %3312 = vmatpush1.xpose.msra.mxu0 0.0
    %3313 = vmatprep.subr.mxu0 0.0
    %3314 = vmatpush1.xpose.msra.mxu0 0.0
    %3315 = vmatprep.subr.mxu0 0.0
    %3316 = vmatpush1.xpose.msra.mxu0 0.0
    %3317 = vmatprep.subr.mxu0 0.0
    %3318 = vmatpush1.xpose.msra.mxu0 0.0
    %3319 = vmatprep.subr.mxu0 0.0
    %3320 = vmatpush1.xpose.msra.mxu0 0.0
    %3321 = vmatprep.subr.mxu0 0.0
    %3322 = vmatpush1.xpose.msra.mxu0 0.0
    %3323 = vmatprep.subr.mxu0 0.0
    %3324 = vmatpush1.xpose.msra.mxu0 0.0
    %3325 = vmatprep.subr.mxu0 0.0
    %3326 = vmatpush1.xpose.msra.mxu0 0.0
    %3327 = vmatprep.subr.mxu0 0.0
    %3328 = vmatpush1.xpose.msra.mxu0 0.0
    %3329 = vmatprep.subr.mxu0 0.0
    %3330 = vmatpush1.xpose.msra.mxu0 0.0
    %3331 = vmatprep.subr.mxu0 0.0
    %3332 = vmatpush1.xpose.msra.mxu0 0.0
    %3333 = vmatprep.subr.mxu0 0.0
    %3334 = vmatpush1.xpose.msra.mxu0 0.0
    %3335 = vmatprep.subr.mxu0 0.0
    %3336 = vmatpush1.xpose.msra.mxu0 0.0
    %3337 = vmatprep.subr.mxu0 0.0
    %3338 = vmatpush1.xpose.msra.mxu0 0.0
    %3339 = vmatprep.subr.mxu0 0.0
    %3340 = vmatpush1.xpose.msra.mxu0 0.0
    %3341 = vmatprep.subr.mxu0 0.0
    %3342 = vmatpush1.xpose.msra.mxu0 0.0
    %3343 = vmatprep.subr.mxu0 0.0
    %3344 = vmatpush1.xpose.msra.mxu0 0.0
    %3345 = vmatprep.subr.mxu0 0.0
    %3346 = vmatpush1.xpose.msra.mxu0 0.0
    %3347 = vmatprep.subr.mxu0 0.0
    %3348 = vmatpush1.xpose.msra.mxu0 0.0
    %3349 = vmatprep.subr.mxu0 0.0
    %3350 = vmatpush1.xpose.msra.mxu0 0.0
    %3351 = vmatprep.subr.mxu0 0.0
    %3352 = vmatpush1.xpose.msra.mxu0 0.0
    %3353 = vmatprep.mubr.f32.mxu0 0.0
    %3354 = vmatmul.mubr.f32.gmra.mrb[0].mxu0 %v3285
    %v3355 = vpop.f32.mrb[0].mxu0
    %v3356 = vadd.f32 0.0, %v3355
    %v3357 = vpop.f32.mrb[0].mxu0
    %3358 = vdwg.mxu0
    %v3359 = vmul.f32 %v3356, 0.35355338
    %v3360 = vsel %vm260, %v3359, -inf
    %3361 = vmax.xlane.f32.xlu0 %v3360
    %v3362 = vpop.xlane.xlu0 %3361
    %v3363 = vsub.f32 %v3359, %v3362
    %v3364 = vmul.f32 %v3363, 1.442695
    %v3365 = vpow.pop %v3364
    %v3366 = vsel %vm260, %v3365, 0.0
    %3367 = vadd.xlane.f32.xlu0 %v3366
    %v3368 = vpop.xlane.xlu0 %3367
    %v3369 = vrcp.pop %v3368
    %v3370 = vmul.f32 %v3365, %v3369
    %3371 = vrot.lane.b32.xlu0 %v2556, 40
    %v3372 = vpop.permute.xlu0 %3371
    %v3375 = vsel %vm260, %v3370, 0
    %3377 = vmatprep.subr.mxu0 0.0
    %3378 = vmatpush1.msra.mxu0 %v3372
    %3379 = vmatprep.subr.mxu0 0.0
    %3380 = vmatpush1.msra.mxu0 0.0
    %3381 = vmatprep.subr.mxu0 0.0
    %3382 = vmatpush1.msra.mxu0 0.0
    %3383 = vmatprep.subr.mxu0 0.0
    %3384 = vmatpush1.msra.mxu0 0.0
    %3385 = vmatprep.subr.mxu0 0.0
    %3386 = vmatpush1.msra.mxu0 0.0
    %3387 = vmatprep.subr.mxu0 0.0
    %3388 = vmatpush1.msra.mxu0 0.0
    %3389 = vmatprep.subr.mxu0 0.0
    %3390 = vmatpush1.msra.mxu0 0.0
    %3391 = vmatprep.subr.mxu0 0.0
    %3392 = vmatpush1.msra.mxu0 0.0
    %3393 = vmatprep.subr.mxu0 0.0
    %3394 = vmatpush1.msra.mxu0 0.0
    %3395 = vmatprep.subr.mxu0 0.0
    %3396 = vmatpush1.msra.mxu0 0.0
    %3397 = vmatprep.subr.mxu0 0.0
    %3398 = vmatpush1.msra.mxu0 0.0
    %3399 = vmatprep.subr.mxu0 0.0
    %3400 = vmatpush1.msra.mxu0 0.0
    %3401 = vmatprep.subr.mxu0 0.0
    %3402 = vmatpush1.msra.mxu0 0.0
    %3403 = vmatprep.subr.mxu0 0.0
    %3404 = vmatpush1.msra.mxu0 0.0
    %3405 = vmatprep.subr.mxu0 0.0
    %3406 = vmatpush1.msra.mxu0 0.0
    %3407 = vmatprep.subr.mxu0 0.0
    %3408 = vmatpush1.msra.mxu0 0.0
    %3409 = vmatprep.subr.mxu0 0.0
    %3410 = vmatpush1.msra.mxu0 0.0
    %3411 = vmatprep.subr.mxu0 0.0
    %3412 = vmatpush1.msra.mxu0 0.0
    %3413 = vmatprep.subr.mxu0 0.0
    %3414 = vmatpush1.msra.mxu0 0.0
    %3415 = vmatprep.subr.mxu0 0.0
    %3416 = vmatpush1.msra.mxu0 0.0
    %3417 = vmatprep.subr.mxu0 0.0
    %3418 = vmatpush1.msra.mxu0 0.0
    %3419 = vmatprep.subr.mxu0 0.0
    %3420 = vmatpush1.msra.mxu0 0.0
    %3421 = vmatprep.subr.mxu0 0.0
    %3422 = vmatpush1.msra.mxu0 0.0
    %3423 = vmatprep.subr.mxu0 0.0
    %3424 = vmatpush1.msra.mxu0 0.0
    %3425 = vmatprep.subr.mxu0 0.0
    %3426 = vmatpush1.msra.mxu0 0.0
    %3427 = vmatprep.subr.mxu0 0.0
    %3428 = vmatpush1.msra.mxu0 0.0
    %3429 = vmatprep.subr.mxu0 0.0
    %3430 = vmatpush1.msra.mxu0 0.0
    %3431 = vmatprep.subr.mxu0 0.0
    %3432 = vmatpush1.msra.mxu0 0.0
    %3433 = vmatprep.subr.mxu0 0.0
    %3434 = vmatpush1.msra.mxu0 0.0
    %3435 = vmatprep.subr.mxu0 0.0
    %3436 = vmatpush1.msra.mxu0 0.0
    %3437 = vmatprep.subr.mxu0 0.0
    %3438 = vmatpush1.msra.mxu0 0.0
    %3439 = vmatprep.subr.mxu0 0.0
    %3440 = vmatpush1.msra.mxu0 0.0
    %3441 = vmatprep.mubr.f32.mxu0 0.0
    %3442 = vmatmul.mubr.f32.gmra.mrb[0].mxu0 %v3375
    %v3443 = vpop.f32.mrb[0].mxu0
    %v3444 = vadd.f32 0.0, %v3443
    %v3445 = vpop.f32.mrb[0].mxu0
    %3446 = vdwg.mxu0
    %v3448 = vsel %vm260, %v3444, 0
    %3450 = vmatprep.subr.mxu0 0.0
    %3451 = vmatpush1.msra.mxu0 %v2474
    %3452 = vmatprep.subr.mxu0 0.0
    %3453 = vmatpush1.msra.mxu0 0.0
    %3454 = vmatprep.subr.mxu0 0.0
    %3455 = vmatpush1.msra.mxu0 0.0
    %3456 = vmatprep.subr.mxu0 0.0
    %3457 = vmatpush1.msra.mxu0 0.0
    %3458 = vmatprep.subr.mxu0 0.0
    %3459 = vmatpush1.msra.mxu0 0.0
    %3460 = vmatprep.subr.mxu0 0.0
    %3461 = vmatpush1.msra.mxu0 0.0
    %3462 = vmatprep.subr.mxu0 0.0
    %3463 = vmatpush1.msra.mxu0 0.0
    %3464 = vmatprep.subr.mxu0 0.0
    %3465 = vmatpush1.msra.mxu0 0.0
    %3466 = vmatprep.subr.mxu0 0.0
    %3467 = vmatpush1.msra.mxu0 0.0
    %3468 = vmatprep.subr.mxu0 0.0
    %3469 = vmatpush1.msra.mxu0 0.0
    %3470 = vmatprep.subr.mxu0 0.0
    %3471 = vmatpush1.msra.mxu0 0.0
    %3472 = vmatprep.subr.mxu0 0.0
    %3473 = vmatpush1.msra.mxu0 0.0
    %3474 = vmatprep.subr.mxu0 0.0
    %3475 = vmatpush1.msra.mxu0 0.0
    %3476 = vmatprep.subr.mxu0 0.0
    %3477 = vmatpush1.msra.mxu0 0.0
    %3478 = vmatprep.subr.mxu0 0.0
    %3479 = vmatpush1.msra.mxu0 0.0
    %3480 = vmatprep.subr.mxu0 0.0
    %3481 = vmatpush1.msra.mxu0 0.0
    %3482 = vmatprep.subr.mxu0 0.0
    %3483 = vmatpush1.msra.mxu0 0.0
    %3484 = vmatprep.subr.mxu0 0.0
    %3485 = vmatpush1.msra.mxu0 0.0
    %3486 = vmatprep.subr.mxu0 0.0
    %3487 = vmatpush1.msra.mxu0 0.0
    %3488 = vmatprep.subr.mxu0 0.0
    %3489 = vmatpush1.msra.mxu0 0.0
    %3490 = vmatprep.subr.mxu0 0.0
    %3491 = vmatpush1.msra.mxu0 0.0
    %3492 = vmatprep.subr.mxu0 0.0
    %3493 = vmatpush1.msra.mxu0 0.0
    %3494 = vmatprep.subr.mxu0 0.0
    %3495 = vmatpush1.msra.mxu0 0.0
    %3496 = vmatprep.subr.mxu0 0.0
    %3497 = vmatpush1.msra.mxu0 0.0
    %3498 = vmatprep.subr.mxu0 0.0
    %3499 = vmatpush1.msra.mxu0 0.0
    %3500 = vmatprep.subr.mxu0 0.0
    %3501 = vmatpush1.msra.mxu0 0.0
    %3502 = vmatprep.subr.mxu0 0.0
    %3503 = vmatpush1.msra.mxu0 0.0
    %3504 = vmatprep.subr.mxu0 0.0
    %3505 = vmatpush1.msra.mxu0 0.0
    %3506 = vmatprep.subr.mxu0 0.0
    %3507 = vmatpush1.msra.mxu0 0.0
    %3508 = vmatprep.subr.mxu0 0.0
    %3509 = vmatpush1.msra.mxu0 0.0
    %3510 = vmatprep.subr.mxu0 0.0
    %3511 = vmatpush1.msra.mxu0 0.0
    %3512 = vmatprep.subr.mxu0 0.0
    %3513 = vmatpush1.msra.mxu0 0.0
    %3514 = vmatprep.mubr.f32.mxu0 0.0
    %3515 = vmatmul.mubr.f32.gmra.mrb[0].mxu0 %v3448
    %v3516 = vpop.f32.mrb[0].mxu0
    %v3517 = vadd.f32 0.0, %v3516
    %v3518 = vpop.f32.mrb[0].mxu0
    %3519 = vdwg.mxu0
    %v3520 = vadd.f32 %v3280, %v3517
    %3522 = vrot.lane.b32.xlu0 %v2561, 96
    %v3523 = vpop.permute.xlu0 %3522
    %v3524 = vsel %vm260, %v2561, 0
    %v3526 = vsel %vm260, %v3523, 0
    %3528 = vmatprep.subr.mxu0 0.0
    %3529 = vmatpush1.xpose.msra.mxu0 %v3526
    %3530 = vmatprep.subr.mxu0 0.0
    %3531 = vmatpush1.xpose.msra.mxu0 0.0
    %3532 = vmatprep.subr.mxu0 0.0
    %3533 = vmatpush1.xpose.msra.mxu0 0.0
    %3534 = vmatprep.subr.mxu0 0.0
    %3535 = vmatpush1.xpose.msra.mxu0 0.0
    %3536 = vmatprep.subr.mxu0 0.0
    %3537 = vmatpush1.xpose.msra.mxu0 0.0
    %3538 = vmatprep.subr.mxu0 0.0
    %3539 = vmatpush1.xpose.msra.mxu0 0.0
    %3540 = vmatprep.subr.mxu0 0.0
    %3541 = vmatpush1.xpose.msra.mxu0 0.0
    %3542 = vmatprep.subr.mxu0 0.0
    %3543 = vmatpush1.xpose.msra.mxu0 0.0
    %3544 = vmatprep.subr.mxu0 0.0
    %3545 = vmatpush1.xpose.msra.mxu0 0.0
    %3546 = vmatprep.subr.mxu0 0.0
    %3547 = vmatpush1.xpose.msra.mxu0 0.0
    %3548 = vmatprep.subr.mxu0 0.0
    %3549 = vmatpush1.xpose.msra.mxu0 0.0
    %3550 = vmatprep.subr.mxu0 0.0
    %3551 = vmatpush1.xpose.msra.mxu0 0.0
    %3552 = vmatprep.subr.mxu0 0.0
    %3553 = vmatpush1.xpose.msra.mxu0 0.0
    %3554 = vmatprep.subr.mxu0 0.0
    %3555 = vmatpush1.xpose.msra.mxu0 0.0
    %3556 = vmatprep.subr.mxu0 0.0
    %3557 = vmatpush1.xpose.msra.mxu0 0.0
    %3558 = vmatprep.subr.mxu0 0.0
    %3559 = vmatpush1.xpose.msra.mxu0 0.0
    %3560 = vmatprep.subr.mxu0 0.0
    %3561 = vmatpush1.xpose.msra.mxu0 0.0
    %3562 = vmatprep.subr.mxu0 0.0
    %3563 = vmatpush1.xpose.msra.mxu0 0.0
    %3564 = vmatprep.subr.mxu0 0.0
    %3565 = vmatpush1.xpose.msra.mxu0 0.0
    %3566 = vmatprep.subr.mxu0 0.0
    %3567 = vmatpush1.xpose.msra.mxu0 0.0
    %3568 = vmatprep.subr.mxu0 0.0
    %3569 = vmatpush1.xpose.msra.mxu0 0.0
    %3570 = vmatprep.subr.mxu0 0.0
    %3571 = vmatpush1.xpose.msra.mxu0 0.0
    %3572 = vmatprep.subr.mxu0 0.0
    %3573 = vmatpush1.xpose.msra.mxu0 0.0
    %3574 = vmatprep.subr.mxu0 0.0
    %3575 = vmatpush1.xpose.msra.mxu0 0.0
    %3576 = vmatprep.subr.mxu0 0.0
    %3577 = vmatpush1.xpose.msra.mxu0 0.0
    %3578 = vmatprep.subr.mxu0 0.0
    %3579 = vmatpush1.xpose.msra.mxu0 0.0
    %3580 = vmatprep.subr.mxu0 0.0
    %3581 = vmatpush1.xpose.msra.mxu0 0.0
    %3582 = vmatprep.subr.mxu0 0.0
    %3583 = vmatpush1.xpose.msra.mxu0 0.0
    %3584 = vmatprep.subr.mxu0 0.0
    %3585 = vmatpush1.xpose.msra.mxu0 0.0
    %3586 = vmatprep.subr.mxu0 0.0
    %3587 = vmatpush1.xpose.msra.mxu0 0.0
    %3588 = vmatprep.subr.mxu0 0.0
    %3589 = vmatpush1.xpose.msra.mxu0 0.0
    %3590 = vmatprep.subr.mxu0 0.0
    %3591 = vmatpush1.xpose.msra.mxu0 0.0
    %3592 = vmatprep.mubr.f32.mxu0 0.0
    %3593 = vmatmul.mubr.f32.gmra.mrb[0].mxu0 %v3524
    %v3594 = vpop.f32.mrb[0].mxu0
    %v3595 = vadd.f32 0.0, %v3594
    %v3596 = vpop.f32.mrb[0].mxu0
    %3597 = vdwg.mxu0
    %v3598 = vmul.f32 %v3595, 0.35355338
    %v3599 = vsel %vm260, %v3598, -inf
    %3600 = vmax.xlane.f32.xlu0 %v3599
    %v3601 = vpop.xlane.xlu0 %3600
    %v3602 = vsub.f32 %v3598, %v3601
    %v3603 = vmul.f32 %v3602, 1.442695
    %v3604 = vpow.pop %v3603
    %v3605 = vsel %vm260, %v3604, 0.0
    %3606 = vadd.xlane.f32.xlu0 %v3605
    %v3607 = vpop.xlane.xlu0 %3606
    %v3608 = vrcp.pop %v3607
    %v3609 = vmul.f32 %v3604, %v3608
    %3610 = vrot.lane.b32.xlu0 %v2561, 64
    %v3611 = vpop.permute.xlu0 %3610
    %v3614 = vsel %vm260, %v3609, 0
    %3616 = vmatprep.subr.mxu0 0.0
    %3617 = vmatpush1.msra.mxu0 %v3611
    %3618 = vmatprep.subr.mxu0 0.0
    %3619 = vmatpush1.msra.mxu0 0.0
    %3620 = vmatprep.subr.mxu0 0.0
    %3621 = vmatpush1.msra.mxu0 0.0
    %3622 = vmatprep.subr.mxu0 0.0
    %3623 = vmatpush1.msra.mxu0 0.0
    %3624 = vmatprep.subr.mxu0 0.0
    %3625 = vmatpush1.msra.mxu0 0.0
    %3626 = vmatprep.subr.mxu0 0.0
    %3627 = vmatpush1.msra.mxu0 0.0
    %3628 = vmatprep.subr.mxu0 0.0
    %3629 = vmatpush1.msra.mxu0 0.0
    %3630 = vmatprep.subr.mxu0 0.0
    %3631 = vmatpush1.msra.mxu0 0.0
    %3632 = vmatprep.subr.mxu0 0.0
    %3633 = vmatpush1.msra.mxu0 0.0
    %3634 = vmatprep.subr.mxu0 0.0
    %3635 = vmatpush1.msra.mxu0 0.0
    %3636 = vmatprep.subr.mxu0 0.0
    %3637 = vmatpush1.msra.mxu0 0.0
    %3638 = vmatprep.subr.mxu0 0.0
    %3639 = vmatpush1.msra.mxu0 0.0
    %3640 = vmatprep.subr.mxu0 0.0
    %3641 = vmatpush1.msra.mxu0 0.0
    %3642 = vmatprep.subr.mxu0 0.0
    %3643 = vmatpush1.msra.mxu0 0.0
    %3644 = vmatprep.subr.mxu0 0.0
    %3645 = vmatpush1.msra.mxu0 0.0
    %3646 = vmatprep.subr.mxu0 0.0
    %3647 = vmatpush1.msra.mxu0 0.0
    %3648 = vmatprep.subr.mxu0 0.0
    %3649 = vmatpush1.msra.mxu0 0.0
    %3650 = vmatprep.subr.mxu0 0.0
    %3651 = vmatpush1.msra.mxu0 0.0
    %3652 = vmatprep.subr.mxu0 0.0
    %3653 = vmatpush1.msra.mxu0 0.0
    %3654 = vmatprep.subr.mxu0 0.0
    %3655 = vmatpush1.msra.mxu0 0.0
    %3656 = vmatprep.subr.mxu0 0.0
    %3657 = vmatpush1.msra.mxu0 0.0
    %3658 = vmatprep.subr.mxu0 0.0
    %3659 = vmatpush1.msra.mxu0 0.0
    %3660 = vmatprep.subr.mxu0 0.0
    %3661 = vmatpush1.msra.mxu0 0.0
    %3662 = vmatprep.subr.mxu0 0.0
    %3663 = vmatpush1.msra.mxu0 0.0
    %3664 = vmatprep.subr.mxu0 0.0
    %3665 = vmatpush1.msra.mxu0 0.0
    %3666 = vmatprep.subr.mxu0 0.0
    %3667 = vmatpush1.msra.mxu0 0.0
    %3668 = vmatprep.subr.mxu0 0.0
    %3669 = vmatpush1.msra.mxu0 0.0
    %3670 = vmatprep.subr.mxu0 0.0
    %3671 = vmatpush1.msra.mxu0 0.0
    %3672 = vmatprep.subr.mxu0 0.0
    %3673 = vmatpush1.msra.mxu0 0.0
    %3674 = vmatprep.subr.mxu0 0.0
    %3675 = vmatpush1.msra.mxu0 0.0
    %3676 = vmatprep.subr.mxu0 0.0
    %3677 = vmatpush1.msra.mxu0 0.0
    %3678 = vmatprep.subr.mxu0 0.0
    %3679 = vmatpush1.msra.mxu0 0.0
    %3680 = vmatprep.mubr.f32.mxu0 0.0
    %3681 = vmatmul.mubr.f32.gmra.mrb[0].mxu0 %v3614
    %v3682 = vpop.f32.mrb[0].mxu0
    %v3683 = vadd.f32 0.0, %v3682
    %v3684 = vpop.f32.mrb[0].mxu0
    %3685 = vdwg.mxu0
    %3686 = vrot.lane.b32.xlu0 %v2561, 120
    %v3687 = vpop.permute.xlu0 %3686
    %3688 = vrot.lane.b32.xlu0 %v2561, 88
    %v3689 = vpop.permute.xlu0 %3688
    %v3690 = vsel %vm260, %v3687, 0
    %v3692 = vsel %vm260, %v3689, 0
    %3694 = vmatprep.subr.mxu0 0.0
    %3695 = vmatpush1.xpose.msra.mxu0 %v3692
    %3696 = vmatprep.subr.mxu0 0.0
    %3697 = vmatpush1.xpose.msra.mxu0 0.0
    %3698 = vmatprep.subr.mxu0 0.0
    %3699 = vmatpush1.xpose.msra.mxu0 0.0
    %3700 = vmatprep.subr.mxu0 0.0
    %3701 = vmatpush1.xpose.msra.mxu0 0.0
    %3702 = vmatprep.subr.mxu0 0.0
    %3703 = vmatpush1.xpose.msra.mxu0 0.0
    %3704 = vmatprep.subr.mxu0 0.0
    %3705 = vmatpush1.xpose.msra.mxu0 0.0
    %3706 = vmatprep.subr.mxu0 0.0
    %3707 = vmatpush1.xpose.msra.mxu0 0.0
    %3708 = vmatprep.subr.mxu0 0.0
    %3709 = vmatpush1.xpose.msra.mxu0 0.0
    %3710 = vmatprep.subr.mxu0 0.0
    %3711 = vmatpush1.xpose.msra.mxu0 0.0
    %3712 = vmatprep.subr.mxu0 0.0
    %3713 = vmatpush1.xpose.msra.mxu0 0.0
    %3714 = vmatprep.subr.mxu0 0.0
    %3715 = vmatpush1.xpose.msra.mxu0 0.0
    %3716 = vmatprep.subr.mxu0 0.0
    %3717 = vmatpush1.xpose.msra.mxu0 0.0
    %3718 = vmatprep.subr.mxu0 0.0
    %3719 = vmatpush1.xpose.msra.mxu0 0.0
    %3720 = vmatprep.subr.mxu0 0.0
    %3721 = vmatpush1.xpose.msra.mxu0 0.0
    %3722 = vmatprep.subr.mxu0 0.0
    %3723 = vmatpush1.xpose.msra.mxu0 0.0
    %3724 = vmatprep.subr.mxu0 0.0
    %3725 = vmatpush1.xpose.msra.mxu0 0.0
    %3726 = vmatprep.subr.mxu0 0.0
    %3727 = vmatpush1.xpose.msra.mxu0 0.0
    %3728 = vmatprep.subr.mxu0 0.0
    %3729 = vmatpush1.xpose.msra.mxu0 0.0
    %3730 = vmatprep.subr.mxu0 0.0
    %3731 = vmatpush1.xpose.msra.mxu0 0.0
    %3732 = vmatprep.subr.mxu0 0.0
    %3733 = vmatpush1.xpose.msra.mxu0 0.0
    %3734 = vmatprep.subr.mxu0 0.0
    %3735 = vmatpush1.xpose.msra.mxu0 0.0
    %3736 = vmatprep.subr.mxu0 0.0
    %3737 = vmatpush1.xpose.msra.mxu0 0.0
    %3738 = vmatprep.subr.mxu0 0.0
    %3739 = vmatpush1.xpose.msra.mxu0 0.0
    %3740 = vmatprep.subr.mxu0 0.0
    %3741 = vmatpush1.xpose.msra.mxu0 0.0
    %3742 = vmatprep.subr.mxu0 0.0
    %3743 = vmatpush1.xpose.msra.mxu0 0.0
    %3744 = vmatprep.subr.mxu0 0.0
    %3745 = vmatpush1.xpose.msra.mxu0 0.0
    %3746 = vmatprep.subr.mxu0 0.0
    %3747 = vmatpush1.xpose.msra.mxu0 0.0
    %3748 = vmatprep.subr.mxu0 0.0
    %3749 = vmatpush1.xpose.msra.mxu0 0.0
    %3750 = vmatprep.subr.mxu0 0.0
    %3751 = vmatpush1.xpose.msra.mxu0 0.0
    %3752 = vmatprep.subr.mxu0 0.0
    %3753 = vmatpush1.xpose.msra.mxu0 0.0
    %3754 = vmatprep.subr.mxu0 0.0
    %3755 = vmatpush1.xpose.msra.mxu0 0.0
    %3756 = vmatprep.subr.mxu0 0.0
    %3757 = vmatpush1.xpose.msra.mxu0 0.0
    %3758 = vmatprep.mubr.f32.mxu0 0.0
    %3759 = vmatmul.mubr.f32.gmra.mrb[0].mxu0 %v3690
    %v3760 = vpop.f32.mrb[0].mxu0
    %v3761 = vadd.f32 0.0, %v3760
    %v3762 = vpop.f32.mrb[0].mxu0
    %3763 = vdwg.mxu0
    %v3764 = vmul.f32 %v3761, 0.35355338
    %v3765 = vsel %vm260, %v3764, -inf
    %3766 = vmax.xlane.f32.xlu0 %v3765
    %v3767 = vpop.xlane.xlu0 %3766
    %v3768 = vsub.f32 %v3764, %v3767
    %v3769 = vmul.f32 %v3768, 1.442695
    %v3770 = vpow.pop %v3769
    %v3771 = vsel %vm260, %v3770, 0.0
    %3772 = vadd.xlane.f32.xlu0 %v3771
    %v3773 = vpop.xlane.xlu0 %3772
    %v3774 = vrcp.pop %v3773
    %v3775 = vmul.f32 %v3770, %v3774
    %3776 = vrot.lane.b32.xlu0 %v2561, 56
    %v3777 = vpop.permute.xlu0 %3776
    %v3780 = vsel %vm260, %v3775, 0
    %3782 = vmatprep.subr.mxu0 0.0
    %3783 = vmatpush1.msra.mxu0 %v3777
    %3784 = vmatprep.subr.mxu0 0.0
    %3785 = vmatpush1.msra.mxu0 0.0
    %3786 = vmatprep.subr.mxu0 0.0
    %3787 = vmatpush1.msra.mxu0 0.0
    %3788 = vmatprep.subr.mxu0 0.0
    %3789 = vmatpush1.msra.mxu0 0.0
    %3790 = vmatprep.subr.mxu0 0.0
    %3791 = vmatpush1.msra.mxu0 0.0
    %3792 = vmatprep.subr.mxu0 0.0
    %3793 = vmatpush1.msra.mxu0 0.0
    %3794 = vmatprep.subr.mxu0 0.0
    %3795 = vmatpush1.msra.mxu0 0.0
    %3796 = vmatprep.subr.mxu0 0.0
    %3797 = vmatpush1.msra.mxu0 0.0
    %3798 = vmatprep.subr.mxu0 0.0
    %3799 = vmatpush1.msra.mxu0 0.0
    %3800 = vmatprep.subr.mxu0 0.0
    %3801 = vmatpush1.msra.mxu0 0.0
    %3802 = vmatprep.subr.mxu0 0.0
    %3803 = vmatpush1.msra.mxu0 0.0
    %3804 = vmatprep.subr.mxu0 0.0
    %3805 = vmatpush1.msra.mxu0 0.0
    %3806 = vmatprep.subr.mxu0 0.0
    %3807 = vmatpush1.msra.mxu0 0.0
    %3808 = vmatprep.subr.mxu0 0.0
    %3809 = vmatpush1.msra.mxu0 0.0
    %3810 = vmatprep.subr.mxu0 0.0
    %3811 = vmatpush1.msra.mxu0 0.0
    %3812 = vmatprep.subr.mxu0 0.0
    %3813 = vmatpush1.msra.mxu0 0.0
    %3814 = vmatprep.subr.mxu0 0.0
    %3815 = vmatpush1.msra.mxu0 0.0
    %3816 = vmatprep.subr.mxu0 0.0
    %3817 = vmatpush1.msra.mxu0 0.0
    %3818 = vmatprep.subr.mxu0 0.0
    %3819 = vmatpush1.msra.mxu0 0.0
    %3820 = vmatprep.subr.mxu0 0.0
    %3821 = vmatpush1.msra.mxu0 0.0
    %3822 = vmatprep.subr.mxu0 0.0
    %3823 = vmatpush1.msra.mxu0 0.0
    %3824 = vmatprep.subr.mxu0 0.0
    %3825 = vmatpush1.msra.mxu0 0.0
    %3826 = vmatprep.subr.mxu0 0.0
    %3827 = vmatpush1.msra.mxu0 0.0
    %3828 = vmatprep.subr.mxu0 0.0
    %3829 = vmatpush1.msra.mxu0 0.0
    %3830 = vmatprep.subr.mxu0 0.0
    %3831 = vmatpush1.msra.mxu0 0.0
    %3832 = vmatprep.subr.mxu0 0.0
    %3833 = vmatpush1.msra.mxu0 0.0
    %3834 = vmatprep.subr.mxu0 0.0
    %3835 = vmatpush1.msra.mxu0 0.0
    %3836 = vmatprep.subr.mxu0 0.0
    %3837 = vmatpush1.msra.mxu0 0.0
    %3838 = vmatprep.subr.mxu0 0.0
    %3839 = vmatpush1.msra.mxu0 0.0
    %3840 = vmatprep.subr.mxu0 0.0
    %3841 = vmatpush1.msra.mxu0 0.0
    %3842 = vmatprep.subr.mxu0 0.0
    %3843 = vmatpush1.msra.mxu0 0.0
    %3844 = vmatprep.subr.mxu0 0.0
    %3845 = vmatpush1.msra.mxu0 0.0
    %3846 = vmatprep.mubr.f32.mxu0 0.0
    %3847 = vmatmul.mubr.f32.gmra.mrb[0].mxu0 %v3780
    %v3848 = vpop.f32.mrb[0].mxu0
    %v3849 = vadd.f32 0.0, %v3848
    %v3850 = vpop.f32.mrb[0].mxu0
    %3851 = vdwg.mxu0
    %v3853 = vsel %vm260, %v3849, 0
    %3855 = vmatprep.subr.mxu0 0.0
    %3856 = vmatpush1.msra.mxu0 %v2472
    %3857 = vmatprep.subr.mxu0 0.0
    %3858 = vmatpush1.msra.mxu0 0.0
    %3859 = vmatprep.subr.mxu0 0.0
    %3860 = vmatpush1.msra.mxu0 0.0
    %3861 = vmatprep.subr.mxu0 0.0
    %3862 = vmatpush1.msra.mxu0 0.0
    %3863 = vmatprep.subr.mxu0 0.0
    %3864 = vmatpush1.msra.mxu0 0.0
    %3865 = vmatprep.subr.mxu0 0.0
    %3866 = vmatpush1.msra.mxu0 0.0
    %3867 = vmatprep.subr.mxu0 0.0
    %3868 = vmatpush1.msra.mxu0 0.0
    %3869 = vmatprep.subr.mxu0 0.0
    %3870 = vmatpush1.msra.mxu0 0.0
    %3871 = vmatprep.subr.mxu0 0.0
    %3872 = vmatpush1.msra.mxu0 0.0
    %3873 = vmatprep.subr.mxu0 0.0
    %3874 = vmatpush1.msra.mxu0 0.0
    %3875 = vmatprep.subr.mxu0 0.0
    %3876 = vmatpush1.msra.mxu0 0.0
    %3877 = vmatprep.subr.mxu0 0.0
    %3878 = vmatpush1.msra.mxu0 0.0
    %3879 = vmatprep.subr.mxu0 0.0
    %3880 = vmatpush1.msra.mxu0 0.0
    %3881 = vmatprep.subr.mxu0 0.0
    %3882 = vmatpush1.msra.mxu0 0.0
    %3883 = vmatprep.subr.mxu0 0.0
    %3884 = vmatpush1.msra.mxu0 0.0
    %3885 = vmatprep.subr.mxu0 0.0
    %3886 = vmatpush1.msra.mxu0 0.0
    %3887 = vmatprep.subr.mxu0 0.0
    %3888 = vmatpush1.msra.mxu0 0.0
    %3889 = vmatprep.subr.mxu0 0.0
    %3890 = vmatpush1.msra.mxu0 0.0
    %3891 = vmatprep.subr.mxu0 0.0
    %3892 = vmatpush1.msra.mxu0 0.0
    %3893 = vmatprep.subr.mxu0 0.0
    %3894 = vmatpush1.msra.mxu0 0.0
    %3895 = vmatprep.subr.mxu0 0.0
    %3896 = vmatpush1.msra.mxu0 0.0
    %3897 = vmatprep.subr.mxu0 0.0
    %3898 = vmatpush1.msra.mxu0 0.0
    %3899 = vmatprep.subr.mxu0 0.0
    %3900 = vmatpush1.msra.mxu0 0.0
    %3901 = vmatprep.subr.mxu0 0.0
    %3902 = vmatpush1.msra.mxu0 0.0
    %3903 = vmatprep.subr.mxu0 0.0
    %3904 = vmatpush1.msra.mxu0 0.0
    %3905 = vmatprep.subr.mxu0 0.0
    %3906 = vmatpush1.msra.mxu0 0.0
    %3907 = vmatprep.subr.mxu0 0.0
    %3908 = vmatpush1.msra.mxu0 0.0
    %3909 = vmatprep.subr.mxu0 0.0
    %3910 = vmatpush1.msra.mxu0 0.0
    %3911 = vmatprep.subr.mxu0 0.0
    %3912 = vmatpush1.msra.mxu0 0.0
    %3913 = vmatprep.subr.mxu0 0.0
    %3914 = vmatpush1.msra.mxu0 0.0
    %3915 = vmatprep.subr.mxu0 0.0
    %3916 = vmatpush1.msra.mxu0 0.0
    %3917 = vmatprep.subr.mxu0 0.0
    %3918 = vmatpush1.msra.mxu0 0.0
    %3919 = vmatprep.mubr.f32.mxu0 0.0
    %3920 = vmatmul.mubr.f32.gmra.mrb[0].mxu0 %v3853
    %v3921 = vpop.f32.mrb[0].mxu0
    %v3922 = vadd.f32 0.0, %v3921
    %v3923 = vpop.f32.mrb[0].mxu0
    %3924 = vdwg.mxu0
    %v3926 = vsel %vm260, %v3683, 0
    %3928 = vmatprep.subr.mxu0 0.0
    %3929 = vmatpush1.msra.mxu0 %v2471
    %3930 = vmatprep.subr.mxu0 0.0
    %3931 = vmatpush1.msra.mxu0 0.0
    %3932 = vmatprep.subr.mxu0 0.0
    %3933 = vmatpush1.msra.mxu0 0.0
    %3934 = vmatprep.subr.mxu0 0.0
    %3935 = vmatpush1.msra.mxu0 0.0
    %3936 = vmatprep.subr.mxu0 0.0
    %3937 = vmatpush1.msra.mxu0 0.0
    %3938 = vmatprep.subr.mxu0 0.0
    %3939 = vmatpush1.msra.mxu0 0.0
    %3940 = vmatprep.subr.mxu0 0.0
    %3941 = vmatpush1.msra.mxu0 0.0
    %3942 = vmatprep.subr.mxu0 0.0
    %3943 = vmatpush1.msra.mxu0 0.0
    %3944 = vmatprep.subr.mxu0 0.0
    %3945 = vmatpush1.msra.mxu0 0.0
    %3946 = vmatprep.subr.mxu0 0.0
    %3947 = vmatpush1.msra.mxu0 0.0
    %3948 = vmatprep.subr.mxu0 0.0
    %3949 = vmatpush1.msra.mxu0 0.0
    %3950 = vmatprep.subr.mxu0 0.0
    %3951 = vmatpush1.msra.mxu0 0.0
    %3952 = vmatprep.subr.mxu0 0.0
    %3953 = vmatpush1.msra.mxu0 0.0
    %3954 = vmatprep.subr.mxu0 0.0
    %3955 = vmatpush1.msra.mxu0 0.0
    %3956 = vmatprep.subr.mxu0 0.0
    %3957 = vmatpush1.msra.mxu0 0.0
    %3958 = vmatprep.subr.mxu0 0.0
    %3959 = vmatpush1.msra.mxu0 0.0
    %3960 = vmatprep.subr.mxu0 0.0
    %3961 = vmatpush1.msra.mxu0 0.0
    %3962 = vmatprep.subr.mxu0 0.0
    %3963 = vmatpush1.msra.mxu0 0.0
    %3964 = vmatprep.subr.mxu0 0.0
    %3965 = vmatpush1.msra.mxu0 0.0
    %3966 = vmatprep.subr.mxu0 0.0
    %3967 = vmatpush1.msra.mxu0 0.0
    %3968 = vmatprep.subr.mxu0 0.0
    %3969 = vmatpush1.msra.mxu0 0.0
    %3970 = vmatprep.subr.mxu0 0.0
    %3971 = vmatpush1.msra.mxu0 0.0
    %3972 = vmatprep.subr.mxu0 0.0
    %3973 = vmatpush1.msra.mxu0 0.0
    %3974 = vmatprep.subr.mxu0 0.0
    %3975 = vmatpush1.msra.mxu0 0.0
    %3976 = vmatprep.subr.mxu0 0.0
    %3977 = vmatpush1.msra.mxu0 0.0
    %3978 = vmatprep.subr.mxu0 0.0
    %3979 = vmatpush1.msra.mxu0 0.0
    %3980 = vmatprep.subr.mxu0 0.0
    %3981 = vmatpush1.msra.mxu0 0.0
    %3982 = vmatprep.subr.mxu0 0.0
    %3983 = vmatpush1.msra.mxu0 0.0
    %3984 = vmatprep.subr.mxu0 0.0
    %3985 = vmatpush1.msra.mxu0 0.0
    %3986 = vmatprep.subr.mxu0 0.0
    %3987 = vmatpush1.msra.mxu0 0.0
    %3988 = vmatprep.subr.mxu0 0.0
    %3989 = vmatpush1.msra.mxu0 0.0
    %3990 = vmatprep.subr.mxu0 0.0
    %3991 = vmatpush1.msra.mxu0 0.0
    %3992 = vmatprep.mubr.f32.mxu0 0.0
    %3993 = vmatmul.mubr.f32.gmra.mrb[0].mxu0 %v3926
    %v3994 = vpop.f32.mrb[0].mxu0
    %v3995 = vadd.f32 %v3922, %v3994
    %v3996 = vpop.f32.mrb[0].mxu0
    %3997 = vdwg.mxu0
    %3998 = vrot.lane.b32.xlu0 %v2561, 112
    %v3999 = vpop.permute.xlu0 %3998
    %4000 = vrot.lane.b32.xlu0 %v2561, 80
    %v4001 = vpop.permute.xlu0 %4000
    %v4002 = vsel %vm260, %v3999, 0
    %v4004 = vsel %vm260, %v4001, 0
    %4006 = vmatprep.subr.mxu0 0.0
    %4007 = vmatpush1.xpose.msra.mxu0 %v4004
    %4008 = vmatprep.subr.mxu0 0.0
    %4009 = vmatpush1.xpose.msra.mxu0 0.0
    %4010 = vmatprep.subr.mxu0 0.0
    %4011 = vmatpush1.xpose.msra.mxu0 0.0
    %4012 = vmatprep.subr.mxu0 0.0
    %4013 = vmatpush1.xpose.msra.mxu0 0.0
    %4014 = vmatprep.subr.mxu0 0.0
    %4015 = vmatpush1.xpose.msra.mxu0 0.0
    %4016 = vmatprep.subr.mxu0 0.0
    %4017 = vmatpush1.xpose.msra.mxu0 0.0
    %4018 = vmatprep.subr.mxu0 0.0
    %4019 = vmatpush1.xpose.msra.mxu0 0.0
    %4020 = vmatprep.subr.mxu0 0.0
    %4021 = vmatpush1.xpose.msra.mxu0 0.0
    %4022 = vmatprep.subr.mxu0 0.0
    %4023 = vmatpush1.xpose.msra.mxu0 0.0
    %4024 = vmatprep.subr.mxu0 0.0
    %4025 = vmatpush1.xpose.msra.mxu0 0.0
    %4026 = vmatprep.subr.mxu0 0.0
    %4027 = vmatpush1.xpose.msra.mxu0 0.0
    %4028 = vmatprep.subr.mxu0 0.0
    %4029 = vmatpush1.xpose.msra.mxu0 0.0
    %4030 = vmatprep.subr.mxu0 0.0
    %4031 = vmatpush1.xpose.msra.mxu0 0.0
    %4032 = vmatprep.subr.mxu0 0.0
    %4033 = vmatpush1.xpose.msra.mxu0 0.0
    %4034 = vmatprep.subr.mxu0 0.0
    %4035 = vmatpush1.xpose.msra.mxu0 0.0
    %4036 = vmatprep.subr.mxu0 0.0
    %4037 = vmatpush1.xpose.msra.mxu0 0.0
    %4038 = vmatprep.subr.mxu0 0.0
    %4039 = vmatpush1.xpose.msra.mxu0 0.0
    %4040 = vmatprep.subr.mxu0 0.0
    %4041 = vmatpush1.xpose.msra.mxu0 0.0
    %4042 = vmatprep.subr.mxu0 0.0
    %4043 = vmatpush1.xpose.msra.mxu0 0.0
    %4044 = vmatprep.subr.mxu0 0.0
    %4045 = vmatpush1.xpose.msra.mxu0 0.0
    %4046 = vmatprep.subr.mxu0 0.0
    %4047 = vmatpush1.xpose.msra.mxu0 0.0
    %4048 = vmatprep.subr.mxu0 0.0
    %4049 = vmatpush1.xpose.msra.mxu0 0.0
    %4050 = vmatprep.subr.mxu0 0.0
    %4051 = vmatpush1.xpose.msra.mxu0 0.0
    %4052 = vmatprep.subr.mxu0 0.0
    %4053 = vmatpush1.xpose.msra.mxu0 0.0
    %4054 = vmatprep.subr.mxu0 0.0
    %4055 = vmatpush1.xpose.msra.mxu0 0.0
    %4056 = vmatprep.subr.mxu0 0.0
    %4057 = vmatpush1.xpose.msra.mxu0 0.0
    %4058 = vmatprep.subr.mxu0 0.0
    %4059 = vmatpush1.xpose.msra.mxu0 0.0
    %4060 = vmatprep.subr.mxu0 0.0
    %4061 = vmatpush1.xpose.msra.mxu0 0.0
    %4062 = vmatprep.subr.mxu0 0.0
    %4063 = vmatpush1.xpose.msra.mxu0 0.0
    %4064 = vmatprep.subr.mxu0 0.0
    %4065 = vmatpush1.xpose.msra.mxu0 0.0
    %4066 = vmatprep.subr.mxu0 0.0
    %4067 = vmatpush1.xpose.msra.mxu0 0.0
    %4068 = vmatprep.subr.mxu0 0.0
    %4069 = vmatpush1.xpose.msra.mxu0 0.0
    %4070 = vmatprep.mubr.f32.mxu0 0.0
    %4071 = vmatmul.mubr.f32.gmra.mrb[0].mxu0 %v4002
    %v4072 = vpop.f32.mrb[0].mxu0
    %v4073 = vadd.f32 0.0, %v4072
    %v4074 = vpop.f32.mrb[0].mxu0
    %4075 = vdwg.mxu0
    %v4076 = vmul.f32 %v4073, 0.35355338
    %v4077 = vsel %vm260, %v4076, -inf
    %4078 = vmax.xlane.f32.xlu0 %v4077
    %v4079 = vpop.xlane.xlu0 %4078
    %v4080 = vsub.f32 %v4076, %v4079
    %v4081 = vmul.f32 %v4080, 1.442695
    %v4082 = vpow.pop %v4081
    %v4083 = vsel %vm260, %v4082, 0.0
    %4084 = vadd.xlane.f32.xlu0 %v4083
    %v4085 = vpop.xlane.xlu0 %4084
    %v4086 = vrcp.pop %v4085
    %v4087 = vmul.f32 %v4082, %v4086
    %4088 = vrot.lane.b32.xlu0 %v2561, 48
    %v4089 = vpop.permute.xlu0 %4088
    %v4092 = vsel %vm260, %v4087, 0
    %4094 = vmatprep.subr.mxu0 0.0
    %4095 = vmatpush1.msra.mxu0 %v4089
    %4096 = vmatprep.subr.mxu0 0.0
    %4097 = vmatpush1.msra.mxu0 0.0
    %4098 = vmatprep.subr.mxu0 0.0
    %4099 = vmatpush1.msra.mxu0 0.0
    %4100 = vmatprep.subr.mxu0 0.0
    %4101 = vmatpush1.msra.mxu0 0.0
    %4102 = vmatprep.subr.mxu0 0.0
    %4103 = vmatpush1.msra.mxu0 0.0
    %4104 = vmatprep.subr.mxu0 0.0
    %4105 = vmatpush1.msra.mxu0 0.0
    %4106 = vmatprep.subr.mxu0 0.0
    %4107 = vmatpush1.msra.mxu0 0.0
    %4108 = vmatprep.subr.mxu0 0.0
    %4109 = vmatpush1.msra.mxu0 0.0
    %4110 = vmatprep.subr.mxu0 0.0
    %4111 = vmatpush1.msra.mxu0 0.0
    %4112 = vmatprep.subr.mxu0 0.0
    %4113 = vmatpush1.msra.mxu0 0.0
    %4114 = vmatprep.subr.mxu0 0.0
    %4115 = vmatpush1.msra.mxu0 0.0
    %4116 = vmatprep.subr.mxu0 0.0
    %4117 = vmatpush1.msra.mxu0 0.0
    %4118 = vmatprep.subr.mxu0 0.0
    %4119 = vmatpush1.msra.mxu0 0.0
    %4120 = vmatprep.subr.mxu0 0.0
    %4121 = vmatpush1.msra.mxu0 0.0
    %4122 = vmatprep.subr.mxu0 0.0
    %4123 = vmatpush1.msra.mxu0 0.0
    %4124 = vmatprep.subr.mxu0 0.0
    %4125 = vmatpush1.msra.mxu0 0.0
    %4126 = vmatprep.subr.mxu0 0.0
    %4127 = vmatpush1.msra.mxu0 0.0
    %4128 = vmatprep.subr.mxu0 0.0
    %4129 = vmatpush1.msra.mxu0 0.0
    %4130 = vmatprep.subr.mxu0 0.0
    %4131 = vmatpush1.msra.mxu0 0.0
    %4132 = vmatprep.subr.mxu0 0.0
    %4133 = vmatpush1.msra.mxu0 0.0
    %4134 = vmatprep.subr.mxu0 0.0
    %4135 = vmatpush1.msra.mxu0 0.0
    %4136 = vmatprep.subr.mxu0 0.0
    %4137 = vmatpush1.msra.mxu0 0.0
    %4138 = vmatprep.subr.mxu0 0.0
    %4139 = vmatpush1.msra.mxu0 0.0
    %4140 = vmatprep.subr.mxu0 0.0
    %4141 = vmatpush1.msra.mxu0 0.0
    %4142 = vmatprep.subr.mxu0 0.0
    %4143 = vmatpush1.msra.mxu0 0.0
    %4144 = vmatprep.subr.mxu0 0.0
    %4145 = vmatpush1.msra.mxu0 0.0
    %4146 = vmatprep.subr.mxu0 0.0
    %4147 = vmatpush1.msra.mxu0 0.0
    %4148 = vmatprep.subr.mxu0 0.0
    %4149 = vmatpush1.msra.mxu0 0.0
    %4150 = vmatprep.subr.mxu0 0.0
    %4151 = vmatpush1.msra.mxu0 0.0
    %4152 = vmatprep.subr.mxu0 0.0
    %4153 = vmatpush1.msra.mxu0 0.0
    %4154 = vmatprep.subr.mxu0 0.0
    %4155 = vmatpush1.msra.mxu0 0.0
    %4156 = vmatprep.subr.mxu0 0.0
    %4157 = vmatpush1.msra.mxu0 0.0
    %4158 = vmatprep.mubr.f32.mxu0 0.0
    %4159 = vmatmul.mubr.f32.gmra.mrb[0].mxu0 %v4092
    %v4160 = vpop.f32.mrb[0].mxu0
    %v4161 = vadd.f32 0.0, %v4160
    %v4162 = vpop.f32.mrb[0].mxu0
    %4163 = vdwg.mxu0
    %v4165 = vsel %vm260, %v4161, 0
    %4167 = vmatprep.subr.mxu0 0.0
    %4168 = vmatpush1.msra.mxu0 %v2473
    %4169 = vmatprep.subr.mxu0 0.0
    %4170 = vmatpush1.msra.mxu0 0.0
    %4171 = vmatprep.subr.mxu0 0.0
    %4172 = vmatpush1.msra.mxu0 0.0
    %4173 = vmatprep.subr.mxu0 0.0
    %4174 = vmatpush1.msra.mxu0 0.0
    %4175 = vmatprep.subr.mxu0 0.0
    %4176 = vmatpush1.msra.mxu0 0.0
    %4177 = vmatprep.subr.mxu0 0.0
    %4178 = vmatpush1.msra.mxu0 0.0
    %4179 = vmatprep.subr.mxu0 0.0
    %4180 = vmatpush1.msra.mxu0 0.0
    %4181 = vmatprep.subr.mxu0 0.0
    %4182 = vmatpush1.msra.mxu0 0.0
    %4183 = vmatprep.subr.mxu0 0.0
    %4184 = vmatpush1.msra.mxu0 0.0
    %4185 = vmatprep.subr.mxu0 0.0
    %4186 = vmatpush1.msra.mxu0 0.0
    %4187 = vmatprep.subr.mxu0 0.0
    %4188 = vmatpush1.msra.mxu0 0.0
    %4189 = vmatprep.subr.mxu0 0.0
    %4190 = vmatpush1.msra.mxu0 0.0
    %4191 = vmatprep.subr.mxu0 0.0
    %4192 = vmatpush1.msra.mxu0 0.0
    %4193 = vmatprep.subr.mxu0 0.0
    %4194 = vmatpush1.msra.mxu0 0.0
    %4195 = vmatprep.subr.mxu0 0.0
    %4196 = vmatpush1.msra.mxu0 0.0
    %4197 = vmatprep.subr.mxu0 0.0
    %4198 = vmatpush1.msra.mxu0 0.0
    %4199 = vmatprep.subr.mxu0 0.0
    %4200 = vmatpush1.msra.mxu0 0.0
    %4201 = vmatprep.subr.mxu0 0.0
    %4202 = vmatpush1.msra.mxu0 0.0
    %4203 = vmatprep.subr.mxu0 0.0
    %4204 = vmatpush1.msra.mxu0 0.0
    %4205 = vmatprep.subr.mxu0 0.0
    %4206 = vmatpush1.msra.mxu0 0.0
    %4207 = vmatprep.subr.mxu0 0.0
    %4208 = vmatpush1.msra.mxu0 0.0
    %4209 = vmatprep.subr.mxu0 0.0
    %4210 = vmatpush1.msra.mxu0 0.0
    %4211 = vmatprep.subr.mxu0 0.0
    %4212 = vmatpush1.msra.mxu0 0.0
    %4213 = vmatprep.subr.mxu0 0.0
    %4214 = vmatpush1.msra.mxu0 0.0
    %4215 = vmatprep.subr.mxu0 0.0
    %4216 = vmatpush1.msra.mxu0 0.0
    %4217 = vmatprep.subr.mxu0 0.0
    %4218 = vmatpush1.msra.mxu0 0.0
    %4219 = vmatprep.subr.mxu0 0.0
    %4220 = vmatpush1.msra.mxu0 0.0
    %4221 = vmatprep.subr.mxu0 0.0
    %4222 = vmatpush1.msra.mxu0 0.0
    %4223 = vmatprep.subr.mxu0 0.0
    %4224 = vmatpush1.msra.mxu0 0.0
    %4225 = vmatprep.subr.mxu0 0.0
    %4226 = vmatpush1.msra.mxu0 0.0
    %4227 = vmatprep.subr.mxu0 0.0
    %4228 = vmatpush1.msra.mxu0 0.0
    %4229 = vmatprep.subr.mxu0 0.0
    %4230 = vmatpush1.msra.mxu0 0.0
    %4231 = vmatprep.mubr.f32.mxu0 0.0
    %4232 = vmatmul.mubr.f32.gmra.mrb[0].mxu0 %v4165
    %v4233 = vpop.f32.mrb[0].mxu0
    %v4234 = vadd.f32 0.0, %v4233
    %v4235 = vpop.f32.mrb[0].mxu0
    %4236 = vdwg.mxu0
    %v4237 = vadd.f32 %v3995, %v4234
    %4238 = vrot.lane.b32.xlu0 %v2561, 104
    %v4239 = vpop.permute.xlu0 %4238
    %4240 = vrot.lane.b32.xlu0 %v2561, 72
    %v4241 = vpop.permute.xlu0 %4240
    %v4242 = vsel %vm260, %v4239, 0
    %v4244 = vsel %vm260, %v4241, 0
    %4246 = vmatprep.subr.mxu0 0.0
    %4247 = vmatpush1.xpose.msra.mxu0 %v4244
    %4248 = vmatprep.subr.mxu0 0.0
    %4249 = vmatpush1.xpose.msra.mxu0 0.0
    %4250 = vmatprep.subr.mxu0 0.0
    %4251 = vmatpush1.xpose.msra.mxu0 0.0
    %4252 = vmatprep.subr.mxu0 0.0
    %4253 = vmatpush1.xpose.msra.mxu0 0.0
    %4254 = vmatprep.subr.mxu0 0.0
    %4255 = vmatpush1.xpose.msra.mxu0 0.0
    %4256 = vmatprep.subr.mxu0 0.0
    %4257 = vmatpush1.xpose.msra.mxu0 0.0
    %4258 = vmatprep.subr.mxu0 0.0
    %4259 = vmatpush1.xpose.msra.mxu0 0.0
    %4260 = vmatprep.subr.mxu0 0.0
    %4261 = vmatpush1.xpose.msra.mxu0 0.0
    %4262 = vmatprep.subr.mxu0 0.0
    %4263 = vmatpush1.xpose.msra.mxu0 0.0
    %4264 = vmatprep.subr.mxu0 0.0
    %4265 = vmatpush1.xpose.msra.mxu0 0.0
    %4266 = vmatprep.subr.mxu0 0.0
    %4267 = vmatpush1.xpose.msra.mxu0 0.0
    %4268 = vmatprep.subr.mxu0 0.0
    %4269 = vmatpush1.xpose.msra.mxu0 0.0
    %4270 = vmatprep.subr.mxu0 0.0
    %4271 = vmatpush1.xpose.msra.mxu0 0.0
    %4272 = vmatprep.subr.mxu0 0.0
    %4273 = vmatpush1.xpose.msra.mxu0 0.0
    %4274 = vmatprep.subr.mxu0 0.0
    %4275 = vmatpush1.xpose.msra.mxu0 0.0
    %4276 = vmatprep.subr.mxu0 0.0
    %4277 = vmatpush1.xpose.msra.mxu0 0.0
    %4278 = vmatprep.subr.mxu0 0.0
    %4279 = vmatpush1.xpose.msra.mxu0 0.0
    %4280 = vmatprep.subr.mxu0 0.0
    %4281 = vmatpush1.xpose.msra.mxu0 0.0
    %4282 = vmatprep.subr.mxu0 0.0
    %4283 = vmatpush1.xpose.msra.mxu0 0.0
    %4284 = vmatprep.subr.mxu0 0.0
    %4285 = vmatpush1.xpose.msra.mxu0 0.0
    %4286 = vmatprep.subr.mxu0 0.0
    %4287 = vmatpush1.xpose.msra.mxu0 0.0
    %4288 = vmatprep.subr.mxu0 0.0
    %4289 = vmatpush1.xpose.msra.mxu0 0.0
    %4290 = vmatprep.subr.mxu0 0.0
    %4291 = vmatpush1.xpose.msra.mxu0 0.0
    %4292 = vmatprep.subr.mxu0 0.0
    %4293 = vmatpush1.xpose.msra.mxu0 0.0
    %4294 = vmatprep.subr.mxu0 0.0
    %4295 = vmatpush1.xpose.msra.mxu0 0.0
    %4296 = vmatprep.subr.mxu0 0.0
    %4297 = vmatpush1.xpose.msra.mxu0 0.0
    %4298 = vmatprep.subr.mxu0 0.0
    %4299 = vmatpush1.xpose.msra.mxu0 0.0
    %4300 = vmatprep.subr.mxu0 0.0
    %4301 = vmatpush1.xpose.msra.mxu0 0.0
    %4302 = vmatprep.subr.mxu0 0.0
    %4303 = vmatpush1.xpose.msra.mxu0 0.0
    %4304 = vmatprep.subr.mxu0 0.0
    %4305 = vmatpush1.xpose.msra.mxu0 0.0
    %4306 = vmatprep.subr.mxu0 0.0
    %4307 = vmatpush1.xpose.msra.mxu0 0.0
    %4308 = vmatprep.subr.mxu0 0.0
    %4309 = vmatpush1.xpose.msra.mxu0 0.0
    %4310 = vmatprep.mubr.f32.mxu0 0.0
    %4311 = vmatmul.mubr.f32.gmra.mrb[0].mxu0 %v4242
    %v4312 = vpop.f32.mrb[0].mxu0
    %v4313 = vadd.f32 0.0, %v4312
    %v4314 = vpop.f32.mrb[0].mxu0
    %4315 = vdwg.mxu0
    %v4316 = vmul.f32 %v4313, 0.35355338
    %v4317 = vsel %vm260, %v4316, -inf
    %4318 = vmax.xlane.f32.xlu0 %v4317
    %v4319 = vpop.xlane.xlu0 %4318
    %v4320 = vsub.f32 %v4316, %v4319
    %v4321 = vmul.f32 %v4320, 1.442695
    %v4322 = vpow.pop %v4321
    %v4323 = vsel %vm260, %v4322, 0.0
    %4324 = vadd.xlane.f32.xlu0 %v4323
    %v4325 = vpop.xlane.xlu0 %4324
    %v4326 = vrcp.pop %v4325
    %v4327 = vmul.f32 %v4322, %v4326
    %4328 = vrot.lane.b32.xlu0 %v2561, 40
    %v4329 = vpop.permute.xlu0 %4328
    %v4332 = vsel %vm260, %v4327, 0
    %4334 = vmatprep.subr.mxu0 0.0
    %4335 = vmatpush1.msra.mxu0 %v4329
    %4336 = vmatprep.subr.mxu0 0.0
    %4337 = vmatpush1.msra.mxu0 0.0
    %4338 = vmatprep.subr.mxu0 0.0
    %4339 = vmatpush1.msra.mxu0 0.0
    %4340 = vmatprep.subr.mxu0 0.0
    %4341 = vmatpush1.msra.mxu0 0.0
    %4342 = vmatprep.subr.mxu0 0.0
    %4343 = vmatpush1.msra.mxu0 0.0
    %4344 = vmatprep.subr.mxu0 0.0
    %4345 = vmatpush1.msra.mxu0 0.0
    %4346 = vmatprep.subr.mxu0 0.0
    %4347 = vmatpush1.msra.mxu0 0.0
    %4348 = vmatprep.subr.mxu0 0.0
    %4349 = vmatpush1.msra.mxu0 0.0
    %4350 = vmatprep.subr.mxu0 0.0
    %4351 = vmatpush1.msra.mxu0 0.0
    %4352 = vmatprep.subr.mxu0 0.0
    %4353 = vmatpush1.msra.mxu0 0.0
    %4354 = vmatprep.subr.mxu0 0.0
    %4355 = vmatpush1.msra.mxu0 0.0
    %4356 = vmatprep.subr.mxu0 0.0
    %4357 = vmatpush1.msra.mxu0 0.0
    %4358 = vmatprep.subr.mxu0 0.0
    %4359 = vmatpush1.msra.mxu0 0.0
    %4360 = vmatprep.subr.mxu0 0.0
    %4361 = vmatpush1.msra.mxu0 0.0
    %4362 = vmatprep.subr.mxu0 0.0
    %4363 = vmatpush1.msra.mxu0 0.0
    %4364 = vmatprep.subr.mxu0 0.0
    %4365 = vmatpush1.msra.mxu0 0.0
    %4366 = vmatprep.subr.mxu0 0.0
    %4367 = vmatpush1.msra.mxu0 0.0
    %4368 = vmatprep.subr.mxu0 0.0
    %4369 = vmatpush1.msra.mxu0 0.0
    %4370 = vmatprep.subr.mxu0 0.0
    %4371 = vmatpush1.msra.mxu0 0.0
    %4372 = vmatprep.subr.mxu0 0.0
    %4373 = vmatpush1.msra.mxu0 0.0
    %4374 = vmatprep.subr.mxu0 0.0
    %4375 = vmatpush1.msra.mxu0 0.0
    %4376 = vmatprep.subr.mxu0 0.0
    %4377 = vmatpush1.msra.mxu0 0.0
    %4378 = vmatprep.subr.mxu0 0.0
    %4379 = vmatpush1.msra.mxu0 0.0
    %4380 = vmatprep.subr.mxu0 0.0
    %4381 = vmatpush1.msra.mxu0 0.0
    %4382 = vmatprep.subr.mxu0 0.0
    %4383 = vmatpush1.msra.mxu0 0.0
    %4384 = vmatprep.subr.mxu0 0.0
    %4385 = vmatpush1.msra.mxu0 0.0
    %4386 = vmatprep.subr.mxu0 0.0
    %4387 = vmatpush1.msra.mxu0 0.0
    %4388 = vmatprep.subr.mxu0 0.0
    %4389 = vmatpush1.msra.mxu0 0.0
    %4390 = vmatprep.subr.mxu0 0.0
    %4391 = vmatpush1.msra.mxu0 0.0
    %4392 = vmatprep.subr.mxu0 0.0
    %4393 = vmatpush1.msra.mxu0 0.0
    %4394 = vmatprep.subr.mxu0 0.0
    %4395 = vmatpush1.msra.mxu0 0.0
    %4396 = vmatprep.subr.mxu0 0.0
    %4397 = vmatpush1.msra.mxu0 0.0
    %4398 = vmatprep.mubr.f32.mxu0 0.0
    %4399 = vmatmul.mubr.f32.gmra.mrb[0].mxu0 %v4332
    %v4400 = vpop.f32.mrb[0].mxu0
    %v4401 = vadd.f32 0.0, %v4400
    %v4402 = vpop.f32.mrb[0].mxu0
    %4403 = vdwg.mxu0
    %v4405 = vsel %vm260, %v4401, 0
    %4407 = vmatprep.subr.mxu0 0.0
    %4408 = vmatpush1.msra.mxu0 %v2474
    %4409 = vmatprep.subr.mxu0 0.0
    %4410 = vmatpush1.msra.mxu0 0.0
    %4411 = vmatprep.subr.mxu0 0.0
    %4412 = vmatpush1.msra.mxu0 0.0
    %4413 = vmatprep.subr.mxu0 0.0
    %4414 = vmatpush1.msra.mxu0 0.0
    %4415 = vmatprep.subr.mxu0 0.0
    %4416 = vmatpush1.msra.mxu0 0.0
    %4417 = vmatprep.subr.mxu0 0.0
    %4418 = vmatpush1.msra.mxu0 0.0
    %4419 = vmatprep.subr.mxu0 0.0
    %4420 = vmatpush1.msra.mxu0 0.0
    %4421 = vmatprep.subr.mxu0 0.0
    %4422 = vmatpush1.msra.mxu0 0.0
    %4423 = vmatprep.subr.mxu0 0.0
    %4424 = vmatpush1.msra.mxu0 0.0
    %4425 = vmatprep.subr.mxu0 0.0
    %4426 = vmatpush1.msra.mxu0 0.0
    %4427 = vmatprep.subr.mxu0 0.0
    %4428 = vmatpush1.msra.mxu0 0.0
    %4429 = vmatprep.subr.mxu0 0.0
    %4430 = vmatpush1.msra.mxu0 0.0
    %4431 = vmatprep.subr.mxu0 0.0
    %4432 = vmatpush1.msra.mxu0 0.0
    %4433 = vmatprep.subr.mxu0 0.0
    %4434 = vmatpush1.msra.mxu0 0.0
    %4435 = vmatprep.subr.mxu0 0.0
    %4436 = vmatpush1.msra.mxu0 0.0
    %4437 = vmatprep.subr.mxu0 0.0
    %4438 = vmatpush1.msra.mxu0 0.0
    %4439 = vmatprep.subr.mxu0 0.0
    %4440 = vmatpush1.msra.mxu0 0.0
    %4441 = vmatprep.subr.mxu0 0.0
    %4442 = vmatpush1.msra.mxu0 0.0
    %4443 = vmatprep.subr.mxu0 0.0
    %4444 = vmatpush1.msra.mxu0 0.0
    %4445 = vmatprep.subr.mxu0 0.0
    %4446 = vmatpush1.msra.mxu0 0.0
    %4447 = vmatprep.subr.mxu0 0.0
    %4448 = vmatpush1.msra.mxu0 0.0
    %4449 = vmatprep.subr.mxu0 0.0
    %4450 = vmatpush1.msra.mxu0 0.0
    %4451 = vmatprep.subr.mxu0 0.0
    %4452 = vmatpush1.msra.mxu0 0.0
    %4453 = vmatprep.subr.mxu0 0.0
    %4454 = vmatpush1.msra.mxu0 0.0
    %4455 = vmatprep.subr.mxu0 0.0
    %4456 = vmatpush1.msra.mxu0 0.0
    %4457 = vmatprep.subr.mxu0 0.0
    %4458 = vmatpush1.msra.mxu0 0.0
    %4459 = vmatprep.subr.mxu0 0.0
    %4460 = vmatpush1.msra.mxu0 0.0
    %4461 = vmatprep.subr.mxu0 0.0
    %4462 = vmatpush1.msra.mxu0 0.0
    %4463 = vmatprep.subr.mxu0 0.0
    %4464 = vmatpush1.msra.mxu0 0.0
    %4465 = vmatprep.subr.mxu0 0.0
    %4466 = vmatpush1.msra.mxu0 0.0
    %4467 = vmatprep.subr.mxu0 0.0
    %4468 = vmatpush1.msra.mxu0 0.0
    %4469 = vmatprep.subr.mxu0 0.0
    %4470 = vmatpush1.msra.mxu0 0.0
    %4471 = vmatprep.mubr.f32.mxu0 0.0
    %4472 = vmatmul.mubr.f32.gmra.mrb[0].mxu0 %v4405
    %v4473 = vpop.f32.mrb[0].mxu0
    %v4474 = vadd.f32 0.0, %v4473
    %v4475 = vpop.f32.mrb[0].mxu0
    %4476 = vdwg.mxu0
    %v4477 = vadd.f32 %v4237, %v4474
    %s4478 = scalar_lea.vmem %s8, 1
    %v4479 = vld [vmem:[%s4478] sm:$0x1]
    %v4481 = vlaneseq
    %v4482 = vshrl.u32 %v4481, 7
    %v4483 = vsub.s32 0, %v4482
    %v4484 = vrot.slane %v4479, %v4483
    %v4486 = vadd.f32 %v3520, %v4484
    %v4487 = vadd.f32 %v4477, %v4484
    %v4488 = vadd.f32 %v2463, %v4486
    %v4489 = vadd.f32 %v2464, %v4487
    %s4490 = scalar_lea.vmem %s9, 1
    %v4491 = vld [vmem:[%s4490] sm:$0x1]
    %s4492 = scalar_lea.vmem %s10, 1
    %v4493 = vld [vmem:[%s4492] sm:$0x1]
    %v4494 = vsel %vm175, %v4488, 0.0
    %4495 = vadd.xlane.f32.xlu0 %v4494
    %v4496 = vpop.xlane.xlu0 %4495
    %v4497 = vsel %vm175, %v4489, 0.0
    %4498 = vadd.xlane.f32.xlu0 %v4497
    %v4499 = vpop.xlane.xlu0 %4498
    %v4500 = vmul.f32 %v4496, %v2191
    %v4501 = vmul.f32 %v4499, %v2191
    %v4502 = vsub.f32 %v4488, %v4500
    %v4503 = vsub.f32 %v4489, %v4501
    %v4504 = vmul.f32 %v4502, %v4502
    %v4505 = vmul.f32 %v4503, %v4503
    %v4506 = vsel %vm175, %v4504, 0.0
    %4507 = vadd.xlane.f32.xlu0 %v4506
    %v4508 = vpop.xlane.xlu0 %4507
    %v4509 = vsel %vm175, %v4505, 0.0
    %4510 = vadd.xlane.f32.xlu0 %v4509
    %v4511 = vpop.xlane.xlu0 %4510
    %v4512 = vmul.f32 %v4508, %v2191
    %v4513 = vmul.f32 %v4511, %v2191
    %v4514 = vadd.f32 %v4512, 1e-05
    %v4515 = vadd.f32 %v4513, 1e-05
    %v4516 = vrsqrt.pop %v4514
    %v4517 = vrsqrt.pop %v4515
    %v4518 = vmul.f32 %v4502, %v4516
    %v4519 = vmul.f32 %v4503, %v4517
    %v4521 = vlaneseq
    %v4522 = vshrl.u32 %v4521, 7
    %v4523 = vsub.s32 0, %v4522
    %v4524 = vrot.slane %v4491, %v4523
    %v4526 = vmul.f32 %v4518, %v4524
    %v4527 = vmul.f32 %v4519, %v4524
    %v4529 = vlaneseq
    %v4530 = vshrl.u32 %v4529, 7
    %v4531 = vsub.s32 0, %v4530
    %v4532 = vrot.slane %v4493, %v4531
    %v4534 = vadd.f32 %v4526, %v4532
    %v4535 = vadd.f32 %v4527, %v4532
    %s4536 = scalar_lea.vmem %s11, 32
    %v4537 = vld [vmem:[%s4536] sm:$0xff]
    %v4538 = vld [vmem:[%s4536 + $0x8] sm:$0xff]
    %v4539 = vld [vmem:[%s4536 + $0x10] sm:$0xff]
    %v4540 = vld [vmem:[%s4536 + $0x18] sm:$0xff]
    %s4541 = scalar_lea.vmem %s12, 1
    %v4542 = vld [vmem:[%s4541] sm:$0x1]
    %v4544 = vlaneseq
    %v4545 = vshrl.u32 %v4544, 7
    %v4546 = vsub.s32 0, %v4545
    %v4547 = vrot.slane %v4542, %v4546
    %v4550 = vsel %vm175, %v4534, 0
    %v4553 = vsel %vm175, %v4535, 0
    %4555 = vmatprep.subr.mxu0 0.0
    %4556 = vmatpush1.msra.mxu0 %v4537
    %4557 = vmatprep.subr.mxu0 0.0
    %4558 = vmatpush1.msra.mxu0 %v4538
    %4559 = vmatprep.subr.mxu0 0.0
    %4560 = vmatpush1.msra.mxu0 %v4539
    %4561 = vmatprep.subr.mxu0 0.0
    %4562 = vmatpush1.msra.mxu0 %v4540
    %4563 = vmatprep.subr.mxu0 0.0
    %4564 = vmatpush1.msra.mxu0 0.0
    %4565 = vmatprep.subr.mxu0 0.0
    %4566 = vmatpush1.msra.mxu0 0.0
    %4567 = vmatprep.subr.mxu0 0.0
    %4568 = vmatpush1.msra.mxu0 0.0
    %4569 = vmatprep.subr.mxu0 0.0
    %4570 = vmatpush1.msra.mxu0 0.0
    %4571 = vmatprep.subr.mxu0 0.0
    %4572 = vmatpush1.msra.mxu0 0.0
    %4573 = vmatprep.subr.mxu0 0.0
    %4574 = vmatpush1.msra.mxu0 0.0
    %4575 = vmatprep.subr.mxu0 0.0
    %4576 = vmatpush1.msra.mxu0 0.0
    %4577 = vmatprep.subr.mxu0 0.0
    %4578 = vmatpush1.msra.mxu0 0.0
    %4579 = vmatprep.subr.mxu0 0.0
    %4580 = vmatpush1.msra.mxu0 0.0
    %4581 = vmatprep.subr.mxu0 0.0
    %4582 = vmatpush1.msra.mxu0 0.0
    %4583 = vmatprep.subr.mxu0 0.0
    %4584 = vmatpush1.msra.mxu0 0.0
    %4585 = vmatprep.subr.mxu0 0.0
    %4586 = vmatpush1.msra.mxu0 0.0
    %4587 = vmatprep.subr.mxu0 0.0
    %4588 = vmatpush1.msra.mxu0 0.0
    %4589 = vmatprep.subr.mxu0 0.0
    %4590 = vmatpush1.msra.mxu0 0.0
    %4591 = vmatprep.subr.mxu0 0.0
    %4592 = vmatpush1.msra.mxu0 0.0
    %4593 = vmatprep.subr.mxu0 0.0
    %4594 = vmatpush1.msra.mxu0 0.0
    %4595 = vmatprep.subr.mxu0 0.0
    %4596 = vmatpush1.msra.mxu0 0.0
    %4597 = vmatprep.subr.mxu0 0.0
    %4598 = vmatpush1.msra.mxu0 0.0
    %4599 = vmatprep.subr.mxu0 0.0
    %4600 = vmatpush1.msra.mxu0 0.0
    %4601 = vmatprep.subr.mxu0 0.0
    %4602 = vmatpush1.msra.mxu0 0.0
    %4603 = vmatprep.subr.mxu0 0.0
    %4604 = vmatpush1.msra.mxu0 0.0
    %4605 = vmatprep.subr.mxu0 0.0
    %4606 = vmatpush1.msra.mxu0 0.0
    %4607 = vmatprep.subr.mxu0 0.0
    %4608 = vmatpush1.msra.mxu0 0.0
    %4609 = vmatprep.subr.mxu0 0.0
    %4610 = vmatpush1.msra.mxu0 0.0
    %4611 = vmatprep.subr.mxu0 0.0
    %4612 = vmatpush1.msra.mxu0 0.0
    %4613 = vmatprep.subr.mxu0 0.0
    %4614 = vmatpush1.msra.mxu0 0.0
    %4615 = vmatprep.subr.mxu0 0.0
    %4616 = vmatpush1.msra.mxu0 0.0
    %4617 = vmatprep.subr.mxu0 0.0
    %4618 = vmatpush1.msra.mxu0 0.0
    %4619 = vmatprep.mubr.f32.mxu0 0.0
    %4620 = vmatmul.mubr.f32.gmra.mrb[0].mxu0 %v4550
    %v4621 = vpop.f32.mrb[0].mxu0
    %v4622 = vadd.f32 %v4547, %v4621
    %v4623 = vpop.f32.mrb[0].mxu0
    %4624 = vmatprep.mubr.f32.mxu0 0.0
    %4625 = vmatmul.mubr.f32.gmra.mrb[0].mxu0 %v4553
    %v4626 = vpop.f32.mrb[0].mxu0
    %v4627 = vadd.f32 %v4547, %v4626
    %v4628 = vpop.f32.mrb[0].mxu0
    %4629 = vdwg.mxu0
    %v4630 = vmax.f32 %v4622, 0.0
    %v4631 = vmax.f32 %v4627, 0.0
    %s4632 = scalar_lea.vmem %s13, 64
    %v4633 = vld [vmem:[%s4632] sm:$0xff]
    %v4634 = vld [vmem:[%s4632 + $0x8] sm:$0xff]
    %v4635 = vld [vmem:[%s4632 + $0x10] sm:$0xff]
    %v4636 = vld [vmem:[%s4632 + $0x18] sm:$0xff]
    %v4637 = vld [vmem:[%s4632 + $0x20] sm:$0xff]
    %v4638 = vld [vmem:[%s4632 + $0x28] sm:$0xff]
    %v4639 = vld [vmem:[%s4632 + $0x30] sm:$0xff]
    %v4640 = vld [vmem:[%s4632 + $0x38] sm:$0xff]
    %s4641 = scalar_lea.vmem %s14, 1
    %v4642 = vld [vmem:[%s4641] sm:$0x1]
    %v4644 = vlaneseq
    %v4645 = vshrl.u32 %v4644, 7
    %v4646 = vsub.s32 0, %v4645
    %v4647 = vrot.slane %v4642, %v4646
    %v4650 = vsel %vm2337, %v4630, 0
    %v4653 = vsel %vm2337, %v4631, 0
    %4655 = vmatprep.subr.mxu0 0.0
    %4656 = vmatpush1.msra.mxu0 %v4633
    %4657 = vmatprep.subr.mxu0 0.0
    %4658 = vmatpush1.msra.mxu0 %v4634
    %4659 = vmatprep.subr.mxu0 0.0
    %4660 = vmatpush1.msra.mxu0 %v4635
    %4661 = vmatprep.subr.mxu0 0.0
    %4662 = vmatpush1.msra.mxu0 %v4636
    %4663 = vmatprep.subr.mxu0 0.0
    %4664 = vmatpush1.msra.mxu0 %v4637
    %4665 = vmatprep.subr.mxu0 0.0
    %4666 = vmatpush1.msra.mxu0 %v4638
    %4667 = vmatprep.subr.mxu0 0.0
    %4668 = vmatpush1.msra.mxu0 %v4639
    %4669 = vmatprep.subr.mxu0 0.0
    %4670 = vmatpush1.msra.mxu0 %v4640
    %4671 = vmatprep.subr.mxu0 0.0
    %4672 = vmatpush1.msra.mxu0 0.0
    %4673 = vmatprep.subr.mxu0 0.0
    %4674 = vmatpush1.msra.mxu0 0.0
    %4675 = vmatprep.subr.mxu0 0.0
    %4676 = vmatpush1.msra.mxu0 0.0
    %4677 = vmatprep.subr.mxu0 0.0
    %4678 = vmatpush1.msra.mxu0 0.0
    %4679 = vmatprep.subr.mxu0 0.0
    %4680 = vmatpush1.msra.mxu0 0.0
    %4681 = vmatprep.subr.mxu0 0.0
    %4682 = vmatpush1.msra.mxu0 0.0
    %4683 = vmatprep.subr.mxu0 0.0
    %4684 = vmatpush1.msra.mxu0 0.0
    %4685 = vmatprep.subr.mxu0 0.0
    %4686 = vmatpush1.msra.mxu0 0.0
    %4687 = vmatprep.subr.mxu0 0.0
    %4688 = vmatpush1.msra.mxu0 0.0
    %4689 = vmatprep.subr.mxu0 0.0
    %4690 = vmatpush1.msra.mxu0 0.0
    %4691 = vmatprep.subr.mxu0 0.0
    %4692 = vmatpush1.msra.mxu0 0.0
    %4693 = vmatprep.subr.mxu0 0.0
    %4694 = vmatpush1.msra.mxu0 0.0
    %4695 = vmatprep.subr.mxu0 0.0
    %4696 = vmatpush1.msra.mxu0 0.0
    %4697 = vmatprep.subr.mxu0 0.0
    %4698 = vmatpush1.msra.mxu0 0.0
    %4699 = vmatprep.subr.mxu0 0.0
    %4700 = vmatpush1.msra.mxu0 0.0
    %4701 = vmatprep.subr.mxu0 0.0
    %4702 = vmatpush1.msra.mxu0 0.0
    %4703 = vmatprep.subr.mxu0 0.0
    %4704 = vmatpush1.msra.mxu0 0.0
    %4705 = vmatprep.subr.mxu0 0.0
    %4706 = vmatpush1.msra.mxu0 0.0
    %4707 = vmatprep.subr.mxu0 0.0
    %4708 = vmatpush1.msra.mxu0 0.0
    %4709 = vmatprep.subr.mxu0 0.0
    %4710 = vmatpush1.msra.mxu0 0.0
    %4711 = vmatprep.subr.mxu0 0.0
    %4712 = vmatpush1.msra.mxu0 0.0
    %4713 = vmatprep.subr.mxu0 0.0
    %4714 = vmatpush1.msra.mxu0 0.0
    %4715 = vmatprep.subr.mxu0 0.0
    %4716 = vmatpush1.msra.mxu0 0.0
    %4717 = vmatprep.subr.mxu0 0.0
    %4718 = vmatpush1.msra.mxu0 0.0
    %4719 = vmatprep.mubr.f32.mxu0 0.0
    %4720 = vmatmul.mubr.f32.gmra.mrb[0].mxu0 %v4650
    %v4721 = vpop.f32.mrb[0].mxu0
    %v4722 = vadd.f32 %v4647, %v4721
    %v4723 = vpop.f32.mrb[0].mxu0
    %4724 = vmatprep.mubr.f32.mxu0 0.0
    %4725 = vmatmul.mubr.f32.gmra.mrb[0].mxu0 %v4653
    %v4726 = vpop.f32.mrb[0].mxu0
    %v4727 = vadd.f32 %v4647, %v4726
    %v4728 = vpop.f32.mrb[0].mxu0
    %4729 = vdwg.mxu0
    %v4730 = vadd.f32 %v4534, %v4722
    %v4731 = vadd.f32 %v4535, %v4727
    %s4732 = scalar_lea.vmem %s15, 1
    %v4733 = vld [vmem:[%s4732] sm:$0x1]
    %s4734 = scalar_lea.vmem %s16, 1
    %v4735 = vld [vmem:[%s4734] sm:$0x1]
    %v4736 = vsel %vm175, %v4730, 0.0
    %4737 = vadd.xlane.f32.xlu0 %v4736
    %v4738 = vpop.xlane.xlu0 %4737
    %v4739 = vsel %vm175, %v4731, 0.0
    %4740 = vadd.xlane.f32.xlu0 %v4739
    %v4741 = vpop.xlane.xlu0 %4740
    %v4742 = vmul.f32 %v4738, %v2191
    %v4743 = vmul.f32 %v4741, %v2191
    %v4744 = vsub.f32 %v4730, %v4742
    %v4745 = vsub.f32 %v4731, %v4743
    %v4746 = vmul.f32 %v4744, %v4744
    %v4747 = vmul.f32 %v4745, %v4745
    %v4748 = vsel %vm175, %v4746, 0.0
    %4749 = vadd.xlane.f32.xlu0 %v4748
    %v4750 = vpop.xlane.xlu0 %4749
    %v4751 = vsel %vm175, %v4747, 0.0
    %4752 = vadd.xlane.f32.xlu0 %v4751
    %v4753 = vpop.xlane.xlu0 %4752
    %v4754 = vmul.f32 %v4750, %v2191
    %v4755 = vmul.f32 %v4753, %v2191
    %v4756 = vadd.f32 %v4754, 1e-05
    %v4757 = vadd.f32 %v4755, 1e-05
    %v4758 = vrsqrt.pop %v4756
    %v4759 = vrsqrt.pop %v4757
    %v4760 = vmul.f32 %v4744, %v4758
    %v4761 = vmul.f32 %v4745, %v4759
    %v4763 = vlaneseq
    %v4764 = vshrl.u32 %v4763, 7
    %v4765 = vsub.s32 0, %v4764
    %v4766 = vrot.slane %v4733, %v4765
    %v4768 = vmul.f32 %v4760, %v4766
    %v4769 = vmul.f32 %v4761, %v4766
    %v4771 = vlaneseq
    %v4772 = vshrl.u32 %v4771, 7
    %v4773 = vsub.s32 0, %v4772
    %v4774 = vrot.slane %v4735, %v4773
    %v4776 = vadd.f32 %v4768, %v4774
    %v4777 = vadd.f32 %v4769, %v4774
    %v4778 = vld [vmem:[%s4] sm:$0x3]
    %v4780 = vsel %vm74, %v4778, 0
    %4782 = vmatprep.subr.mxu0 0.0
    %4783 = vmatpush1.msra.mxu0 %v4776
    %4784 = vmatprep.subr.mxu0 0.0
    %4785 = vmatpush1.msra.mxu0 %v4777
    %4786 = vmatprep.subr.mxu0 0.0
    %4787 = vmatpush1.msra.mxu0 0.0
    %4788 = vmatprep.subr.mxu0 0.0
    %4789 = vmatpush1.msra.mxu0 0.0
    %4790 = vmatprep.subr.mxu0 0.0
    %4791 = vmatpush1.msra.mxu0 0.0
    %4792 = vmatprep.subr.mxu0 0.0
    %4793 = vmatpush1.msra.mxu0 0.0
    %4794 = vmatprep.subr.mxu0 0.0
    %4795 = vmatpush1.msra.mxu0 0.0
    %4796 = vmatprep.subr.mxu0 0.0
    %4797 = vmatpush1.msra.mxu0 0.0
    %4798 = vmatprep.subr.mxu0 0.0
    %4799 = vmatpush1.msra.mxu0 0.0
    %4800 = vmatprep.subr.mxu0 0.0
    %4801 = vmatpush1.msra.mxu0 0.0
    %4802 = vmatprep.subr.mxu0 0.0
    %4803 = vmatpush1.msra.mxu0 0.0
    %4804 = vmatprep.subr.mxu0 0.0
    %4805 = vmatpush1.msra.mxu0 0.0
    %4806 = vmatprep.subr.mxu0 0.0
    %4807 = vmatpush1.msra.mxu0 0.0
    %4808 = vmatprep.subr.mxu0 0.0
    %4809 = vmatpush1.msra.mxu0 0.0
    %4810 = vmatprep.subr.mxu0 0.0
    %4811 = vmatpush1.msra.mxu0 0.0
    %4812 = vmatprep.subr.mxu0 0.0
    %4813 = vmatpush1.msra.mxu0 0.0
    %4814 = vmatprep.subr.mxu0 0.0
    %4815 = vmatpush1.msra.mxu0 0.0
    %4816 = vmatprep.subr.mxu0 0.0
    %4817 = vmatpush1.msra.mxu0 0.0
    %4818 = vmatprep.subr.mxu0 0.0
    %4819 = vmatpush1.msra.mxu0 0.0
    %4820 = vmatprep.subr.mxu0 0.0
    %4821 = vmatpush1.msra.mxu0 0.0
    %4822 = vmatprep.subr.mxu0 0.0
    %4823 = vmatpush1.msra.mxu0 0.0
    %4824 = vmatprep.subr.mxu0 0.0
    %4825 = vmatpush1.msra.mxu0 0.0
    %4826 = vmatprep.subr.mxu0 0.0
    %4827 = vmatpush1.msra.mxu0 0.0
    %4828 = vmatprep.subr.mxu0 0.0
    %4829 = vmatpush1.msra.mxu0 0.0
    %4830 = vmatprep.subr.mxu0 0.0
    %4831 = vmatpush1.msra.mxu0 0.0
    %4832 = vmatprep.subr.mxu0 0.0
    %4833 = vmatpush1.msra.mxu0 0.0
    %4834 = vmatprep.subr.mxu0 0.0
    %4835 = vmatpush1.msra.mxu0 0.0
    %4836 = vmatprep.subr.mxu0 0.0
    %4837 = vmatpush1.msra.mxu0 0.0
    %4838 = vmatprep.subr.mxu0 0.0
    %4839 = vmatpush1.msra.mxu0 0.0
    %4840 = vmatprep.subr.mxu0 0.0
    %4841 = vmatpush1.msra.mxu0 0.0
    %4842 = vmatprep.subr.mxu0 0.0
    %4843 = vmatpush1.msra.mxu0 0.0
    %4844 = vmatprep.subr.mxu0 0.0
    %4845 = vmatpush1.msra.mxu0 0.0
    %4846 = vmatprep.mubr.f32.mxu0 0.0
    %4847 = vmatmul.mubr.f32.gmra.mrb[0].mxu0 %v4780
    %v4848 = vpop.f32.mrb[0].mxu0
    %v4849 = vadd.f32 0.0, %v4848
    %v4850 = vpop.f32.mrb[0].mxu0
    %4851 = vdwg.mxu0
    %v4852 = vld [vmem:[%s17] sm:$0xff]
    %v4853 = vld [vmem:[%s17 + $0x8] sm:$0xff]
    %v4854 = vld [vmem:[%s17 + $0x10] sm:$0xff]
    %v4855 = vld [vmem:[%s17 + $0x18] sm:$0xff]
    %v4856 = vld [vmem:[%s18] sm:$0x1]
    %v4858 = vlaneseq
    %v4859 = vshrl.u32 %v4858, 7
    %v4860 = vsub.s32 0, %v4859
    %v4861 = vrot.slane %v4856, %v4860
    %v4864 = vsel %vm175, %v4849, 0
    %4866 = vmatprep.subr.mxu0 0.0
    %4867 = vmatpush1.msra.mxu0 %v4852
    %4868 = vmatprep.subr.mxu0 0.0
    %4869 = vmatpush1.msra.mxu0 %v4853
    %4870 = vmatprep.subr.mxu0 0.0
    %4871 = vmatpush1.msra.mxu0 %v4854
    %4872 = vmatprep.subr.mxu0 0.0
    %4873 = vmatpush1.msra.mxu0 %v4855
    %4874 = vmatprep.subr.mxu0 0.0
    %4875 = vmatpush1.msra.mxu0 0.0
    %4876 = vmatprep.subr.mxu0 0.0
    %4877 = vmatpush1.msra.mxu0 0.0
    %4878 = vmatprep.subr.mxu0 0.0
    %4879 = vmatpush1.msra.mxu0 0.0
    %4880 = vmatprep.subr.mxu0 0.0
    %4881 = vmatpush1.msra.mxu0 0.0
    %4882 = vmatprep.subr.mxu0 0.0
    %4883 = vmatpush1.msra.mxu0 0.0
    %4884 = vmatprep.subr.mxu0 0.0
    %4885 = vmatpush1.msra.mxu0 0.0
    %4886 = vmatprep.subr.mxu0 0.0
    %4887 = vmatpush1.msra.mxu0 0.0
    %4888 = vmatprep.subr.mxu0 0.0
    %4889 = vmatpush1.msra.mxu0 0.0
    %4890 = vmatprep.subr.mxu0 0.0
    %4891 = vmatpush1.msra.mxu0 0.0
    %4892 = vmatprep.subr.mxu0 0.0
    %4893 = vmatpush1.msra.mxu0 0.0
    %4894 = vmatprep.subr.mxu0 0.0
    %4895 = vmatpush1.msra.mxu0 0.0
    %4896 = vmatprep.subr.mxu0 0.0
    %4897 = vmatpush1.msra.mxu0 0.0
    %4898 = vmatprep.subr.mxu0 0.0
    %4899 = vmatpush1.msra.mxu0 0.0
    %4900 = vmatprep.subr.mxu0 0.0
    %4901 = vmatpush1.msra.mxu0 0.0
    %4902 = vmatprep.subr.mxu0 0.0
    %4903 = vmatpush1.msra.mxu0 0.0
    %4904 = vmatprep.subr.mxu0 0.0
    %4905 = vmatpush1.msra.mxu0 0.0
    %4906 = vmatprep.subr.mxu0 0.0
    %4907 = vmatpush1.msra.mxu0 0.0
    %4908 = vmatprep.subr.mxu0 0.0
    %4909 = vmatpush1.msra.mxu0 0.0
    %4910 = vmatprep.subr.mxu0 0.0
    %4911 = vmatpush1.msra.mxu0 0.0
    %4912 = vmatprep.subr.mxu0 0.0
    %4913 = vmatpush1.msra.mxu0 0.0
    %4914 = vmatprep.subr.mxu0 0.0
    %4915 = vmatpush1.msra.mxu0 0.0
    %4916 = vmatprep.subr.mxu0 0.0
    %4917 = vmatpush1.msra.mxu0 0.0
    %4918 = vmatprep.subr.mxu0 0.0
    %4919 = vmatpush1.msra.mxu0 0.0
    %4920 = vmatprep.subr.mxu0 0.0
    %4921 = vmatpush1.msra.mxu0 0.0
    %4922 = vmatprep.subr.mxu0 0.0
    %4923 = vmatpush1.msra.mxu0 0.0
    %4924 = vmatprep.subr.mxu0 0.0
    %4925 = vmatpush1.msra.mxu0 0.0
    %4926 = vmatprep.subr.mxu0 0.0
    %4927 = vmatpush1.msra.mxu0 0.0
    %4928 = vmatprep.subr.mxu0 0.0
    %4929 = vmatpush1.msra.mxu0 0.0
    %4930 = vmatprep.mubr.f32.mxu0 0.0
    %4931 = vmatmul.mubr.f32.gmra.mrb[0].mxu0 %v4864
    %v4932 = vpop.f32.mrb[0].mxu0
    %v4933 = vadd.f32 %v4861, %v4932
    %v4934 = vpop.f32.mrb[0].mxu0
    %4935 = vdwg.mxu0
    %vm4936 = vcmask 25600
    %4937 = vst.msk [vmem:[#allocation2] sm:$0x3] %vm4936, %v4933
    // Predicated region
    $region78: #{transformer_forward.1} parent=1 // pred_check
      _
    $region79: #{transformer_forward.1} parent=1 // pred_check_branch
      %4939 = sbr.rel (0) target = $region81
    $region80: #{transformer_forward.1} parent=1 // pred_region
      %s4941 = ssub.s32 32, 32
      %4942 = vsyncadd [#allocation3], %s4941
      %s4944 = sshll.u32 [#allocation2], 4
      %s4945 = int_to_ptr.vmem [resolvable:$true] %s4944
      %4947 = dma.vmem_to_hbm [thread:$0]  %s4945, 32, %s19, [#allocation3]
    $region81: #{transformer_forward.1} parent=1 // pred_fallthru
      _
    // Predicated region
    $region82: #{transformer_forward.1} parent=1 // pred_check
      _
    $region83: #{transformer_forward.1} parent=1 // pred_check_branch
      %4949 = sbr.rel (0) target = $region85
    $region84: #{transformer_forward.1} parent=1 // pred_region
      %4950 = dma.done [#allocation3], 32
    $region85: #{transformer_forward.1} parent=1 // pred_fallthru
      _
    %4951 = vsyncpa [#allocation3], 1

</llo_original>
